<compile_context>
chip_gen: v5e
topology: v5e:2x2
jax: 0.10.0
libtpu: 0.0.40
codegen_flags: <defaults>
</compile_context>

<pallas_src>
import functools

import jax
import jax.numpy as jnp
import numpy as np
from jax.experimental import pallas as pl
from jax.experimental.pallas import tpu as pltpu


def _silu(x):
    return x * (1.0 / (1.0 + jnp.exp(-x)))


def _shift_down(x):   # row r <- row r-1 ; row 0 <- 0
    return jnp.concatenate([jnp.zeros_like(x[:1]), x[:-1]], axis=0)


def _shift_up(x):     # row r <- row r+1 ; last row <- 0
    return jnp.concatenate([x[1:], jnp.zeros_like(x[:1])], axis=0)


def _batchnorm_pair(even, odd, gamma, beta, fold, expand, inv_count):
    """BatchNorm2d (training-mode biased stats) over both row phases, per channel."""
    f32 = jnp.float32
    s_lane = jnp.sum(even, axis=0, keepdims=True) + jnp.sum(odd, axis=0, keepdims=True)
    q_lane = (jnp.sum(even * even, axis=0, keepdims=True)
              + jnp.sum(odd * odd, axis=0, keepdims=True))
    s_c = jnp.dot(s_lane, fold, preferred_element_type=f32)      # (1, Cout)
    q_c = jnp.dot(q_lane, fold, preferred_element_type=f32)
    mean_c = s_c * inv_count
    var_c = q_c * inv_count - mean_c * mean_c                    # biased variance
    rstd_c = jax.lax.rsqrt(var_c + 1e-5)
    mean_l = jnp.dot(mean_c, expand, preferred_element_type=f32)  # (1, OW*Cout)
    rstd_l = jnp.dot(rstd_c, expand, preferred_element_type=f32)
    scale = gamma * rstd_l
    shift = beta - mean_l * scale
    return even * scale + shift, odd * scale + shift


def _conv3x3_phase(even, odd, w0, w1, w2, bias, mask_first, mask_last):
    """3x3 'same' conv + bias + SiLU, in the packed row-phase layout."""
    f32 = jnp.float32
    odd_prev = _shift_down(odd) * mask_first      # row 2m-1 (0 at top image edge)
    even_next = _shift_up(even) * mask_last       # row 2m+2 (0 at bottom image edge)
    y_even = _silu(jnp.dot(odd_prev, w0, preferred_element_type=f32)
                   + jnp.dot(even, w1, preferred_element_type=f32)
                   + jnp.dot(odd, w2, preferred_element_type=f32) + bias)
    y_odd = _silu(jnp.dot(even, w0, preferred_element_type=f32)
                  + jnp.dot(odd, w1, preferred_element_type=f32)
                  + jnp.dot(even_next, w2, preferred_element_type=f32) + bias)
    return y_even, y_odd


def _fused_up_block_kernel(x_ref, w1e_ref, w1oc_ref, w1on_ref,
                           wa0_ref, wa1_ref, wa2_ref,
                           wb0_ref, wb1_ref, wb2_ref,
                           vec_ref, fold_ref, expand_ref,
                           out_e_ref, out_o_ref, *, h):
    f32 = jnp.float32
    nh = x_ref.shape[0]                       # N * H
    cout = fold_ref.shape[1]
    lanes = out_e_ref.shape[1]                # OW * Cout
    ow = lanes // cout
    inv_count = 1.0 / float(2 * nh * ow)      # N*OH*OW elements per channel

    bt = vec_ref[0:1, :]
    g1 = vec_ref[1:2, :]
    be1 = vec_ref[2:3, :]
    ba = vec_ref[3:4, :]
    g2 = vec_ref[4:5, :]
    be2 = vec_ref[5:6, :]
    bb = vec_ref[6:7, :]

    # per-row masks (0 on the first / last row of each image): kill cross-image leakage
    r = jax.lax.broadcasted_iota(jnp.int32, (nh, 1), 0) % h
    mask_first = (r != 0).astype(f32)
    mask_last = (r != h - 1).astype(f32)

    fold = fold_ref[...]
    expand = expand_ref[...]

    # ---- stage 1: stride-2 ConvTranspose2d, phase-decomposed over output rows, + SiLU ----
    x = x_ref[...]                                           # (N*H, W*Cin)
    x_nxt = _shift_up(x) * mask_last                         # next input row (0 at edge)
    even = _silu(jnp.dot(x, w1e_ref[...], preferred_element_type=f32) + bt)
    odd = _silu(jnp.dot(x, w1oc_ref[...], preferred_element_type=f32)
                + jnp.dot(x_nxt, w1on_ref[...], preferred_element_type=f32) + bt)

    # ---- stage 2: BatchNorm2d -> Conv2d(3x3, same) -> SiLU ----
    even_n, odd_n = _batchnorm_pair(even, odd, g1, be1, fold, expand, inv_count)
    even2, odd2 = _conv3x3_phase(even_n, odd_n,
                                 wa0_ref[...], wa1_ref[...], wa2_ref[...],
                                 ba, mask_first, mask_last)

    # ---- stage 3: BatchNorm2d -> Conv2d(3x3, same) -> SiLU ----
    even2_n, odd2_n = _batchnorm_pair(even2, odd2, g2, be2, fold, expand, inv_count)
    y_e, y_o = _conv3x3_phase(even2_n, odd2_n,
                              wb0_ref[...], wb1_ref[...], wb2_ref[...],
                              bb, mask_first, mask_last)

    out_e_ref[...] = y_e                                     # output rows 2m   (lane-dense)
    out_o_ref[...] = y_o                                     # output rows 2m+1 (lane-dense)


def _kron(sel, tap):
    """kron(sel (P,Q), tap (C,D)) -> (P*C, Q*D): [(p*C+c),(q*D+d)] = sel[p,q]*tap[c,d]."""
    p, q = sel.shape
    c, d = tap.shape
    return jnp.einsum("pq,cd->pcqd", jnp.asarray(sel, jnp.float32),
                      jnp.asarray(tap, jnp.float32)).reshape(p * c, q * d)


def _fold_conv3x3_cols(w, ow):
    """Fold the 3x3 'same' conv column taps + channel mixing into three banded
    (OW*Cin, OW*Cout) matrices, one per kernel row kh.  Band offset (q - p) = 1 - v."""
    s2 = [np.eye(ow, k=1 - v, dtype=np.float32) for v in range(3)]
    return [sum(_kron(s2[v], w[:, :, kh, v].T) for v in range(3)) for kh in range(3)]


def up_block(x_nchw, params):
    """UpBlock forward: (N, Cin, H, W) float32 -> (N, Cout, 2H, 2W) float32 (NCHW)."""
    wt, bt = params["wt"], params["bt"]            # ConvTranspose2d: (Cin, Cout, 3, 3), (Cout,)
    g1, be1 = params["gamma1"], params["beta1"]    # BatchNorm2d #1 affine
    wa, ba = params["wa"], params["ba"]            # Conv2d #1: (Cout, Cout, 3, 3), (Cout,)
    g2, be2 = params["gamma2"], params["beta2"]    # BatchNorm2d #2 affine
    wb, bb = params["wb"], params["bb"]            # Conv2d #2: (Cout, Cout, 3, 3), (Cout,)

    n, cin, h, w = x_nchw.shape
    cout = wt.shape[1]
    oh, ow = 2 * h, 2 * w
    nh = n * h
    lanes = ow * cout

    # ---- input: NCHW -> packed (N*H, W*Cin) rows (one small transpose pass) ----
    x2 = jnp.transpose(x_nchw, (0, 2, 3, 1)).reshape(nh, w * cin).astype(jnp.float32)

    # ---- fold transposed-conv column taps + channel mixing into (W*Cin, OW*Cout) ----
    # transposed conv index relation: ox = 2*ix - 1 + kx  (stride 2, pad 1, output_pad 1)
    s1 = np.zeros((3, w, ow), np.float32)
    for kx in range(3):
        for ix in range(w):
            ox = 2 * ix - 1 + kx
            if 0 <= ox < ow:
                s1[kx, ix, ox] = 1.0
    # even output rows (2m) use tap ky=1 of input row m;
    # odd output rows (2m+1) use ky=2 of row m and ky=0 of row m+1.
    w1_e = sum(_kron(s1[kx], wt[:, :, 1, kx]) for kx in range(3))
    w1_oc = sum(_kron(s1[kx], wt[:, :, 2, kx]) for kx in range(3))
    w1_on = sum(_kron(s1[kx], wt[:, :, 0, kx]) for kx in range(3))

    wa_rows = _fold_conv3x3_cols(wa, ow)
    wb_rows = _fold_conv3x3_cols(wb, ow)

    # per-lane (channel tiled across OW) bias / affine vectors
    vecs = jnp.stack([jnp.tile(v, ow) for v in (bt, g1, be1, ba, g2, be2, bb)]
                     ).astype(jnp.float32)                         # (7, lanes)

    # fold/expand matrices between per-lane (OW*Cout) and per-channel (Cout) vectors
    fold = np.tile(np.eye(cout, dtype=np.float32), (ow, 1))        # (lanes, Cout)
    expand = np.ascontiguousarray(fold.T)                          # (Cout, lanes)

    out_shape = (jax.ShapeDtypeStruct((nh, lanes), jnp.float32),
                 jax.ShapeDtypeStruct((nh, lanes), jnp.float32))
    y_even, y_odd = pl.pallas_call(
        functools.partial(_fused_up_block_kernel, h=h),
        out_shape=out_shape,
        compiler_params=pltpu.CompilerParams(vmem_limit_bytes=32 * 1024 * 1024),
    )(x2, w1_e, w1_oc, w1_on,
      wa_rows[0], wa_rows[1], wa_rows[2],
      wb_rows[0], wb_rows[1], wb_rows[2],
      vecs, jnp.asarray(fold), jnp.asarray(expand))

    # ---- interleave even/odd output rows and return NCHW ----
    y = jnp.stack([y_even.reshape(n, h, ow, cout),
                   y_odd.reshape(n, h, ow, cout)], axis=2).reshape(n, oh, ow, cout)
    return jnp.transpose(y, (0, 3, 1, 2))


def reference(x_nchw, params):
    """Pure-JAX reference with PyTorch semantics (for verification)."""
    wt, bt = params["wt"], params["bt"]
    cout = wt.shape[1]

    # ConvTranspose2d(k=3, s=2, p=1, op=1) via dilated correlation with flipped kernel
    y = jax.lax.conv_general_dilated(
        x_nchw,
        jnp.transpose(wt[:, :, ::-1, ::-1], (1, 0, 2, 3)),
        window_strides=(1, 1),
        padding=((1, 2), (1, 2)),
        lhs_dilation=(2, 2),
        dimension_numbers=("NCHW", "OIHW", "NCHW"),
    ) + bt.reshape(1, cout, 1, 1)
    y = y * (1.0 / (1.0 + jnp.exp(-y)))  # SiLU

    def bn_conv_silu(y, gamma, beta, w, b):
        mean = jnp.mean(y, axis=(0, 2, 3), keepdims=True)
        var = jnp.mean((y - mean) ** 2, axis=(0, 2, 3), keepdims=True)  # biased, eps=1e-5
        y = (y - mean) * jax.lax.rsqrt(var + 1e-5)
        y = y * gamma.reshape(1, -1, 1, 1) + beta.reshape(1, -1, 1, 1)
        y = jax.lax.conv_general_dilated(
            y, w, (1, 1), ((1, 1), (1, 1)),
            dimension_numbers=("NCHW", "OIHW", "NCHW"),
        ) + b.reshape(1, -1, 1, 1)
        return y * (1.0 / (1.0 + jnp.exp(-y)))

    y = bn_conv_silu(y, params["gamma1"], params["beta1"], params["wa"], params["ba"])
    y = bn_conv_silu(y, params["gamma2"], params["beta2"], params["wb"], params["bb"])
    return y


if __name__ == "__main__":
    n, cin, cout, h, w = 2, 4, 8, 16, 16
    key = jax.random.PRNGKey(0)
    ks = jax.random.split(key, 11)
    x = jax.random.normal(ks[0], (n, cin, h, w), jnp.float32)
    params = {
        "wt": 0.2 * jax.random.normal(ks[1], (cin, cout, 3, 3), jnp.float32),
        "bt": 0.1 * jax.random.normal(ks[2], (cout,), jnp.float32),
        "gamma1": 1.0 + 0.1 * jax.random.normal(ks[3], (cout,), jnp.float32),
        "beta1": 0.1 * jax.random.normal(ks[4], (cout,), jnp.float32),
        "wa": 0.2 * jax.random.normal(ks[5], (cout, cout, 3, 3), jnp.float32),
        "ba": 0.1 * jax.random.normal(ks[6], (cout,), jnp.float32),
        "gamma2": 1.0 + 0.1 * jax.random.normal(ks[7], (cout,), jnp.float32),
        "beta2": 0.1 * jax.random.normal(ks[8], (cout,), jnp.float32),
        "wb": 0.2 * jax.random.normal(ks[9], (cout, cout, 3, 3), jnp.float32),
        "bb": 0.1 * jax.random.normal(ks[10], (cout,), jnp.float32),
    }

    out = jax.block_until_ready(up_block(x, params))
    ref = jax.block_until_ready(reference(x, params))
    assert out.shape == (n, cout, 2 * h, 2 * w), out.shape
    np.testing.assert_allclose(np.asarray(out), np.asarray(ref), rtol=2e-3, atol=2e-3)
    print("KERNEL_OK")
</pallas_src>

<mosaic_0001>
module attributes {stable_mosaic.version = 11 : i64} {
  func.func @_fused_up_block_kernel(%arg0: memref<32x64xf32, #tpu.memory_space<vmem>>, %arg1: memref<64x256xf32, #tpu.memory_space<vmem>>, %arg2: memref<64x256xf32, #tpu.memory_space<vmem>>, %arg3: memref<64x256xf32, #tpu.memory_space<vmem>>, %arg4: memref<256x256xf32, #tpu.memory_space<vmem>>, %arg5: memref<256x256xf32, #tpu.memory_space<vmem>>, %arg6: memref<256x256xf32, #tpu.memory_space<vmem>>, %arg7: memref<256x256xf32, #tpu.memory_space<vmem>>, %arg8: memref<256x256xf32, #tpu.memory_space<vmem>>, %arg9: memref<256x256xf32, #tpu.memory_space<vmem>>, %arg10: memref<7x256xf32, #tpu.memory_space<vmem>>, %arg11: memref<256x8xf32, #tpu.memory_space<vmem>>, %arg12: memref<8x256xf32, #tpu.memory_space<vmem>>, %arg13: memref<32x256xf32, #tpu.memory_space<vmem>>, %arg14: memref<32x256xf32, #tpu.memory_space<vmem>>) attributes {dimension_semantics = [], scalar_prefetch = 0 : i64, scratch_operands = 0 : i64, tpu.core_type = #tpu.core_type<tc>} {
    %c0 = arith.constant 0 : index
    %c0_0 = arith.constant 0 : index
    %0 = vector.load %arg10[%c0, %c0_0] : memref<7x256xf32, #tpu.memory_space<vmem>>, vector<1x256xf32>
    %c1 = arith.constant 1 : index
    %c0_1 = arith.constant 0 : index
    %1 = vector.load %arg10[%c1, %c0_1] : memref<7x256xf32, #tpu.memory_space<vmem>>, vector<1x256xf32>
    %c2 = arith.constant 2 : index
    %c0_2 = arith.constant 0 : index
    %2 = vector.load %arg10[%c2, %c0_2] : memref<7x256xf32, #tpu.memory_space<vmem>>, vector<1x256xf32>
    %c3 = arith.constant 3 : index
    %c0_3 = arith.constant 0 : index
    %3 = vector.load %arg10[%c3, %c0_3] : memref<7x256xf32, #tpu.memory_space<vmem>>, vector<1x256xf32>
    %c4 = arith.constant 4 : index
    %c0_4 = arith.constant 0 : index
    %4 = vector.load %arg10[%c4, %c0_4] : memref<7x256xf32, #tpu.memory_space<vmem>>, vector<1x256xf32>
    %c5 = arith.constant 5 : index
    %c0_5 = arith.constant 0 : index
    %5 = vector.load %arg10[%c5, %c0_5] : memref<7x256xf32, #tpu.memory_space<vmem>>, vector<1x256xf32>
    %c6 = arith.constant 6 : index
    %c0_6 = arith.constant 0 : index
    %6 = vector.load %arg10[%c6, %c0_6] : memref<7x256xf32, #tpu.memory_space<vmem>>, vector<1x256xf32>
    %7 = tpu.iota {dimensions = array<i32: 0>} : vector<32x1xi32>
    %c16_i32 = arith.constant 16 : i32
    %c0_i32 = arith.constant 0 : i32
    %8 = arith.cmpi eq, %c16_i32, %c0_i32 : i32
    %c1_i32 = arith.constant 1 : i32
    %9 = arith.select %8, %c1_i32, %c16_i32 : i32
    %10 = vector.broadcast %9 : i32 to vector<32x1xi32>
    %11 = arith.remsi %7, %10 : vector<32x1xi32>
    %c0_i32_7 = arith.constant 0 : i32
    %12 = vector.broadcast %c0_i32_7 : i32 to vector<32x1xi32>
    %13 = arith.cmpi ne, %11, %12 : vector<32x1xi32>
    %c0_i32_8 = arith.constant 0 : i32
    %14 = vector.broadcast %c0_i32_8 : i32 to vector<32x1xi32>
    %15 = arith.cmpi slt, %11, %14 : vector<32x1xi32>
    %c0_i32_9 = arith.constant 0 : i32
    %16 = arith.cmpi slt, %9, %c0_i32_9 : i32
    %17 = vector.broadcast %16 : i1 to vector<32x1xi1>
    %18 = vector.broadcast %17 : vector<32x1xi1> to vector<32x1xi1>
    %19 = arith.xori %15, %18 : vector<32x1xi1>
    %20 = arith.andi %19, %13 : vector<32x1xi1>
    %21 = vector.broadcast %9 : i32 to vector<32x1xi32>
    %22 = arith.addi %11, %21 : vector<32x1xi32>
    %23 = arith.select %20, %22, %11 : vector<32x1xi1>, vector<32x1xi32>
    %c0_i32_10 = arith.constant 0 : i32
    %24 = vector.broadcast %c0_i32_10 : i32 to vector<32x1xi32>
    %25 = arith.cmpi ne, %23, %24 : vector<32x1xi32>
    %26 = arith.extui %25 : vector<32x1xi1> to vector<32x1xi32>
    %27 = arith.sitofp %26 : vector<32x1xi32> to vector<32x1xf32>
    %c15_i32 = arith.constant 15 : i32
    %28 = vector.broadcast %c15_i32 : i32 to vector<32x1xi32>
    %29 = arith.cmpi ne, %23, %28 : vector<32x1xi32>
    %30 = arith.extui %29 : vector<32x1xi1> to vector<32x1xi32>
    %31 = arith.sitofp %30 : vector<32x1xi32> to vector<32x1xf32>
    %c0_11 = arith.constant 0 : index
    %c0_12 = arith.constant 0 : index
    %32 = vector.load %arg11[%c0_11, %c0_12] : memref<256x8xf32, #tpu.memory_space<vmem>>, vector<256x8xf32>
    %c0_13 = arith.constant 0 : index
    %c0_14 = arith.constant 0 : index
    %33 = vector.load %arg12[%c0_13, %c0_14] : memref<8x256xf32, #tpu.memory_space<vmem>>, vector<8x256xf32>
    %c0_15 = arith.constant 0 : index
    %c0_16 = arith.constant 0 : index
    %34 = vector.load %arg0[%c0_15, %c0_16] : memref<32x64xf32, #tpu.memory_space<vmem>>, vector<32x64xf32>
    %35 = vector.extract_strided_slice %34 {offsets = [1, 0], sizes = [31, 64], strides = [1, 1]} : vector<32x64xf32> to vector<31x64xf32>
    %cst = arith.constant 0.000000e+00 : f32
    %36 = vector.broadcast %cst : f32 to vector<1x64xf32>
    %37 = tpu.concatenate %35, %36 in 0 : vector<31x64xf32>, vector<1x64xf32> -> vector<32x64xf32>
    %38 = vector.broadcast %31 : vector<32x1xf32> to vector<32x64xf32>
    %39 = arith.mulf %37, %38 : vector<32x64xf32>
    %c0_17 = arith.constant 0 : index
    %c0_18 = arith.constant 0 : index
    %40 = vector.load %arg1[%c0_17, %c0_18] : memref<64x256xf32, #tpu.memory_space<vmem>>, vector<64x256xf32>
    %cst_19 = arith.constant dense<0.000000e+00> : vector<32x256xf32>
    %41 = tpu.matmul %34, %40, %cst_19 {dimension_numbers = #tpu.dot_dimension_numbers<[1], [0], [0], [1], [0, 0, 1, 1], [], []>} : vector<32x64xf32>, vector<64x256xf32>, vector<32x256xf32> -> vector<32x256xf32>
    %42 = vector.broadcast %0 : vector<1x256xf32> to vector<32x256xf32>
    %43 = arith.addf %41, %42 : vector<32x256xf32>
    %cst_20 = arith.constant 0.000000e+00 : f32
    %44 = vector.broadcast %cst_20 : f32 to vector<32x256xf32>
    %45 = arith.subf %44, %43 : vector<32x256xf32>
    %46 = math.exp %45 : vector<32x256xf32>
    %cst_21 = arith.constant 1.000000e+00 : f32
    %47 = vector.broadcast %cst_21 : f32 to vector<32x256xf32>
    %48 = arith.addf %47, %46 : vector<32x256xf32>
    %cst_22 = arith.constant 1.000000e+00 : f32
    %49 = vector.broadcast %cst_22 : f32 to vector<32x256xf32>
    %50 = arith.divf %49, %48 : vector<32x256xf32>
    %51 = arith.mulf %43, %50 : vector<32x256xf32>
    %c0_23 = arith.constant 0 : index
    %c0_24 = arith.constant 0 : index
    %52 = vector.load %arg2[%c0_23, %c0_24] : memref<64x256xf32, #tpu.memory_space<vmem>>, vector<64x256xf32>
    %cst_25 = arith.constant dense<0.000000e+00> : vector<32x256xf32>
    %53 = tpu.matmul %34, %52, %cst_25 {dimension_numbers = #tpu.dot_dimension_numbers<[1], [0], [0], [1], [0, 0, 1, 1], [], []>} : vector<32x64xf32>, vector<64x256xf32>, vector<32x256xf32> -> vector<32x256xf32>
    %c0_26 = arith.constant 0 : index
    %c0_27 = arith.constant 0 : index
    %54 = vector.load %arg3[%c0_26, %c0_27] : memref<64x256xf32, #tpu.memory_space<vmem>>, vector<64x256xf32>
    %cst_28 = arith.constant dense<0.000000e+00> : vector<32x256xf32>
    %55 = tpu.matmul %39, %54, %cst_28 {dimension_numbers = #tpu.dot_dimension_numbers<[1], [0], [0], [1], [0, 0, 1, 1], [], []>} : vector<32x64xf32>, vector<64x256xf32>, vector<32x256xf32> -> vector<32x256xf32>
    %56 = arith.addf %53, %55 : vector<32x256xf32>
    %57 = vector.broadcast %0 : vector<1x256xf32> to vector<32x256xf32>
    %58 = arith.addf %56, %57 : vector<32x256xf32>
    %cst_29 = arith.constant 0.000000e+00 : f32
    %59 = vector.broadcast %cst_29 : f32 to vector<32x256xf32>
    %60 = arith.subf %59, %58 : vector<32x256xf32>
    %61 = math.exp %60 : vector<32x256xf32>
    %cst_30 = arith.constant 1.000000e+00 : f32
    %62 = vector.broadcast %cst_30 : f32 to vector<32x256xf32>
    %63 = arith.addf %62, %61 : vector<32x256xf32>
    %cst_31 = arith.constant 1.000000e+00 : f32
    %64 = vector.broadcast %cst_31 : f32 to vector<32x256xf32>
    %65 = arith.divf %64, %63 : vector<32x256xf32>
    %66 = arith.mulf %58, %65 : vector<32x256xf32>
    %cst_32 = arith.constant dense<0.000000e+00> : vector<256xf32>
    %67 = vector.multi_reduction <add>, %51, %cst_32 [0] : vector<32x256xf32> to vector<256xf32>
    %68 = vector.shape_cast %67 : vector<256xf32> to vector<1x256xf32>
    %cst_33 = arith.constant dense<0.000000e+00> : vector<256xf32>
    %69 = vector.multi_reduction <add>, %66, %cst_33 [0] : vector<32x256xf32> to vector<256xf32>
    %70 = vector.shape_cast %69 : vector<256xf32> to vector<1x256xf32>
    %71 = arith.addf %68, %70 : vector<1x256xf32>
    %72 = arith.mulf %51, %51 : vector<32x256xf32>
    %cst_34 = arith.constant dense<0.000000e+00> : vector<256xf32>
    %73 = vector.multi_reduction <add>, %72, %cst_34 [0] : vector<32x256xf32> to vector<256xf32>
    %74 = vector.shape_cast %73 : vector<256xf32> to vector<1x256xf32>
    %75 = arith.mulf %66, %66 : vector<32x256xf32>
    %cst_35 = arith.constant dense<0.000000e+00> : vector<256xf32>
    %76 = vector.multi_reduction <add>, %75, %cst_35 [0] : vector<32x256xf32> to vector<256xf32>
    %77 = vector.shape_cast %76 : vector<256xf32> to vector<1x256xf32>
    %78 = arith.addf %74, %77 : vector<1x256xf32>
    %cst_36 = arith.constant dense<0.000000e+00> : vector<1x8xf32>
    %79 = tpu.matmul %71, %32, %cst_36 {dimension_numbers = #tpu.dot_dimension_numbers<[1], [0], [0], [1], [0, 0, 1, 1], [], []>} : vector<1x256xf32>, vector<256x8xf32>, vector<1x8xf32> -> vector<1x8xf32>
    %cst_37 = arith.constant dense<0.000000e+00> : vector<1x8xf32>
    %80 = tpu.matmul %78, %32, %cst_37 {dimension_numbers = #tpu.dot_dimension_numbers<[1], [0], [0], [1], [0, 0, 1, 1], [], []>} : vector<1x256xf32>, vector<256x8xf32>, vector<1x8xf32> -> vector<1x8xf32>
    %cst_38 = arith.constant 4.8828125E-4 : f32
    %81 = vector.broadcast %cst_38 : f32 to vector<1x8xf32>
    %82 = arith.mulf %79, %81 : vector<1x8xf32>
    %cst_39 = arith.constant 4.8828125E-4 : f32
    %83 = vector.broadcast %cst_39 : f32 to vector<1x8xf32>
    %84 = arith.mulf %80, %83 : vector<1x8xf32>
    %85 = arith.mulf %82, %82 : vector<1x8xf32>
    %86 = arith.subf %84, %85 : vector<1x8xf32>
    %cst_40 = arith.constant 9.99999974E-6 : f32
    %87 = vector.broadcast %cst_40 : f32 to vector<1x8xf32>
    %88 = arith.addf %86, %87 : vector<1x8xf32>
    %89 = math.rsqrt %88 : vector<1x8xf32>
    %cst_41 = arith.constant dense<0.000000e+00> : vector<1x256xf32>
    %90 = tpu.matmul %82, %33, %cst_41 {dimension_numbers = #tpu.dot_dimension_numbers<[1], [0], [0], [1], [0, 0, 1, 1], [], []>} : vector<1x8xf32>, vector<8x256xf32>, vector<1x256xf32> -> vector<1x256xf32>
    %cst_42 = arith.constant dense<0.000000e+00> : vector<1x256xf32>
    %91 = tpu.matmul %89, %33, %cst_42 {dimension_numbers = #tpu.dot_dimension_numbers<[1], [0], [0], [1], [0, 0, 1, 1], [], []>} : vector<1x8xf32>, vector<8x256xf32>, vector<1x256xf32> -> vector<1x256xf32>
    %92 = arith.mulf %1, %91 : vector<1x256xf32>
    %93 = arith.mulf %90, %92 : vector<1x256xf32>
    %94 = arith.subf %2, %93 : vector<1x256xf32>
    %95 = vector.broadcast %92 : vector<1x256xf32> to vector<32x256xf32>
    %96 = arith.mulf %51, %95 : vector<32x256xf32>
    %97 = vector.broadcast %94 : vector<1x256xf32> to vector<32x256xf32>
    %98 = arith.addf %96, %97 : vector<32x256xf32>
    %99 = vector.broadcast %92 : vector<1x256xf32> to vector<32x256xf32>
    %100 = arith.mulf %66, %99 : vector<32x256xf32>
    %101 = vector.broadcast %94 : vector<1x256xf32> to vector<32x256xf32>
    %102 = arith.addf %100, %101 : vector<32x256xf32>
    %c0_43 = arith.constant 0 : index
    %c0_44 = arith.constant 0 : index
    %103 = vector.load %arg4[%c0_43, %c0_44] : memref<256x256xf32, #tpu.memory_space<vmem>>, vector<256x256xf32>
    %c0_45 = arith.constant 0 : index
    %c0_46 = arith.constant 0 : index
    %104 = vector.load %arg5[%c0_45, %c0_46] : memref<256x256xf32, #tpu.memory_space<vmem>>, vector<256x256xf32>
    %c0_47 = arith.constant 0 : index
    %c0_48 = arith.constant 0 : index
    %105 = vector.load %arg6[%c0_47, %c0_48] : memref<256x256xf32, #tpu.memory_space<vmem>>, vector<256x256xf32>
    %cst_49 = arith.constant 0.000000e+00 : f32
    %106 = vector.broadcast %cst_49 : f32 to vector<1x256xf32>
    %107 = vector.extract_strided_slice %102 {offsets = [0, 0], sizes = [31, 256], strides = [1, 1]} : vector<32x256xf32> to vector<31x256xf32>
    %108 = tpu.concatenate %106, %107 in 0 : vector<1x256xf32>, vector<31x256xf32> -> vector<32x256xf32>
    %109 = vector.broadcast %27 : vector<32x1xf32> to vector<32x256xf32>
    %110 = arith.mulf %108, %109 : vector<32x256xf32>
    %111 = vector.extract_strided_slice %98 {offsets = [1, 0], sizes = [31, 256], strides = [1, 1]} : vector<32x256xf32> to vector<31x256xf32>
    %cst_50 = arith.constant 0.000000e+00 : f32
    %112 = vector.broadcast %cst_50 : f32 to vector<1x256xf32>
    %113 = tpu.concatenate %111, %112 in 0 : vector<31x256xf32>, vector<1x256xf32> -> vector<32x256xf32>
    %114 = vector.broadcast %31 : vector<32x1xf32> to vector<32x256xf32>
    %115 = arith.mulf %113, %114 : vector<32x256xf32>
    %cst_51 = arith.constant dense<0.000000e+00> : vector<32x256xf32>
    %116 = tpu.matmul %110, %103, %cst_51 {dimension_numbers = #tpu.dot_dimension_numbers<[1], [0], [0], [1], [0, 0, 1, 1], [], []>} : vector<32x256xf32>, vector<256x256xf32>, vector<32x256xf32> -> vector<32x256xf32>
    %cst_52 = arith.constant dense<0.000000e+00> : vector<32x256xf32>
    %117 = tpu.matmul %98, %104, %cst_52 {dimension_numbers = #tpu.dot_dimension_numbers<[1], [0], [0], [1], [0, 0, 1, 1], [], []>} : vector<32x256xf32>, vector<256x256xf32>, vector<32x256xf32> -> vector<32x256xf32>
    %118 = arith.addf %116, %117 : vector<32x256xf32>
    %cst_53 = arith.constant dense<0.000000e+00> : vector<32x256xf32>
    %119 = tpu.matmul %102, %105, %cst_53 {dimension_numbers = #tpu.dot_dimension_numbers<[1], [0], [0], [1], [0, 0, 1, 1], [], []>} : vector<32x256xf32>, vector<256x256xf32>, vector<32x256xf32> -> vector<32x256xf32>
    %120 = arith.addf %118, %119 : vector<32x256xf32>
    %121 = vector.broadcast %3 : vector<1x256xf32> to vector<32x256xf32>
    %122 = arith.addf %120, %121 : vector<32x256xf32>
    %cst_54 = arith.constant 0.000000e+00 : f32
    %123 = vector.broadcast %cst_54 : f32 to vector<32x256xf32>
    %124 = arith.subf %123, %122 : vector<32x256xf32>
    %125 = math.exp %124 : vector<32x256xf32>
    %cst_55 = arith.constant 1.000000e+00 : f32
    %126 = vector.broadcast %cst_55 : f32 to vector<32x256xf32>
    %127 = arith.addf %126, %125 : vector<32x256xf32>
    %cst_56 = arith.constant 1.000000e+00 : f32
    %128 = vector.broadcast %cst_56 : f32 to vector<32x256xf32>
    %129 = arith.divf %128, %127 : vector<32x256xf32>
    %130 = arith.mulf %122, %129 : vector<32x256xf32>
    %cst_57 = arith.constant dense<0.000000e+00> : vector<32x256xf32>
    %131 = tpu.matmul %98, %103, %cst_57 {dimension_numbers = #tpu.dot_dimension_numbers<[1], [0], [0], [1], [0, 0, 1, 1], [], []>} : vector<32x256xf32>, vector<256x256xf32>, vector<32x256xf32> -> vector<32x256xf32>
    %cst_58 = arith.constant dense<0.000000e+00> : vector<32x256xf32>
    %132 = tpu.matmul %102, %104, %cst_58 {dimension_numbers = #tpu.dot_dimension_numbers<[1], [0], [0], [1], [0, 0, 1, 1], [], []>} : vector<32x256xf32>, vector<256x256xf32>, vector<32x256xf32> -> vector<32x256xf32>
    %133 = arith.addf %131, %132 : vector<32x256xf32>
    %cst_59 = arith.constant dense<0.000000e+00> : vector<32x256xf32>
    %134 = tpu.matmul %115, %105, %cst_59 {dimension_numbers = #tpu.dot_dimension_numbers<[1], [0], [0], [1], [0, 0, 1, 1], [], []>} : vector<32x256xf32>, vector<256x256xf32>, vector<32x256xf32> -> vector<32x256xf32>
    %135 = arith.addf %133, %134 : vector<32x256xf32>
    %136 = vector.broadcast %3 : vector<1x256xf32> to vector<32x256xf32>
    %137 = arith.addf %135, %136 : vector<32x256xf32>
    %cst_60 = arith.constant 0.000000e+00 : f32
    %138 = vector.broadcast %cst_60 : f32 to vector<32x256xf32>
    %139 = arith.subf %138, %137 : vector<32x256xf32>
    %140 = math.exp %139 : vector<32x256xf32>
    %cst_61 = arith.constant 1.000000e+00 : f32
    %141 = vector.broadcast %cst_61 : f32 to vector<32x256xf32>
    %142 = arith.addf %141, %140 : vector<32x256xf32>
    %cst_62 = arith.constant 1.000000e+00 : f32
    %143 = vector.broadcast %cst_62 : f32 to vector<32x256xf32>
    %144 = arith.divf %143, %142 : vector<32x256xf32>
    %145 = arith.mulf %137, %144 : vector<32x256xf32>
    %cst_63 = arith.constant dense<0.000000e+00> : vector<256xf32>
    %146 = vector.multi_reduction <add>, %130, %cst_63 [0] : vector<32x256xf32> to vector<256xf32>
    %147 = vector.shape_cast %146 : vector<256xf32> to vector<1x256xf32>
    %cst_64 = arith.constant dense<0.000000e+00> : vector<256xf32>
    %148 = vector.multi_reduction <add>, %145, %cst_64 [0] : vector<32x256xf32> to vector<256xf32>
    %149 = vector.shape_cast %148 : vector<256xf32> to vector<1x256xf32>
    %150 = arith.addf %147, %149 : vector<1x256xf32>
    %151 = arith.mulf %130, %130 : vector<32x256xf32>
    %cst_65 = arith.constant dense<0.000000e+00> : vector<256xf32>
    %152 = vector.multi_reduction <add>, %151, %cst_65 [0] : vector<32x256xf32> to vector<256xf32>
    %153 = vector.shape_cast %152 : vector<256xf32> to vector<1x256xf32>
    %154 = arith.mulf %145, %145 : vector<32x256xf32>
    %cst_66 = arith.constant dense<0.000000e+00> : vector<256xf32>
    %155 = vector.multi_reduction <add>, %154, %cst_66 [0] : vector<32x256xf32> to vector<256xf32>
    %156 = vector.shape_cast %155 : vector<256xf32> to vector<1x256xf32>
    %157 = arith.addf %153, %156 : vector<1x256xf32>
    %cst_67 = arith.constant dense<0.000000e+00> : vector<1x8xf32>
    %158 = tpu.matmul %150, %32, %cst_67 {dimension_numbers = #tpu.dot_dimension_numbers<[1], [0], [0], [1], [0, 0, 1, 1], [], []>} : vector<1x256xf32>, vector<256x8xf32>, vector<1x8xf32> -> vector<1x8xf32>
    %cst_68 = arith.constant dense<0.000000e+00> : vector<1x8xf32>
    %159 = tpu.matmul %157, %32, %cst_68 {dimension_numbers = #tpu.dot_dimension_numbers<[1], [0], [0], [1], [0, 0, 1, 1], [], []>} : vector<1x256xf32>, vector<256x8xf32>, vector<1x8xf32> -> vector<1x8xf32>
    %cst_69 = arith.constant 4.8828125E-4 : f32
    %160 = vector.broadcast %cst_69 : f32 to vector<1x8xf32>
    %161 = arith.mulf %158, %160 : vector<1x8xf32>
    %cst_70 = arith.constant 4.8828125E-4 : f32
    %162 = vector.broadcast %cst_70 : f32 to vector<1x8xf32>
    %163 = arith.mulf %159, %162 : vector<1x8xf32>
    %164 = arith.mulf %161, %161 : vector<1x8xf32>
    %165 = arith.subf %163, %164 : vector<1x8xf32>
    %cst_71 = arith.constant 9.99999974E-6 : f32
    %166 = vector.broadcast %cst_71 : f32 to vector<1x8xf32>
    %167 = arith.addf %165, %166 : vector<1x8xf32>
    %168 = math.rsqrt %167 : vector<1x8xf32>
    %cst_72 = arith.constant dense<0.000000e+00> : vector<1x256xf32>
    %169 = tpu.matmul %161, %33, %cst_72 {dimension_numbers = #tpu.dot_dimension_numbers<[1], [0], [0], [1], [0, 0, 1, 1], [], []>} : vector<1x8xf32>, vector<8x256xf32>, vector<1x256xf32> -> vector<1x256xf32>
    %cst_73 = arith.constant dense<0.000000e+00> : vector<1x256xf32>
    %170 = tpu.matmul %168, %33, %cst_73 {dimension_numbers = #tpu.dot_dimension_numbers<[1], [0], [0], [1], [0, 0, 1, 1], [], []>} : vector<1x8xf32>, vector<8x256xf32>, vector<1x256xf32> -> vector<1x256xf32>
    %171 = arith.mulf %4, %170 : vector<1x256xf32>
    %172 = arith.mulf %169, %171 : vector<1x256xf32>
    %173 = arith.subf %5, %172 : vector<1x256xf32>
    %174 = vector.broadcast %171 : vector<1x256xf32> to vector<32x256xf32>
    %175 = arith.mulf %130, %174 : vector<32x256xf32>
    %176 = vector.broadcast %173 : vector<1x256xf32> to vector<32x256xf32>
    %177 = arith.addf %175, %176 : vector<32x256xf32>
    %178 = vector.broadcast %171 : vector<1x256xf32> to vector<32x256xf32>
    %179 = arith.mulf %145, %178 : vector<32x256xf32>
    %180 = vector.broadcast %173 : vector<1x256xf32> to vector<32x256xf32>
    %181 = arith.addf %179, %180 : vector<32x256xf32>
    %c0_74 = arith.constant 0 : index
    %c0_75 = arith.constant 0 : index
    %182 = vector.load %arg7[%c0_74, %c0_75] : memref<256x256xf32, #tpu.memory_space<vmem>>, vector<256x256xf32>
    %c0_76 = arith.constant 0 : index
    %c0_77 = arith.constant 0 : index
    %183 = vector.load %arg8[%c0_76, %c0_77] : memref<256x256xf32, #tpu.memory_space<vmem>>, vector<256x256xf32>
    %c0_78 = arith.constant 0 : index
    %c0_79 = arith.constant 0 : index
    %184 = vector.load %arg9[%c0_78, %c0_79] : memref<256x256xf32, #tpu.memory_space<vmem>>, vector<256x256xf32>
    %cst_80 = arith.constant 0.000000e+00 : f32
    %185 = vector.broadcast %cst_80 : f32 to vector<1x256xf32>
    %186 = vector.extract_strided_slice %181 {offsets = [0, 0], sizes = [31, 256], strides = [1, 1]} : vector<32x256xf32> to vector<31x256xf32>
    %187 = tpu.concatenate %185, %186 in 0 : vector<1x256xf32>, vector<31x256xf32> -> vector<32x256xf32>
    %188 = vector.broadcast %27 : vector<32x1xf32> to vector<32x256xf32>
    %189 = arith.mulf %187, %188 : vector<32x256xf32>
    %190 = vector.extract_strided_slice %177 {offsets = [1, 0], sizes = [31, 256], strides = [1, 1]} : vector<32x256xf32> to vector<31x256xf32>
    %cst_81 = arith.constant 0.000000e+00 : f32
    %191 = vector.broadcast %cst_81 : f32 to vector<1x256xf32>
    %192 = tpu.concatenate %190, %191 in 0 : vector<31x256xf32>, vector<1x256xf32> -> vector<32x256xf32>
    %193 = vector.broadcast %31 : vector<32x1xf32> to vector<32x256xf32>
    %194 = arith.mulf %192, %193 : vector<32x256xf32>
    %cst_82 = arith.constant dense<0.000000e+00> : vector<32x256xf32>
    %195 = tpu.matmul %189, %182, %cst_82 {dimension_numbers = #tpu.dot_dimension_numbers<[1], [0], [0], [1], [0, 0, 1, 1], [], []>} : vector<32x256xf32>, vector<256x256xf32>, vector<32x256xf32> -> vector<32x256xf32>
    %cst_83 = arith.constant dense<0.000000e+00> : vector<32x256xf32>
    %196 = tpu.matmul %177, %183, %cst_83 {dimension_numbers = #tpu.dot_dimension_numbers<[1], [0], [0], [1], [0, 0, 1, 1], [], []>} : vector<32x256xf32>, vector<256x256xf32>, vector<32x256xf32> -> vector<32x256xf32>
    %197 = arith.addf %195, %196 : vector<32x256xf32>
    %cst_84 = arith.constant dense<0.000000e+00> : vector<32x256xf32>
    %198 = tpu.matmul %181, %184, %cst_84 {dimension_numbers = #tpu.dot_dimension_numbers<[1], [0], [0], [1], [0, 0, 1, 1], [], []>} : vector<32x256xf32>, vector<256x256xf32>, vector<32x256xf32> -> vector<32x256xf32>
    %199 = arith.addf %197, %198 : vector<32x256xf32>
    %200 = vector.broadcast %6 : vector<1x256xf32> to vector<32x256xf32>
    %201 = arith.addf %199, %200 : vector<32x256xf32>
    %cst_85 = arith.constant 0.000000e+00 : f32
    %202 = vector.broadcast %cst_85 : f32 to vector<32x256xf32>
    %203 = arith.subf %202, %201 : vector<32x256xf32>
    %204 = math.exp %203 : vector<32x256xf32>
    %cst_86 = arith.constant 1.000000e+00 : f32
    %205 = vector.broadcast %cst_86 : f32 to vector<32x256xf32>
    %206 = arith.addf %205, %204 : vector<32x256xf32>
    %cst_87 = arith.constant 1.000000e+00 : f32
    %207 = vector.broadcast %cst_87 : f32 to vector<32x256xf32>
    %208 = arith.divf %207, %206 : vector<32x256xf32>
    %209 = arith.mulf %201, %208 : vector<32x256xf32>
    %cst_88 = arith.constant dense<0.000000e+00> : vector<32x256xf32>
    %210 = tpu.matmul %177, %182, %cst_88 {dimension_numbers = #tpu.dot_dimension_numbers<[1], [0], [0], [1], [0, 0, 1, 1], [], []>} : vector<32x256xf32>, vector<256x256xf32>, vector<32x256xf32> -> vector<32x256xf32>
    %cst_89 = arith.constant dense<0.000000e+00> : vector<32x256xf32>
    %211 = tpu.matmul %181, %183, %cst_89 {dimension_numbers = #tpu.dot_dimension_numbers<[1], [0], [0], [1], [0, 0, 1, 1], [], []>} : vector<32x256xf32>, vector<256x256xf32>, vector<32x256xf32> -> vector<32x256xf32>
    %212 = arith.addf %210, %211 : vector<32x256xf32>
    %cst_90 = arith.constant dense<0.000000e+00> : vector<32x256xf32>
    %213 = tpu.matmul %194, %184, %cst_90 {dimension_numbers = #tpu.dot_dimension_numbers<[1], [0], [0], [1], [0, 0, 1, 1], [], []>} : vector<32x256xf32>, vector<256x256xf32>, vector<32x256xf32> -> vector<32x256xf32>
    %214 = arith.addf %212, %213 : vector<32x256xf32>
    %215 = vector.broadcast %6 : vector<1x256xf32> to vector<32x256xf32>
    %216 = arith.addf %214, %215 : vector<32x256xf32>
    %cst_91 = arith.constant 0.000000e+00 : f32
    %217 = vector.broadcast %cst_91 : f32 to vector<32x256xf32>
    %218 = arith.subf %217, %216 : vector<32x256xf32>
    %219 = math.exp %218 : vector<32x256xf32>
    %cst_92 = arith.constant 1.000000e+00 : f32
    %220 = vector.broadcast %cst_92 : f32 to vector<32x256xf32>
    %221 = arith.addf %220, %219 : vector<32x256xf32>
    %cst_93 = arith.constant 1.000000e+00 : f32
    %222 = vector.broadcast %cst_93 : f32 to vector<32x256xf32>
    %223 = arith.divf %222, %221 : vector<32x256xf32>
    %224 = arith.mulf %216, %223 : vector<32x256xf32>
    %c0_94 = arith.constant 0 : index
    %c0_95 = arith.constant 0 : index
    %225 = vector.load %arg13[%c0_94, %c0_95] : memref<32x256xf32, #tpu.memory_space<vmem>>, vector<32x256xf32>
    tpu.vector_store %arg13[%c0_94, %c0_95], %209 {strides = array<i32>} : memref<32x256xf32, #tpu.memory_space<vmem>>, vector<32x256xf32>,
    %c0_96 = arith.constant 0 : index
    %c0_97 = arith.constant 0 : index
    %226 = vector.load %arg14[%c0_96, %c0_97] : memref<32x256xf32, #tpu.memory_space<vmem>>, vector<32x256xf32>
    tpu.vector_store %arg14[%c0_96, %c0_97], %224 {strides = array<i32>} : memref<32x256xf32, #tpu.memory_space<vmem>>, vector<32x256xf32>,
    return
  }
}

</mosaic_0001>

<llo_original>
// kernel: tpu_custom_call.1
$region0: #{tpu_custom_call.1}
  #allocation0 [shape = 'u32[]', space=smem, size = 0x4, offset = 0x4, fixed_abs, tag = 'smem constant byte address 0x4 - core index']
  #allocation1 [shape = 'u32[72,128]{1,0:T(1,128)}', space=vmem, size = 0x9000, scoped, tag = 'internal scratch']
  %s0 = inlined_call_operand.hbm [shape: f32[32,64], index: 0, kind: input, shape index: {}]
  %s1 = inlined_call_operand.vmem [shape: f32[64,256], index: 1, kind: input, shape index: {}]
  %s2 = inlined_call_operand.vmem [shape: f32[64,256], index: 2, kind: input, shape index: {}]
  %s3 = inlined_call_operand.hbm [shape: f32[64,256], index: 3, kind: input, shape index: {}]
  %s4 = inlined_call_operand.hbm [shape: f32[256,256], index: 4, kind: input, shape index: {}]
  %s5 = inlined_call_operand.hbm [shape: f32[256,256], index: 5, kind: input, shape index: {}]
  %s6 = inlined_call_operand.hbm [shape: f32[256,256], index: 6, kind: input, shape index: {}]
  %s7 = inlined_call_operand.hbm [shape: f32[256,256], index: 7, kind: input, shape index: {}]
  %s8 = inlined_call_operand.hbm [shape: f32[256,256], index: 8, kind: input, shape index: {}]
  %s9 = inlined_call_operand.hbm [shape: f32[256,256], index: 9, kind: input, shape index: {}]
  %s10 = inlined_call_operand.vmem [shape: f32[7,256], index: 10, kind: input, shape index: {}]
  %s11 = inlined_call_operand.vmem [shape: f32[256,8], index: 11, kind: input, shape index: {}]
  %s12 = inlined_call_operand.hbm [shape: f32[8,256], index: 12, kind: input, shape index: {}]
  %s13 = inlined_call_operand.hbm [shape: f32[32,256], index: 13, kind: output, shape index: {0}]
  %s14 = inlined_call_operand.hbm [shape: f32[32,256], index: 14, kind: output, shape index: {1}]
  %15 = xla_tuple %s13, %s14
  %s16 = sld [smem:[#allocation0]]
  $region106: #{tpu_custom_call.1} parent=0
    _
  %s18 = ssub.s32 1, %s16
  %s19 = scalar_select 0, %s18, %s16
  $region1: #{tpu_custom_call.1} parent=0
    #allocation2 [shape = 'u8[16384]{0}', space=vmem, size = 0x4000, scoped, tag = 'input window, operand 0, single buffered']
    #allocation3 [shape = 's32[1]{0}', space=sflag, size = 0x4, scoped, tag = 'scoped memory for tpu_custom_call.1']
    #allocation4 [shape = 's32[1]{0}', space=sflag, size = 0x4, scoped, tag = 'scoped memory for tpu_custom_call.1']
    #allocation5 [shape = 'u8[65536]{0}', space=vmem, size = 0x10000, scoped, tag = 'input window, operand 3, single buffered']
    #allocation6 [shape = 's32[1]{0}', space=sflag, size = 0x4, scoped, tag = 'scoped memory for tpu_custom_call.1']
    #allocation7 [shape = 'u8[262144]{0}', space=vmem, size = 0x40000, scoped, tag = 'input window, operand 4, single buffered']
    #allocation8 [shape = 'u8[262144]{0}', space=vmem, size = 0x40000, scoped, tag = 'input window, operand 5, single buffered']
    #allocation9 [shape = 's32[1]{0}', space=sflag, size = 0x4, scoped, tag = 'scoped memory for tpu_custom_call.1']
    #allocation10 [shape = 'u8[262144]{0}', space=vmem, size = 0x40000, scoped, tag = 'input window, operand 6, single buffered']
    #allocation11 [shape = 'u8[262144]{0}', space=vmem, size = 0x40000, scoped, tag = 'input window, operand 7, single buffered']
    #allocation12 [shape = 's32[1]{0}', space=sflag, size = 0x4, scoped, tag = 'scoped memory for tpu_custom_call.1']
    #allocation13 [shape = 'u8[262144]{0}', space=vmem, size = 0x40000, scoped, tag = 'input window, operand 8, single buffered']
    #allocation14 [shape = 'u8[262144]{0}', space=vmem, size = 0x40000, scoped, tag = 'input window, operand 9, single buffered']
    #allocation15 [shape = 's32[1]{0}', space=sflag, size = 0x4, scoped, tag = 'scoped memory for tpu_custom_call.1']
    #allocation16 [shape = 'u8[8192]{0}', space=vmem, size = 0x2000, scoped, tag = 'input window, operand 12, single buffered']
    #allocation17 [shape = 'u8[32768]{0}', space=vmem, size = 0x8000, scoped, tag = 'output window, operand 0, single buffered']
    #allocation18 [shape = 'u8[32768]{0}', space=vmem, size = 0x8000, scoped, tag = 'output window, operand 1, single buffered']
    #allocation19 [shape = 's32[1]{0}', space=sflag, size = 0x4, scoped, tag = 'scoped memory for tpu_custom_call.1']
    %20 = vsyncpa [#allocation3], 0
    %21 = vsyncpa [#allocation6], 0
    %22 = vsyncpa [#allocation9], 0
    %23 = vsyncpa [#allocation12], 0
    %24 = vsyncpa [#allocation15], 0
    %25 = vsyncpa [#allocation4], 0
    %26 = vsyncpa [#allocation19], 0
    // Predicated region
    $region2: #{tpu_custom_call.1} parent=1 // pred_check
      _
    $region3: #{tpu_custom_call.1} parent=1 // pred_check_branch
      %28 = sbr.rel (0) target = $region5
    $region4: #{tpu_custom_call.1} parent=1 // pred_region
      %30 = vsyncadd [#allocation3], 0
      %s31 = sshll.u32 %s0, 4
      %s32 = int_to_ptr.hbm [resolvable:$true] %s31
      %s33 = sshll.u32 [#allocation2], 4
      %s34 = int_to_ptr.vmem [resolvable:$true] %s33
      %39 = dma.hbm_to_vmem [thread:$0]  %s32, 512, %s34, [#allocation3], 128, 128, 8
    $region5: #{tpu_custom_call.1} parent=1 // pred_fallthru
      _
    // Predicated region
    $region6: #{tpu_custom_call.1} parent=1 // pred_check
      _
    $region7: #{tpu_custom_call.1} parent=1 // pred_check_branch
      %41 = sbr.rel (0) target = $region9
    $region8: #{tpu_custom_call.1} parent=1 // pred_region
      _
    $region9: #{tpu_custom_call.1} parent=1 // pred_fallthru
      _
    // Predicated region
    $region10: #{tpu_custom_call.1} parent=1 // pred_check
      _
    $region11: #{tpu_custom_call.1} parent=1 // pred_check_branch
      %43 = sbr.rel (0) target = $region13
    $region12: #{tpu_custom_call.1} parent=1 // pred_region
      _
    $region13: #{tpu_custom_call.1} parent=1 // pred_fallthru
      _
    // Predicated region
    $region14: #{tpu_custom_call.1} parent=1 // pred_check
      _
    $region15: #{tpu_custom_call.1} parent=1 // pred_check_branch
      %45 = sbr.rel (0) target = $region17
    $region16: #{tpu_custom_call.1} parent=1 // pred_region
      %47 = vsyncadd [#allocation6], 0
      %s48 = sshll.u32 %s3, 4
      %s49 = int_to_ptr.hbm [resolvable:$true] %s48
      %s50 = sshll.u32 [#allocation5], 4
      %s51 = int_to_ptr.vmem [resolvable:$true] %s50
      %56 = dma.hbm_to_vmem [thread:$0]  %s49, 2048, %s51, [#allocation6], 256, 256, 16
    $region17: #{tpu_custom_call.1} parent=1 // pred_fallthru
      _
    // Predicated region
    $region18: #{tpu_custom_call.1} parent=1 // pred_check
      _
    $region19: #{tpu_custom_call.1} parent=1 // pred_check_branch
      %58 = sbr.rel (0) target = $region21
    $region20: #{tpu_custom_call.1} parent=1 // pred_region
      %60 = vsyncadd [#allocation6], 0
      %s61 = sshll.u32 %s4, 4
      %s62 = int_to_ptr.hbm [resolvable:$true] %s61
      %s63 = sshll.u32 [#allocation7], 4
      %s64 = int_to_ptr.vmem [resolvable:$true] %s63
      %69 = dma.hbm_to_vmem [thread:$0]  %s62, 8192, %s64, [#allocation6], 256, 256, 16
    $region21: #{tpu_custom_call.1} parent=1 // pred_fallthru
      _
    // Predicated region
    $region22: #{tpu_custom_call.1} parent=1 // pred_check
      _
    $region23: #{tpu_custom_call.1} parent=1 // pred_check_branch
      %71 = sbr.rel (0) target = $region25
    $region24: #{tpu_custom_call.1} parent=1 // pred_region
      %73 = vsyncadd [#allocation9], 0
      %s74 = sshll.u32 %s5, 4
      %s75 = int_to_ptr.hbm [resolvable:$true] %s74
      %s76 = sshll.u32 [#allocation8], 4
      %s77 = int_to_ptr.vmem [resolvable:$true] %s76
      %82 = dma.hbm_to_vmem [thread:$0]  %s75, 8192, %s77, [#allocation9], 256, 256, 16
    $region25: #{tpu_custom_call.1} parent=1 // pred_fallthru
      _
    // Predicated region
    $region26: #{tpu_custom_call.1} parent=1 // pred_check
      _
    $region27: #{tpu_custom_call.1} parent=1 // pred_check_branch
      %84 = sbr.rel (0) target = $region29
    $region28: #{tpu_custom_call.1} parent=1 // pred_region
      %86 = vsyncadd [#allocation9], 0
      %s87 = sshll.u32 %s6, 4
      %s88 = int_to_ptr.hbm [resolvable:$true] %s87
      %s89 = sshll.u32 [#allocation10], 4
      %s90 = int_to_ptr.vmem [resolvable:$true] %s89
      %95 = dma.hbm_to_vmem [thread:$0]  %s88, 8192, %s90, [#allocation9], 256, 256, 16
    $region29: #{tpu_custom_call.1} parent=1 // pred_fallthru
      _
    // Predicated region
    $region30: #{tpu_custom_call.1} parent=1 // pred_check
      _
    $region31: #{tpu_custom_call.1} parent=1 // pred_check_branch
      %97 = sbr.rel (0) target = $region33
    $region32: #{tpu_custom_call.1} parent=1 // pred_region
      %99 = vsyncadd [#allocation12], 0
      %s100 = sshll.u32 %s7, 4
      %s101 = int_to_ptr.hbm [resolvable:$true] %s100
      %s102 = sshll.u32 [#allocation11], 4
      %s103 = int_to_ptr.vmem [resolvable:$true] %s102
      %108 = dma.hbm_to_vmem [thread:$0]  %s101, 8192, %s103, [#allocation12], 256, 256, 16
    $region33: #{tpu_custom_call.1} parent=1 // pred_fallthru
      _
    // Predicated region
    $region34: #{tpu_custom_call.1} parent=1 // pred_check
      _
    $region35: #{tpu_custom_call.1} parent=1 // pred_check_branch
      %110 = sbr.rel (0) target = $region37
    $region36: #{tpu_custom_call.1} parent=1 // pred_region
      %112 = vsyncadd [#allocation12], 0
      %s113 = sshll.u32 %s8, 4
      %s114 = int_to_ptr.hbm [resolvable:$true] %s113
      %s115 = sshll.u32 [#allocation13], 4
      %s116 = int_to_ptr.vmem [resolvable:$true] %s115
      %121 = dma.hbm_to_vmem [thread:$0]  %s114, 8192, %s116, [#allocation12], 256, 256, 16
    $region37: #{tpu_custom_call.1} parent=1 // pred_fallthru
      _
    // Predicated region
    $region38: #{tpu_custom_call.1} parent=1 // pred_check
      _
    $region39: #{tpu_custom_call.1} parent=1 // pred_check_branch
      %123 = sbr.rel (0) target = $region41
    $region40: #{tpu_custom_call.1} parent=1 // pred_region
      %125 = vsyncadd [#allocation15], 0
      %s126 = sshll.u32 %s9, 4
      %s127 = int_to_ptr.hbm [resolvable:$true] %s126
      %s128 = sshll.u32 [#allocation14], 4
      %s129 = int_to_ptr.vmem [resolvable:$true] %s128
      %134 = dma.hbm_to_vmem [thread:$0]  %s127, 8192, %s129, [#allocation15], 256, 256, 16
    $region41: #{tpu_custom_call.1} parent=1 // pred_fallthru
      _
    // Predicated region
    $region42: #{tpu_custom_call.1} parent=1 // pred_check
      _
    $region43: #{tpu_custom_call.1} parent=1 // pred_check_branch
      %136 = sbr.rel (0) target = $region45
    $region44: #{tpu_custom_call.1} parent=1 // pred_region
      _
    $region45: #{tpu_custom_call.1} parent=1 // pred_fallthru
      _
    // Predicated region
    $region46: #{tpu_custom_call.1} parent=1 // pred_check
      _
    $region47: #{tpu_custom_call.1} parent=1 // pred_check_branch
      %138 = sbr.rel (0) target = $region49
    $region48: #{tpu_custom_call.1} parent=1 // pred_region
      _
    $region49: #{tpu_custom_call.1} parent=1 // pred_fallthru
      _
    // Predicated region
    $region50: #{tpu_custom_call.1} parent=1 // pred_check
      _
    $region51: #{tpu_custom_call.1} parent=1 // pred_check_branch
      %140 = sbr.rel (0) target = $region53
    $region52: #{tpu_custom_call.1} parent=1 // pred_region
      %142 = vsyncadd [#allocation15], 0
      %s144 = sshll.u32 %s12, 4
      %s145 = int_to_ptr.hbm [resolvable:$true] %s144
      %s146 = sshll.u32 [#allocation16], 4
      %s147 = int_to_ptr.vmem [resolvable:$true] %s146
      %149 = dma.hbm_to_vmem [thread:$0]  %s145, 256, %s147, [#allocation15]
    $region53: #{tpu_custom_call.1} parent=1 // pred_fallthru
      _
    // Predicated region
    $region54: #{tpu_custom_call.1} parent=1 // pred_check
      _
    $region55: #{tpu_custom_call.1} parent=1 // pred_check_branch
      %151 = sbr.rel (0) target = $region57
    $region56: #{tpu_custom_call.1} parent=1 // pred_region
      %153 = dma.done [#allocation3], 512
    $region57: #{tpu_custom_call.1} parent=1 // pred_fallthru
      _
    // Predicated region
    $region58: #{tpu_custom_call.1} parent=1 // pred_check
      _
    $region59: #{tpu_custom_call.1} parent=1 // pred_check_branch
      %155 = sbr.rel (0) target = $region61
    $region60: #{tpu_custom_call.1} parent=1 // pred_region
      %157 = dma.done [#allocation6], 2048
    $region61: #{tpu_custom_call.1} parent=1 // pred_fallthru
      _
    // Predicated region
    $region62: #{tpu_custom_call.1} parent=1 // pred_check
      _
    $region63: #{tpu_custom_call.1} parent=1 // pred_check_branch
      %159 = sbr.rel (0) target = $region65
    $region64: #{tpu_custom_call.1} parent=1 // pred_region
      %161 = dma.done [#allocation6], 8192
    $region65: #{tpu_custom_call.1} parent=1 // pred_fallthru
      _
    // Predicated region
    $region66: #{tpu_custom_call.1} parent=1 // pred_check
      _
    $region67: #{tpu_custom_call.1} parent=1 // pred_check_branch
      %163 = sbr.rel (0) target = $region69
    $region68: #{tpu_custom_call.1} parent=1 // pred_region
      %165 = dma.done [#allocation9], 8192
    $region69: #{tpu_custom_call.1} parent=1 // pred_fallthru
      _
    // Predicated region
    $region70: #{tpu_custom_call.1} parent=1 // pred_check
      _
    $region71: #{tpu_custom_call.1} parent=1 // pred_check_branch
      %167 = sbr.rel (0) target = $region73
    $region72: #{tpu_custom_call.1} parent=1 // pred_region
      %169 = dma.done [#allocation9], 8192
    $region73: #{tpu_custom_call.1} parent=1 // pred_fallthru
      _
    // Predicated region
    $region74: #{tpu_custom_call.1} parent=1 // pred_check
      _
    $region75: #{tpu_custom_call.1} parent=1 // pred_check_branch
      %171 = sbr.rel (0) target = $region77
    $region76: #{tpu_custom_call.1} parent=1 // pred_region
      %173 = dma.done [#allocation12], 8192
    $region77: #{tpu_custom_call.1} parent=1 // pred_fallthru
      _
    // Predicated region
    $region78: #{tpu_custom_call.1} parent=1 // pred_check
      _
    $region79: #{tpu_custom_call.1} parent=1 // pred_check_branch
      %175 = sbr.rel (0) target = $region81
    $region80: #{tpu_custom_call.1} parent=1 // pred_region
      %177 = dma.done [#allocation12], 8192
    $region81: #{tpu_custom_call.1} parent=1 // pred_fallthru
      _
    // Predicated region
    $region82: #{tpu_custom_call.1} parent=1 // pred_check
      _
    $region83: #{tpu_custom_call.1} parent=1 // pred_check_branch
      %179 = sbr.rel (0) target = $region85
    $region84: #{tpu_custom_call.1} parent=1 // pred_region
      %181 = dma.done [#allocation15], 8192
    $region85: #{tpu_custom_call.1} parent=1 // pred_fallthru
      _
    // Predicated region
    $region86: #{tpu_custom_call.1} parent=1 // pred_check
      _
    $region87: #{tpu_custom_call.1} parent=1 // pred_check_branch
      %183 = sbr.rel (0) target = $region89
    $region88: #{tpu_custom_call.1} parent=1 // pred_region
      %185 = dma.done [#allocation15], 256
    $region89: #{tpu_custom_call.1} parent=1 // pred_fallthru
      _
    %v186 = vld [vmem:[%s10] ss:$8 sm:$0x3]
    %s187 = scalar_lea.vmem %s10, 1
    %v188 = vld [vmem:[%s187] ss:$8 sm:$0x3]
    %s189 = scalar_lea.vmem %s10, 2
    %v190 = vld [vmem:[%s189] ss:$8 sm:$0x3]
    %s191 = scalar_lea.vmem %s10, 3
    %v192 = vld [vmem:[%s191] ss:$8 sm:$0x3]
    %s193 = scalar_lea.vmem %s10, 4
    %v194 = vld [vmem:[%s193] ss:$8 sm:$0x3]
    %s195 = scalar_lea.vmem %s10, 5
    %v196 = vld [vmem:[%s195] ss:$8 sm:$0x3]
    %s197 = scalar_lea.vmem %s10, 6
    %v198 = vld [vmem:[%s197] ss:$8 sm:$0x3]
    %v199 = vlaneseq
    %v200 = vshrl.u32 %v199, 7
    %v201 = vadd.s32 %v200, 8
    %v202 = vadd.s32 %v200, 16
    %v203 = vadd.s32 %v200, 24
    %vm204 = vcmp.lt.s32.totalorder %v200, 0
    %v205 = vsub.s32 0, %v200
    %v206 = vsel %vm204, %v205, %v200
    %v207 = vshrl.u32 %v206, 4
    %v208 = vand.u32 %v206, 15
    %v209 = vsub.s32 0, %v208
    %v210 = vsel %vm204, %v209, %v208
    %vm211 = vcmp.lt.s32.totalorder %v201, 0
    %v212 = vsub.s32 0, %v201
    %v213 = vsel %vm211, %v212, %v201
    %v214 = vshrl.u32 %v213, 4
    %v215 = vand.u32 %v213, 15
    %v216 = vsub.s32 0, %v215
    %v217 = vsel %vm211, %v216, %v215
    %vm218 = vcmp.lt.s32.totalorder %v202, 0
    %v219 = vsub.s32 0, %v202
    %v220 = vsel %vm218, %v219, %v202
    %v221 = vshrl.u32 %v220, 4
    %v222 = vand.u32 %v220, 15
    %v223 = vsub.s32 0, %v222
    %v224 = vsel %vm218, %v223, %v222
    %vm225 = vcmp.lt.s32.totalorder %v203, 0
    %v226 = vsub.s32 0, %v203
    %v227 = vsel %vm225, %v226, %v203
    %v228 = vshrl.u32 %v227, 4
    %v229 = vand.u32 %v227, 15
    %v230 = vsub.s32 0, %v229
    %v231 = vsel %vm225, %v230, %v229
    %vm232 = vcmp.ne.s32.totalorder %v210, 0
    %vm233 = vcmp.ne.s32.totalorder %v217, 0
    %vm234 = vcmp.ne.s32.totalorder %v224, 0
    %vm235 = vcmp.ne.s32.totalorder %v231, 0
    %vm236 = vcmp.lt.s32.totalorder %v210, 0
    %vm237 = vcmp.lt.s32.totalorder %v217, 0
    %vm238 = vcmp.lt.s32.totalorder %v224, 0
    %vm239 = vcmp.lt.s32.totalorder %v231, 0
    %vm240 = vmand %vm236, %vm232
    %vm241 = vmand %vm237, %vm233
    %vm242 = vmand %vm238, %vm234
    %vm243 = vmand %vm239, %vm235
    %v244 = vadd.s32 %v210, 16
    %v245 = vadd.s32 %v217, 16
    %v246 = vadd.s32 %v224, 16
    %v247 = vadd.s32 %v231, 16
    %v248 = vsel %vm240, %v244, %v210
    %v249 = vsel %vm241, %v245, %v217
    %v250 = vsel %vm242, %v246, %v224
    %v251 = vsel %vm243, %v247, %v231
    %vm252 = vcmp.ne.s32.totalorder %v248, 0
    %vm253 = vcmp.ne.s32.totalorder %v249, 0
    %vm254 = vcmp.ne.s32.totalorder %v250, 0
    %vm255 = vcmp.ne.s32.totalorder %v251, 0
    %v256 = vsel %vm252, 1, 0
    %v257 = vsel %vm253, 1, 0
    %v258 = vsel %vm254, 1, 0
    %v259 = vsel %vm255, 1, 0
    %v260 = vcvt.s32.f32 %v256
    %v261 = vcvt.s32.f32 %v257
    %v262 = vcvt.s32.f32 %v258
    %v263 = vcvt.s32.f32 %v259
    %vm264 = vcmp.ne.s32.totalorder %v248, 15
    %vm265 = vcmp.ne.s32.totalorder %v249, 15
    %vm266 = vcmp.ne.s32.totalorder %v250, 15
    %vm267 = vcmp.ne.s32.totalorder %v251, 15
    %v268 = vsel %vm264, 1, 0
    %v269 = vsel %vm265, 1, 0
    %v270 = vsel %vm266, 1, 0
    %v271 = vsel %vm267, 1, 0
    %v272 = vcvt.s32.f32 %v268
    %v273 = vcvt.s32.f32 %v269
    %v274 = vcvt.s32.f32 %v270
    %v275 = vcvt.s32.f32 %v271
    %v276 = vld [vmem:[%s11] sm:$0xff]
    %v277 = vld [vmem:[%s11 + $0x8] sm:$0xff]
    %v278 = vld [vmem:[%s11 + $0x10] sm:$0xff]
    %v279 = vld [vmem:[%s11 + $0x18] sm:$0xff]
    %v280 = vld [vmem:[%s11 + $0x20] sm:$0xff]
    %v281 = vld [vmem:[%s11 + $0x28] sm:$0xff]
    %v282 = vld [vmem:[%s11 + $0x30] sm:$0xff]
    %v283 = vld [vmem:[%s11 + $0x38] sm:$0xff]
    %v284 = vld [vmem:[%s11 + $0x40] sm:$0xff]
    %v285 = vld [vmem:[%s11 + $0x48] sm:$0xff]
    %v286 = vld [vmem:[%s11 + $0x50] sm:$0xff]
    %v287 = vld [vmem:[%s11 + $0x58] sm:$0xff]
    %v288 = vld [vmem:[%s11 + $0x60] sm:$0xff]
    %v289 = vld [vmem:[%s11 + $0x68] sm:$0xff]
    %v290 = vld [vmem:[%s11 + $0x70] sm:$0xff]
    %v291 = vld [vmem:[%s11 + $0x78] sm:$0xff]
    %v292 = vld [vmem:[%s11 + $0x80] sm:$0xff]
    %v293 = vld [vmem:[%s11 + $0x88] sm:$0xff]
    %v294 = vld [vmem:[%s11 + $0x90] sm:$0xff]
    %v295 = vld [vmem:[%s11 + $0x98] sm:$0xff]
    %v296 = vld [vmem:[%s11 + $0xa0] sm:$0xff]
    %v297 = vld [vmem:[%s11 + $0xa8] sm:$0xff]
    %v298 = vld [vmem:[%s11 + $0xb0] sm:$0xff]
    %v299 = vld [vmem:[%s11 + $0xb8] sm:$0xff]
    %v300 = vld [vmem:[%s11 + $0xc0] sm:$0xff]
    %v301 = vld [vmem:[%s11 + $0xc8] sm:$0xff]
    %v302 = vld [vmem:[%s11 + $0xd0] sm:$0xff]
    %v303 = vld [vmem:[%s11 + $0xd8] sm:$0xff]
    %v304 = vld [vmem:[%s11 + $0xe0] sm:$0xff]
    %v305 = vld [vmem:[%s11 + $0xe8] sm:$0xff]
    %v306 = vld [vmem:[%s11 + $0xf0] sm:$0xff]
    %v307 = vld [vmem:[%s11 + $0xf8] sm:$0xff]
    %v308 = vld [vmem:[#allocation16] sm:$0xff]
    %v309 = vld [vmem:[#allocation16 + $0x8] sm:$0xff]
    %v310 = vld [vmem:[#allocation2] sm:$0xff]
    %v311 = vld [vmem:[#allocation2 + $0x8] sm:$0xff]
    %v312 = vld [vmem:[#allocation2 + $0x10] sm:$0xff]
    %v313 = vld [vmem:[#allocation2 + $0x18] sm:$0xff]
    %vm318 = vcmask 1046528
    %v319 = vrot.slane %v310, 1
    %v320 = vrot.slane %v311, 1
    %v321 = vsel %vm318, %v319, %v320
    %v322 = vrot.slane %v312, 1
    %v323 = vsel %vm318, %v320, %v322
    %v324 = vrot.slane %v313, 1
    %v325 = vsel %vm318, %v322, %v324
    %v330 = vsel %vm318, %v324, 0.0
    %v331 = vmul.f32 %v321, %v272
    %v332 = vmul.f32 %v323, %v273
    %v333 = vmul.f32 %v325, %v274
    %v334 = vmul.f32 %v330, %v275
    %v335 = vld [vmem:[%s1] sm:$0xff]
    %v336 = vld [vmem:[%s1 + $0x8] sm:$0xff]
    %v337 = vld [vmem:[%s1 + $0x10] sm:$0xff]
    %v338 = vld [vmem:[%s1 + $0x18] sm:$0xff]
    %v339 = vld [vmem:[%s1 + $0x20] sm:$0xff]
    %v340 = vld [vmem:[%s1 + $0x28] sm:$0xff]
    %v341 = vld [vmem:[%s1 + $0x30] sm:$0xff]
    %v342 = vld [vmem:[%s1 + $0x38] sm:$0xff]
    %v343 = vld [vmem:[%s1 + $0x40] sm:$0xff]
    %v344 = vld [vmem:[%s1 + $0x48] sm:$0xff]
    %v345 = vld [vmem:[%s1 + $0x50] sm:$0xff]
    %v346 = vld [vmem:[%s1 + $0x58] sm:$0xff]
    %v347 = vld [vmem:[%s1 + $0x60] sm:$0xff]
    %v348 = vld [vmem:[%s1 + $0x68] sm:$0xff]
    %v349 = vld [vmem:[%s1 + $0x70] sm:$0xff]
    %v350 = vld [vmem:[%s1 + $0x78] sm:$0xff]
    %v352 = vperm.slane %v186, 0
    %v353 = vperm.slane %v186, 1
    %vm356 = vcmask 523264
    %v357 = vsel %vm356, %v310, 0
    %v359 = vsel %vm356, %v311, 0
    %v361 = vsel %vm356, %v312, 0
    %v363 = vsel %vm356, %v313, 0
    %365 = vmatpush.msra.mxu0 0.0
    %366 = vmatpush.msra.mxu0 0.0
    %367 = vmatpush.msra.mxu0 0.0
    %368 = vmatpush.msra.mxu0 0.0
    %369 = vmatpush.msra.mxu0 0.0
    %370 = vmatpush.msra.mxu0 0.0
    %371 = vmatpush.msra.mxu0 0.0
    %372 = vmatpush.msra.mxu0 0.0
    %373 = vmatpush.msra.mxu0 %v349
    %374 = vmatpush.msra.mxu0 %v347
    %375 = vmatpush.msra.mxu0 %v345
    %376 = vmatpush.msra.mxu0 %v343
    %377 = vmatpush.msra.mxu0 %v341
    %378 = vmatpush.msra.mxu0 %v339
    %379 = vmatpush.msra.mxu0 %v337
    %380 = vmatpush.msra.mxu0 %v335
    %381 = vmatmul.f32.gmra.mxu0 %v357
    %v382 = vpop.f32.mrf.mxu0
    %v383 = vadd.f32 %v352, %v382
    %384 = vmatmul.f32.gmra.mxu0 %v359
    %v385 = vpop.f32.mrf.mxu0
    %v386 = vadd.f32 %v352, %v385
    %387 = vmatmul.f32.gmra.mxu0 %v361
    %v388 = vpop.f32.mrf.mxu0
    %v389 = vadd.f32 %v352, %v388
    %390 = vmatmul.f32.gmra.mxu0 %v363
    %v391 = vpop.f32.mrf.mxu0
    %v392 = vadd.f32 %v352, %v391
    %393 = vdwg.mxu0
    %394 = vmatpush.msra.mxu0 0.0
    %395 = vmatpush.msra.mxu0 0.0
    %396 = vmatpush.msra.mxu0 0.0
    %397 = vmatpush.msra.mxu0 0.0
    %398 = vmatpush.msra.mxu0 0.0
    %399 = vmatpush.msra.mxu0 0.0
    %400 = vmatpush.msra.mxu0 0.0
    %401 = vmatpush.msra.mxu0 0.0
    %402 = vmatpush.msra.mxu0 %v350
    %403 = vmatpush.msra.mxu0 %v348
    %404 = vmatpush.msra.mxu0 %v346
    %405 = vmatpush.msra.mxu0 %v344
    %406 = vmatpush.msra.mxu0 %v342
    %407 = vmatpush.msra.mxu0 %v340
    %408 = vmatpush.msra.mxu0 %v338
    %409 = vmatpush.msra.mxu0 %v336
    %410 = vmatmul.f32.gmra.mxu0 %v357
    %v411 = vpop.f32.mrf.mxu0
    %v412 = vadd.f32 %v353, %v411
    %413 = vmatmul.f32.gmra.mxu0 %v359
    %v414 = vpop.f32.mrf.mxu0
    %v415 = vadd.f32 %v353, %v414
    %416 = vmatmul.f32.gmra.mxu0 %v361
    %v417 = vpop.f32.mrf.mxu0
    %v418 = vadd.f32 %v353, %v417
    %419 = vmatmul.f32.gmra.mxu0 %v363
    %v420 = vpop.f32.mrf.mxu0
    %v421 = vadd.f32 %v353, %v420
    %422 = vdwg.mxu0
    %v423 = vsub.f32 0.0, %v383
    %v424 = vsub.f32 0.0, %v412
    %v425 = vsub.f32 0.0, %v386
    %v426 = vsub.f32 0.0, %v415
    %v427 = vsub.f32 0.0, %v389
    %v428 = vsub.f32 0.0, %v418
    %v429 = vsub.f32 0.0, %v392
    %v430 = vsub.f32 0.0, %v421
    %v431 = vmul.f32 %v423, 1.442695
    %v432 = vpow.pop %v431
    %v433 = vmul.f32 %v424, 1.442695
    %v434 = vpow.pop %v433
    %v435 = vmul.f32 %v425, 1.442695
    %v436 = vpow.pop %v435
    %v437 = vmul.f32 %v426, 1.442695
    %v438 = vpow.pop %v437
    %v439 = vmul.f32 %v427, 1.442695
    %v440 = vpow.pop %v439
    %v441 = vmul.f32 %v428, 1.442695
    %v442 = vpow.pop %v441
    %v443 = vmul.f32 %v429, 1.442695
    %v444 = vpow.pop %v443
    %v445 = vmul.f32 %v430, 1.442695
    %v446 = vpow.pop %v445
    %v447 = vadd.f32 %v432, 1.0
    %v448 = vadd.f32 %v434, 1.0
    %v449 = vadd.f32 %v436, 1.0
    %v450 = vadd.f32 %v438, 1.0
    %v451 = vadd.f32 %v440, 1.0
    %v452 = vadd.f32 %v442, 1.0
    %v453 = vadd.f32 %v444, 1.0
    %v454 = vadd.f32 %v446, 1.0
    %v455 = vrcp.pop %v447
    %v456 = vmul.f32 %v447, %v455
    %v457 = vsub.f32 1.0, %v456
    %v458 = vmul.f32 %v455, %v457
    %v459 = vadd.f32 %v455, %v458
    %vm460 = vweird.f32 %v447
    %vm461 = vweird.f32 %v455
    %vm462 = vmor %vm460, %vm461
    %v463 = vsel %vm462, %v455, %v459
    %v464 = vand.u32 2147483647, %v447
    %vm465 = vcmp.eq.f32.partialorder %v464, 8.507059e+37
    %v466 = vand.u32 %v447, 2147483648
    %v467 = vor.u32 1.1754944e-38, %v466
    %v468 = vsel %vm465, %v467, %v463
    %v469 = vmul.f32 1.0, %v468
    %v470 = vrcp.pop %v448
    %v471 = vmul.f32 %v448, %v470
    %v472 = vsub.f32 1.0, %v471
    %v473 = vmul.f32 %v470, %v472
    %v474 = vadd.f32 %v470, %v473
    %vm475 = vweird.f32 %v448
    %vm476 = vweird.f32 %v470
    %vm477 = vmor %vm475, %vm476
    %v478 = vsel %vm477, %v470, %v474
    %v479 = vand.u32 2147483647, %v448
    %vm480 = vcmp.eq.f32.partialorder %v479, 8.507059e+37
    %v481 = vand.u32 %v448, 2147483648
    %v482 = vor.u32 1.1754944e-38, %v481
    %v483 = vsel %vm480, %v482, %v478
    %v484 = vmul.f32 1.0, %v483
    %v485 = vrcp.pop %v449
    %v486 = vmul.f32 %v449, %v485
    %v487 = vsub.f32 1.0, %v486
    %v488 = vmul.f32 %v485, %v487
    %v489 = vadd.f32 %v485, %v488
    %vm490 = vweird.f32 %v449
    %vm491 = vweird.f32 %v485
    %vm492 = vmor %vm490, %vm491
    %v493 = vsel %vm492, %v485, %v489
    %v494 = vand.u32 2147483647, %v449
    %vm495 = vcmp.eq.f32.partialorder %v494, 8.507059e+37
    %v496 = vand.u32 %v449, 2147483648
    %v497 = vor.u32 1.1754944e-38, %v496
    %v498 = vsel %vm495, %v497, %v493
    %v499 = vmul.f32 1.0, %v498
    %v500 = vrcp.pop %v450
    %v501 = vmul.f32 %v450, %v500
    %v502 = vsub.f32 1.0, %v501
    %v503 = vmul.f32 %v500, %v502
    %v504 = vadd.f32 %v500, %v503
    %vm505 = vweird.f32 %v450
    %vm506 = vweird.f32 %v500
    %vm507 = vmor %vm505, %vm506
    %v508 = vsel %vm507, %v500, %v504
    %v509 = vand.u32 2147483647, %v450
    %vm510 = vcmp.eq.f32.partialorder %v509, 8.507059e+37
    %v511 = vand.u32 %v450, 2147483648
    %v512 = vor.u32 1.1754944e-38, %v511
    %v513 = vsel %vm510, %v512, %v508
    %v514 = vmul.f32 1.0, %v513
    %v515 = vrcp.pop %v451
    %v516 = vmul.f32 %v451, %v515
    %v517 = vsub.f32 1.0, %v516
    %v518 = vmul.f32 %v515, %v517
    %v519 = vadd.f32 %v515, %v518
    %vm520 = vweird.f32 %v451
    %vm521 = vweird.f32 %v515
    %vm522 = vmor %vm520, %vm521
    %v523 = vsel %vm522, %v515, %v519
    %v524 = vand.u32 2147483647, %v451
    %vm525 = vcmp.eq.f32.partialorder %v524, 8.507059e+37
    %v526 = vand.u32 %v451, 2147483648
    %v527 = vor.u32 1.1754944e-38, %v526
    %v528 = vsel %vm525, %v527, %v523
    %v529 = vmul.f32 1.0, %v528
    %v530 = vrcp.pop %v452
    %v531 = vmul.f32 %v452, %v530
    %v532 = vsub.f32 1.0, %v531
    %v533 = vmul.f32 %v530, %v532
    %v534 = vadd.f32 %v530, %v533
    %vm535 = vweird.f32 %v452
    %vm536 = vweird.f32 %v530
    %vm537 = vmor %vm535, %vm536
    %v538 = vsel %vm537, %v530, %v534
    %v539 = vand.u32 2147483647, %v452
    %vm540 = vcmp.eq.f32.partialorder %v539, 8.507059e+37
    %v541 = vand.u32 %v452, 2147483648
    %v542 = vor.u32 1.1754944e-38, %v541
    %v543 = vsel %vm540, %v542, %v538
    %v544 = vmul.f32 1.0, %v543
    %v545 = vrcp.pop %v453
    %v546 = vmul.f32 %v453, %v545
    %v547 = vsub.f32 1.0, %v546
    %v548 = vmul.f32 %v545, %v547
    %v549 = vadd.f32 %v545, %v548
    %vm550 = vweird.f32 %v453
    %vm551 = vweird.f32 %v545
    %vm552 = vmor %vm550, %vm551
    %v553 = vsel %vm552, %v545, %v549
    %v554 = vand.u32 2147483647, %v453
    %vm555 = vcmp.eq.f32.partialorder %v554, 8.507059e+37
    %v556 = vand.u32 %v453, 2147483648
    %v557 = vor.u32 1.1754944e-38, %v556
    %v558 = vsel %vm555, %v557, %v553
    %v559 = vmul.f32 1.0, %v558
    %v560 = vrcp.pop %v454
    %v561 = vmul.f32 %v454, %v560
    %v562 = vsub.f32 1.0, %v561
    %v563 = vmul.f32 %v560, %v562
    %v564 = vadd.f32 %v560, %v563
    %vm565 = vweird.f32 %v454
    %vm566 = vweird.f32 %v560
    %vm567 = vmor %vm565, %vm566
    %v568 = vsel %vm567, %v560, %v564
    %v569 = vand.u32 2147483647, %v454
    %vm570 = vcmp.eq.f32.partialorder %v569, 8.507059e+37
    %v571 = vand.u32 %v454, 2147483648
    %v572 = vor.u32 1.1754944e-38, %v571
    %v573 = vsel %vm570, %v572, %v568
    %v574 = vmul.f32 1.0, %v573
    %v575 = vmul.f32 %v383, %v469
    %v576 = vmul.f32 %v412, %v484
    %v577 = vmul.f32 %v386, %v499
    %v578 = vmul.f32 %v415, %v514
    %v579 = vmul.f32 %v389, %v529
    %v580 = vmul.f32 %v418, %v544
    %v581 = vmul.f32 %v392, %v559
    %v582 = vmul.f32 %v421, %v574
    %v583 = vld [vmem:[%s2] sm:$0xff]
    %v584 = vld [vmem:[%s2 + $0x8] sm:$0xff]
    %v585 = vld [vmem:[%s2 + $0x10] sm:$0xff]
    %v586 = vld [vmem:[%s2 + $0x18] sm:$0xff]
    %v587 = vld [vmem:[%s2 + $0x20] sm:$0xff]
    %v588 = vld [vmem:[%s2 + $0x28] sm:$0xff]
    %v589 = vld [vmem:[%s2 + $0x30] sm:$0xff]
    %v590 = vld [vmem:[%s2 + $0x38] sm:$0xff]
    %v591 = vld [vmem:[%s2 + $0x40] sm:$0xff]
    %v592 = vld [vmem:[%s2 + $0x48] sm:$0xff]
    %v593 = vld [vmem:[%s2 + $0x50] sm:$0xff]
    %v594 = vld [vmem:[%s2 + $0x58] sm:$0xff]
    %v595 = vld [vmem:[%s2 + $0x60] sm:$0xff]
    %v596 = vld [vmem:[%s2 + $0x68] sm:$0xff]
    %v597 = vld [vmem:[%s2 + $0x70] sm:$0xff]
    %v598 = vld [vmem:[%s2 + $0x78] sm:$0xff]
    %v599 = vld [vmem:[#allocation5] sm:$0xff]
    %v600 = vld [vmem:[#allocation5 + $0x8] sm:$0xff]
    %v601 = vld [vmem:[#allocation5 + $0x10] sm:$0xff]
    %v602 = vld [vmem:[#allocation5 + $0x18] sm:$0xff]
    %v603 = vld [vmem:[#allocation5 + $0x20] sm:$0xff]
    %v604 = vld [vmem:[#allocation5 + $0x28] sm:$0xff]
    %v605 = vld [vmem:[#allocation5 + $0x30] sm:$0xff]
    %v606 = vld [vmem:[#allocation5 + $0x38] sm:$0xff]
    %v607 = vld [vmem:[#allocation5 + $0x40] sm:$0xff]
    %v608 = vld [vmem:[#allocation5 + $0x48] sm:$0xff]
    %v609 = vld [vmem:[#allocation5 + $0x50] sm:$0xff]
    %v610 = vld [vmem:[#allocation5 + $0x58] sm:$0xff]
    %v611 = vld [vmem:[#allocation5 + $0x60] sm:$0xff]
    %v612 = vld [vmem:[#allocation5 + $0x68] sm:$0xff]
    %v613 = vld [vmem:[#allocation5 + $0x70] sm:$0xff]
    %v614 = vld [vmem:[#allocation5 + $0x78] sm:$0xff]
    %v616 = vsel %vm356, %v331, 0
    %v619 = vsel %vm356, %v332, 0
    %v622 = vsel %vm356, %v333, 0
    %v625 = vsel %vm356, %v334, 0
    %627 = vmatpush.msra.mxu0 0.0
    %628 = vmatpush.msra.mxu0 0.0
    %629 = vmatpush.msra.mxu0 0.0
    %630 = vmatpush.msra.mxu0 0.0
    %631 = vmatpush.msra.mxu0 0.0
    %632 = vmatpush.msra.mxu0 0.0
    %633 = vmatpush.msra.mxu0 0.0
    %634 = vmatpush.msra.mxu0 0.0
    %635 = vmatpush.msra.mxu0 %v613
    %636 = vmatpush.msra.mxu0 %v611
    %637 = vmatpush.msra.mxu0 %v609
    %638 = vmatpush.msra.mxu0 %v607
    %639 = vmatpush.msra.mxu0 %v605
    %640 = vmatpush.msra.mxu0 %v603
    %641 = vmatpush.msra.mxu0 %v601
    %642 = vmatpush.msra.mxu0 %v599
    %643 = vmatmul.f32.gmra.mxu0 %v616
    %v644 = vpop.f32.mrf.mxu0
    %v645 = vadd.f32 0.0, %v644
    %646 = vmatmul.f32.gmra.mxu0 %v619
    %v647 = vpop.f32.mrf.mxu0
    %v648 = vadd.f32 0.0, %v647
    %649 = vmatmul.f32.gmra.mxu0 %v622
    %v650 = vpop.f32.mrf.mxu0
    %v651 = vadd.f32 0.0, %v650
    %652 = vmatmul.f32.gmra.mxu0 %v625
    %v653 = vpop.f32.mrf.mxu0
    %v654 = vadd.f32 0.0, %v653
    %655 = vdwg.mxu0
    %656 = vmatpush.msra.mxu0 0.0
    %657 = vmatpush.msra.mxu0 0.0
    %658 = vmatpush.msra.mxu0 0.0
    %659 = vmatpush.msra.mxu0 0.0
    %660 = vmatpush.msra.mxu0 0.0
    %661 = vmatpush.msra.mxu0 0.0
    %662 = vmatpush.msra.mxu0 0.0
    %663 = vmatpush.msra.mxu0 0.0
    %664 = vmatpush.msra.mxu0 %v614
    %665 = vmatpush.msra.mxu0 %v612
    %666 = vmatpush.msra.mxu0 %v610
    %667 = vmatpush.msra.mxu0 %v608
    %668 = vmatpush.msra.mxu0 %v606
    %669 = vmatpush.msra.mxu0 %v604
    %670 = vmatpush.msra.mxu0 %v602
    %671 = vmatpush.msra.mxu0 %v600
    %672 = vmatmul.f32.gmra.mxu0 %v616
    %v673 = vpop.f32.mrf.mxu0
    %v674 = vadd.f32 0.0, %v673
    %675 = vmatmul.f32.gmra.mxu0 %v619
    %v676 = vpop.f32.mrf.mxu0
    %v677 = vadd.f32 0.0, %v676
    %678 = vmatmul.f32.gmra.mxu0 %v622
    %v679 = vpop.f32.mrf.mxu0
    %v680 = vadd.f32 0.0, %v679
    %681 = vmatmul.f32.gmra.mxu0 %v625
    %v682 = vpop.f32.mrf.mxu0
    %v683 = vadd.f32 0.0, %v682
    %684 = vdwg.mxu0
    %685 = vmatpush.msra.mxu0 0.0
    %686 = vmatpush.msra.mxu0 0.0
    %687 = vmatpush.msra.mxu0 0.0
    %688 = vmatpush.msra.mxu0 0.0
    %689 = vmatpush.msra.mxu0 0.0
    %690 = vmatpush.msra.mxu0 0.0
    %691 = vmatpush.msra.mxu0 0.0
    %692 = vmatpush.msra.mxu0 0.0
    %693 = vmatpush.msra.mxu0 %v597
    %694 = vmatpush.msra.mxu0 %v595
    %695 = vmatpush.msra.mxu0 %v593
    %696 = vmatpush.msra.mxu0 %v591
    %697 = vmatpush.msra.mxu0 %v589
    %698 = vmatpush.msra.mxu0 %v587
    %699 = vmatpush.msra.mxu0 %v585
    %700 = vmatpush.msra.mxu0 %v583
    %701 = vmatmul.f32.gmra.mxu0 %v357
    %v702 = vpop.f32.mrf.mxu0
    %v703 = vadd.f32 %v645, %v702
    %704 = vmatmul.f32.gmra.mxu0 %v359
    %v705 = vpop.f32.mrf.mxu0
    %v706 = vadd.f32 %v648, %v705
    %707 = vmatmul.f32.gmra.mxu0 %v361
    %v708 = vpop.f32.mrf.mxu0
    %v709 = vadd.f32 %v651, %v708
    %710 = vmatmul.f32.gmra.mxu0 %v363
    %v711 = vpop.f32.mrf.mxu0
    %v712 = vadd.f32 %v654, %v711
    %713 = vdwg.mxu0
    %714 = vmatpush.msra.mxu0 0.0
    %715 = vmatpush.msra.mxu0 0.0
    %716 = vmatpush.msra.mxu0 0.0
    %717 = vmatpush.msra.mxu0 0.0
    %718 = vmatpush.msra.mxu0 0.0
    %719 = vmatpush.msra.mxu0 0.0
    %720 = vmatpush.msra.mxu0 0.0
    %721 = vmatpush.msra.mxu0 0.0
    %722 = vmatpush.msra.mxu0 %v598
    %723 = vmatpush.msra.mxu0 %v596
    %724 = vmatpush.msra.mxu0 %v594
    %725 = vmatpush.msra.mxu0 %v592
    %726 = vmatpush.msra.mxu0 %v590
    %727 = vmatpush.msra.mxu0 %v588
    %728 = vmatpush.msra.mxu0 %v586
    %729 = vmatpush.msra.mxu0 %v584
    %730 = vmatmul.f32.gmra.mxu0 %v357
    %v731 = vpop.f32.mrf.mxu0
    %v732 = vadd.f32 %v674, %v731
    %733 = vmatmul.f32.gmra.mxu0 %v359
    %v734 = vpop.f32.mrf.mxu0
    %v735 = vadd.f32 %v677, %v734
    %736 = vmatmul.f32.gmra.mxu0 %v361
    %v737 = vpop.f32.mrf.mxu0
    %v738 = vadd.f32 %v680, %v737
    %739 = vmatmul.f32.gmra.mxu0 %v363
    %v740 = vpop.f32.mrf.mxu0
    %v741 = vadd.f32 %v683, %v740
    %742 = vdwg.mxu0
    %v743 = vadd.f32 %v703, %v352
    %v744 = vadd.f32 %v732, %v353
    %v745 = vadd.f32 %v706, %v352
    %v746 = vadd.f32 %v735, %v353
    %v747 = vadd.f32 %v709, %v352
    %v748 = vadd.f32 %v738, %v353
    %v749 = vadd.f32 %v712, %v352
    %v750 = vadd.f32 %v741, %v353
    %v751 = vsub.f32 0.0, %v743
    %v752 = vsub.f32 0.0, %v744
    %v753 = vsub.f32 0.0, %v745
    %v754 = vsub.f32 0.0, %v746
    %v755 = vsub.f32 0.0, %v747
    %v756 = vsub.f32 0.0, %v748
    %v757 = vsub.f32 0.0, %v749
    %v758 = vsub.f32 0.0, %v750
    %v759 = vmul.f32 %v751, 1.442695
    %v760 = vpow.pop %v759
    %v761 = vmul.f32 %v752, 1.442695
    %v762 = vpow.pop %v761
    %v763 = vmul.f32 %v753, 1.442695
    %v764 = vpow.pop %v763
    %v765 = vmul.f32 %v754, 1.442695
    %v766 = vpow.pop %v765
    %v767 = vmul.f32 %v755, 1.442695
    %v768 = vpow.pop %v767
    %v769 = vmul.f32 %v756, 1.442695
    %v770 = vpow.pop %v769
    %v771 = vmul.f32 %v757, 1.442695
    %v772 = vpow.pop %v771
    %v773 = vmul.f32 %v758, 1.442695
    %v774 = vpow.pop %v773
    %v775 = vadd.f32 %v760, 1.0
    %v776 = vadd.f32 %v762, 1.0
    %v777 = vadd.f32 %v764, 1.0
    %v778 = vadd.f32 %v766, 1.0
    %v779 = vadd.f32 %v768, 1.0
    %v780 = vadd.f32 %v770, 1.0
    %v781 = vadd.f32 %v772, 1.0
    %v782 = vadd.f32 %v774, 1.0
    %v783 = vrcp.pop %v775
    %v784 = vmul.f32 %v775, %v783
    %v785 = vsub.f32 1.0, %v784
    %v786 = vmul.f32 %v783, %v785
    %v787 = vadd.f32 %v783, %v786
    %vm788 = vweird.f32 %v775
    %vm789 = vweird.f32 %v783
    %vm790 = vmor %vm788, %vm789
    %v791 = vsel %vm790, %v783, %v787
    %v792 = vand.u32 2147483647, %v775
    %vm793 = vcmp.eq.f32.partialorder %v792, 8.507059e+37
    %v794 = vand.u32 %v775, 2147483648
    %v795 = vor.u32 1.1754944e-38, %v794
    %v796 = vsel %vm793, %v795, %v791
    %v797 = vmul.f32 1.0, %v796
    %v798 = vrcp.pop %v776
    %v799 = vmul.f32 %v776, %v798
    %v800 = vsub.f32 1.0, %v799
    %v801 = vmul.f32 %v798, %v800
    %v802 = vadd.f32 %v798, %v801
    %vm803 = vweird.f32 %v776
    %vm804 = vweird.f32 %v798
    %vm805 = vmor %vm803, %vm804
    %v806 = vsel %vm805, %v798, %v802
    %v807 = vand.u32 2147483647, %v776
    %vm808 = vcmp.eq.f32.partialorder %v807, 8.507059e+37
    %v809 = vand.u32 %v776, 2147483648
    %v810 = vor.u32 1.1754944e-38, %v809
    %v811 = vsel %vm808, %v810, %v806
    %v812 = vmul.f32 1.0, %v811
    %v813 = vrcp.pop %v777
    %v814 = vmul.f32 %v777, %v813
    %v815 = vsub.f32 1.0, %v814
    %v816 = vmul.f32 %v813, %v815
    %v817 = vadd.f32 %v813, %v816
    %vm818 = vweird.f32 %v777
    %vm819 = vweird.f32 %v813
    %vm820 = vmor %vm818, %vm819
    %v821 = vsel %vm820, %v813, %v817
    %v822 = vand.u32 2147483647, %v777
    %vm823 = vcmp.eq.f32.partialorder %v822, 8.507059e+37
    %v824 = vand.u32 %v777, 2147483648
    %v825 = vor.u32 1.1754944e-38, %v824
    %v826 = vsel %vm823, %v825, %v821
    %v827 = vmul.f32 1.0, %v826
    %v828 = vrcp.pop %v778
    %v829 = vmul.f32 %v778, %v828
    %v830 = vsub.f32 1.0, %v829
    %v831 = vmul.f32 %v828, %v830
    %v832 = vadd.f32 %v828, %v831
    %vm833 = vweird.f32 %v778
    %vm834 = vweird.f32 %v828
    %vm835 = vmor %vm833, %vm834
    %v836 = vsel %vm835, %v828, %v832
    %v837 = vand.u32 2147483647, %v778
    %vm838 = vcmp.eq.f32.partialorder %v837, 8.507059e+37
    %v839 = vand.u32 %v778, 2147483648
    %v840 = vor.u32 1.1754944e-38, %v839
    %v841 = vsel %vm838, %v840, %v836
    %v842 = vmul.f32 1.0, %v841
    %v843 = vrcp.pop %v779
    %v844 = vmul.f32 %v779, %v843
    %v845 = vsub.f32 1.0, %v844
    %v846 = vmul.f32 %v843, %v845
    %v847 = vadd.f32 %v843, %v846
    %vm848 = vweird.f32 %v779
    %vm849 = vweird.f32 %v843
    %vm850 = vmor %vm848, %vm849
    %v851 = vsel %vm850, %v843, %v847
    %v852 = vand.u32 2147483647, %v779
    %vm853 = vcmp.eq.f32.partialorder %v852, 8.507059e+37
    %v854 = vand.u32 %v779, 2147483648
    %v855 = vor.u32 1.1754944e-38, %v854
    %v856 = vsel %vm853, %v855, %v851
    %v857 = vmul.f32 1.0, %v856
    %v858 = vrcp.pop %v780
    %v859 = vmul.f32 %v780, %v858
    %v860 = vsub.f32 1.0, %v859
    %v861 = vmul.f32 %v858, %v860
    %v862 = vadd.f32 %v858, %v861
    %vm863 = vweird.f32 %v780
    %vm864 = vweird.f32 %v858
    %vm865 = vmor %vm863, %vm864
    %v866 = vsel %vm865, %v858, %v862
    %v867 = vand.u32 2147483647, %v780
    %vm868 = vcmp.eq.f32.partialorder %v867, 8.507059e+37
    %v869 = vand.u32 %v780, 2147483648
    %v870 = vor.u32 1.1754944e-38, %v869
    %v871 = vsel %vm868, %v870, %v866
    %v872 = vmul.f32 1.0, %v871
    %v873 = vrcp.pop %v781
    %v874 = vmul.f32 %v781, %v873
    %v875 = vsub.f32 1.0, %v874
    %v876 = vmul.f32 %v873, %v875
    %v877 = vadd.f32 %v873, %v876
    %vm878 = vweird.f32 %v781
    %vm879 = vweird.f32 %v873
    %vm880 = vmor %vm878, %vm879
    %v881 = vsel %vm880, %v873, %v877
    %v882 = vand.u32 2147483647, %v781
    %vm883 = vcmp.eq.f32.partialorder %v882, 8.507059e+37
    %v884 = vand.u32 %v781, 2147483648
    %v885 = vor.u32 1.1754944e-38, %v884
    %v886 = vsel %vm883, %v885, %v881
    %v887 = vmul.f32 1.0, %v886
    %v888 = vrcp.pop %v782
    %v889 = vmul.f32 %v782, %v888
    %v890 = vsub.f32 1.0, %v889
    %v891 = vmul.f32 %v888, %v890
    %v892 = vadd.f32 %v888, %v891
    %vm893 = vweird.f32 %v782
    %vm894 = vweird.f32 %v888
    %vm895 = vmor %vm893, %vm894
    %v896 = vsel %vm895, %v888, %v892
    %v897 = vand.u32 2147483647, %v782
    %vm898 = vcmp.eq.f32.partialorder %v897, 8.507059e+37
    %v899 = vand.u32 %v782, 2147483648
    %v900 = vor.u32 1.1754944e-38, %v899
    %v901 = vsel %vm898, %v900, %v896
    %v902 = vmul.f32 1.0, %v901
    %v903 = vmul.f32 %v743, %v797
    %v904 = vmul.f32 %v744, %v812
    %v905 = vmul.f32 %v745, %v827
    %v906 = vmul.f32 %v746, %v842
    %v907 = vmul.f32 %v747, %v857
    %v908 = vmul.f32 %v748, %v872
    %v909 = vmul.f32 %v749, %v887
    %v910 = vmul.f32 %v750, %v902
    %v911 = vadd.f32 %v575, %v577
    %v912 = vadd.f32 %v911, %v579
    %v913 = vadd.f32 %v912, %v581
    %v914 = vrot.slane %v913, 4
    %v915 = vadd.f32 %v913, %v914
    %v916 = vrot.slane %v915, 2
    %v917 = vadd.f32 %v915, %v916
    %v918 = vrot.slane %v917, 1
    %v919 = vadd.f32 %v917, %v918
    %v920 = vadd.f32 %v576, %v578
    %v921 = vadd.f32 %v920, %v580
    %v922 = vadd.f32 %v921, %v582
    %v923 = vrot.slane %v922, 4
    %v924 = vadd.f32 %v922, %v923
    %v925 = vrot.slane %v924, 2
    %v926 = vadd.f32 %v924, %v925
    %v927 = vrot.slane %v926, 1
    %v928 = vadd.f32 %v926, %v927
    %v929 = vadd.f32 %v903, %v905
    %v930 = vadd.f32 %v929, %v907
    %v931 = vadd.f32 %v930, %v909
    %v932 = vrot.slane %v931, 4
    %v933 = vadd.f32 %v931, %v932
    %v934 = vrot.slane %v933, 2
    %v935 = vadd.f32 %v933, %v934
    %v936 = vrot.slane %v935, 1
    %v937 = vadd.f32 %v935, %v936
    %v938 = vadd.f32 %v904, %v906
    %v939 = vadd.f32 %v938, %v908
    %v940 = vadd.f32 %v939, %v910
    %v941 = vrot.slane %v940, 4
    %v942 = vadd.f32 %v940, %v941
    %v943 = vrot.slane %v942, 2
    %v944 = vadd.f32 %v942, %v943
    %v945 = vrot.slane %v944, 1
    %v946 = vadd.f32 %v944, %v945
    %v947 = vadd.f32 %v919, %v937
    %v948 = vadd.f32 %v928, %v946
    %v949 = vmul.f32 %v575, %v575
    %v950 = vmul.f32 %v576, %v576
    %v951 = vmul.f32 %v577, %v577
    %v952 = vmul.f32 %v578, %v578
    %v953 = vmul.f32 %v579, %v579
    %v954 = vmul.f32 %v580, %v580
    %v955 = vmul.f32 %v581, %v581
    %v956 = vmul.f32 %v582, %v582
    %v957 = vadd.f32 %v949, %v951
    %v958 = vadd.f32 %v957, %v953
    %v959 = vadd.f32 %v958, %v955
    %v960 = vrot.slane %v959, 4
    %v961 = vadd.f32 %v959, %v960
    %v962 = vrot.slane %v961, 2
    %v963 = vadd.f32 %v961, %v962
    %v964 = vrot.slane %v963, 1
    %v965 = vadd.f32 %v963, %v964
    %v966 = vadd.f32 %v950, %v952
    %v967 = vadd.f32 %v966, %v954
    %v968 = vadd.f32 %v967, %v956
    %v969 = vrot.slane %v968, 4
    %v970 = vadd.f32 %v968, %v969
    %v971 = vrot.slane %v970, 2
    %v972 = vadd.f32 %v970, %v971
    %v973 = vrot.slane %v972, 1
    %v974 = vadd.f32 %v972, %v973
    %v975 = vmul.f32 %v903, %v903
    %v976 = vmul.f32 %v904, %v904
    %v977 = vmul.f32 %v905, %v905
    %v978 = vmul.f32 %v906, %v906
    %v979 = vmul.f32 %v907, %v907
    %v980 = vmul.f32 %v908, %v908
    %v981 = vmul.f32 %v909, %v909
    %v982 = vmul.f32 %v910, %v910
    %v983 = vadd.f32 %v975, %v977
    %v984 = vadd.f32 %v983, %v979
    %v985 = vadd.f32 %v984, %v981
    %v986 = vrot.slane %v985, 4
    %v987 = vadd.f32 %v985, %v986
    %v988 = vrot.slane %v987, 2
    %v989 = vadd.f32 %v987, %v988
    %v990 = vrot.slane %v989, 1
    %v991 = vadd.f32 %v989, %v990
    %v992 = vadd.f32 %v976, %v978
    %v993 = vadd.f32 %v992, %v980
    %v994 = vadd.f32 %v993, %v982
    %v995 = vrot.slane %v994, 4
    %v996 = vadd.f32 %v994, %v995
    %v997 = vrot.slane %v996, 2
    %v998 = vadd.f32 %v996, %v997
    %v999 = vrot.slane %v998, 1
    %v1000 = vadd.f32 %v998, %v999
    %v1001 = vadd.f32 %v965, %v991
    %v1002 = vadd.f32 %v974, %v1000
    %1003 = vmatpush.msra.mxu0 %v291
    %1004 = vmatpush.msra.mxu0 %v290
    %1005 = vmatpush.msra.mxu0 %v289
    %1006 = vmatpush.msra.mxu0 %v288
    %1007 = vmatpush.msra.mxu0 %v287
    %1008 = vmatpush.msra.mxu0 %v286
    %1009 = vmatpush.msra.mxu0 %v285
    %1010 = vmatpush.msra.mxu0 %v284
    %1011 = vmatpush.msra.mxu0 %v283
    %1012 = vmatpush.msra.mxu0 %v282
    %1013 = vmatpush.msra.mxu0 %v281
    %1014 = vmatpush.msra.mxu0 %v280
    %1015 = vmatpush.msra.mxu0 %v279
    %1016 = vmatpush.msra.mxu0 %v278
    %1017 = vmatpush.msra.mxu0 %v277
    %1018 = vmatpush.msra.mxu0 %v276
    %1019 = vmatmul.f32.gmra.mxu0 %v947
    %v1020 = vpop.f32.mrf.mxu0
    %v1021 = vadd.f32 0.0, %v1020
    %1022 = vdwg.mxu0
    %1023 = vmatpush.msra.mxu0 %v307
    %1024 = vmatpush.msra.mxu0 %v306
    %1025 = vmatpush.msra.mxu0 %v305
    %1026 = vmatpush.msra.mxu0 %v304
    %1027 = vmatpush.msra.mxu0 %v303
    %1028 = vmatpush.msra.mxu0 %v302
    %1029 = vmatpush.msra.mxu0 %v301
    %1030 = vmatpush.msra.mxu0 %v300
    %1031 = vmatpush.msra.mxu0 %v299
    %1032 = vmatpush.msra.mxu0 %v298
    %1033 = vmatpush.msra.mxu0 %v297
    %1034 = vmatpush.msra.mxu0 %v296
    %1035 = vmatpush.msra.mxu0 %v295
    %1036 = vmatpush.msra.mxu0 %v294
    %1037 = vmatpush.msra.mxu0 %v293
    %1038 = vmatpush.msra.mxu0 %v292
    %1039 = vmatmul.f32.gmra.mxu0 %v948
    %v1040 = vpop.f32.mrf.mxu0
    %v1041 = vadd.f32 %v1021, %v1040
    %1042 = vdwg.mxu0
    %1043 = vmatpush.msra.mxu0 %v291
    %1044 = vmatpush.msra.mxu0 %v290
    %1045 = vmatpush.msra.mxu0 %v289
    %1046 = vmatpush.msra.mxu0 %v288
    %1047 = vmatpush.msra.mxu0 %v287
    %1048 = vmatpush.msra.mxu0 %v286
    %1049 = vmatpush.msra.mxu0 %v285
    %1050 = vmatpush.msra.mxu0 %v284
    %1051 = vmatpush.msra.mxu0 %v283
    %1052 = vmatpush.msra.mxu0 %v282
    %1053 = vmatpush.msra.mxu0 %v281
    %1054 = vmatpush.msra.mxu0 %v280
    %1055 = vmatpush.msra.mxu0 %v279
    %1056 = vmatpush.msra.mxu0 %v278
    %1057 = vmatpush.msra.mxu0 %v277
    %1058 = vmatpush.msra.mxu0 %v276
    %1059 = vmatmul.f32.gmra.mxu0 %v1001
    %v1060 = vpop.f32.mrf.mxu0
    %v1061 = vadd.f32 0.0, %v1060
    %1062 = vdwg.mxu0
    %1063 = vmatpush.msra.mxu0 %v307
    %1064 = vmatpush.msra.mxu0 %v306
    %1065 = vmatpush.msra.mxu0 %v305
    %1066 = vmatpush.msra.mxu0 %v304
    %1067 = vmatpush.msra.mxu0 %v303
    %1068 = vmatpush.msra.mxu0 %v302
    %1069 = vmatpush.msra.mxu0 %v301
    %1070 = vmatpush.msra.mxu0 %v300
    %1071 = vmatpush.msra.mxu0 %v299
    %1072 = vmatpush.msra.mxu0 %v298
    %1073 = vmatpush.msra.mxu0 %v297
    %1074 = vmatpush.msra.mxu0 %v296
    %1075 = vmatpush.msra.mxu0 %v295
    %1076 = vmatpush.msra.mxu0 %v294
    %1077 = vmatpush.msra.mxu0 %v293
    %1078 = vmatpush.msra.mxu0 %v292
    %1079 = vmatmul.f32.gmra.mxu0 %v1002
    %v1080 = vpop.f32.mrf.mxu0
    %v1081 = vadd.f32 %v1061, %v1080
    %1082 = vdwg.mxu0
    %v1083 = vmul.f32 %v1041, 0.00048828125
    %v1084 = vmul.f32 %v1081, 0.00048828125
    %v1085 = vmul.f32 %v1083, %v1083
    %v1086 = vsub.f32 %v1084, %v1085
    %v1087 = vadd.f32 %v1086, 1e-05
    %v1088 = vrsqrt.pop %v1087
    %v1089 = vmul.f32 %v1088, %v1087
    %v1090 = vmul.f32 %v1089, %v1088
    %v1091 = vmul.f32 0.5, %v1090
    %v1092 = vsub.f32 1.5, %v1091
    %v1093 = vmul.f32 %v1088, %v1092
    %vm1094 = vweird.f32 %v1087
    %vm1095 = vweird.f32 %v1088
    %vm1096 = vmor %vm1094, %vm1095
    %v1097 = vsel %vm1096, %v1088, %v1093
    %vm1098 = vcmask 64512
    %v1100 = vsel %vm1098, %v1083, 0
    %1102 = vmatpush.msra.mxu0 0.0
    %1103 = vmatpush.msra.mxu0 0.0
    %1104 = vmatpush.msra.mxu0 0.0
    %1105 = vmatpush.msra.mxu0 0.0
    %1106 = vmatpush.msra.mxu0 0.0
    %1107 = vmatpush.msra.mxu0 0.0
    %1108 = vmatpush.msra.mxu0 0.0
    %1109 = vmatpush.msra.mxu0 0.0
    %1110 = vmatpush.msra.mxu0 0.0
    %1111 = vmatpush.msra.mxu0 0.0
    %1112 = vmatpush.msra.mxu0 0.0
    %1113 = vmatpush.msra.mxu0 0.0
    %1114 = vmatpush.msra.mxu0 0.0
    %1115 = vmatpush.msra.mxu0 0.0
    %1116 = vmatpush.msra.mxu0 0.0
    %1117 = vmatpush.msra.mxu0 %v308
    %1118 = vmatmul.f32.gmra.mxu0 %v1100
    %v1119 = vpop.f32.mrf.mxu0
    %v1120 = vadd.f32 0.0, %v1119
    %1121 = vdwg.mxu0
    %1122 = vmatpush.msra.mxu0 0.0
    %1123 = vmatpush.msra.mxu0 0.0
    %1124 = vmatpush.msra.mxu0 0.0
    %1125 = vmatpush.msra.mxu0 0.0
    %1126 = vmatpush.msra.mxu0 0.0
    %1127 = vmatpush.msra.mxu0 0.0
    %1128 = vmatpush.msra.mxu0 0.0
    %1129 = vmatpush.msra.mxu0 0.0
    %1130 = vmatpush.msra.mxu0 0.0
    %1131 = vmatpush.msra.mxu0 0.0
    %1132 = vmatpush.msra.mxu0 0.0
    %1133 = vmatpush.msra.mxu0 0.0
    %1134 = vmatpush.msra.mxu0 0.0
    %1135 = vmatpush.msra.mxu0 0.0
    %1136 = vmatpush.msra.mxu0 0.0
    %1137 = vmatpush.msra.mxu0 %v309
    %1138 = vmatmul.f32.gmra.mxu0 %v1100
    %v1139 = vpop.f32.mrf.mxu0
    %v1140 = vadd.f32 0.0, %v1139
    %1141 = vdwg.mxu0
    %v1143 = vsel %vm1098, %v1097, 0
    %1145 = vmatpush.msra.mxu0 0.0
    %1146 = vmatpush.msra.mxu0 0.0
    %1147 = vmatpush.msra.mxu0 0.0
    %1148 = vmatpush.msra.mxu0 0.0
    %1149 = vmatpush.msra.mxu0 0.0
    %1150 = vmatpush.msra.mxu0 0.0
    %1151 = vmatpush.msra.mxu0 0.0
    %1152 = vmatpush.msra.mxu0 0.0
    %1153 = vmatpush.msra.mxu0 0.0
    %1154 = vmatpush.msra.mxu0 0.0
    %1155 = vmatpush.msra.mxu0 0.0
    %1156 = vmatpush.msra.mxu0 0.0
    %1157 = vmatpush.msra.mxu0 0.0
    %1158 = vmatpush.msra.mxu0 0.0
    %1159 = vmatpush.msra.mxu0 0.0
    %1160 = vmatpush.msra.mxu0 %v308
    %1161 = vmatmul.f32.gmra.mxu0 %v1143
    %v1162 = vpop.f32.mrf.mxu0
    %v1163 = vadd.f32 0.0, %v1162
    %1164 = vdwg.mxu0
    %1165 = vmatpush.msra.mxu0 0.0
    %1166 = vmatpush.msra.mxu0 0.0
    %1167 = vmatpush.msra.mxu0 0.0
    %1168 = vmatpush.msra.mxu0 0.0
    %1169 = vmatpush.msra.mxu0 0.0
    %1170 = vmatpush.msra.mxu0 0.0
    %1171 = vmatpush.msra.mxu0 0.0
    %1172 = vmatpush.msra.mxu0 0.0
    %1173 = vmatpush.msra.mxu0 0.0
    %1174 = vmatpush.msra.mxu0 0.0
    %1175 = vmatpush.msra.mxu0 0.0
    %1176 = vmatpush.msra.mxu0 0.0
    %1177 = vmatpush.msra.mxu0 0.0
    %1178 = vmatpush.msra.mxu0 0.0
    %1179 = vmatpush.msra.mxu0 0.0
    %1180 = vmatpush.msra.mxu0 %v309
    %1181 = vmatmul.f32.gmra.mxu0 %v1143
    %v1182 = vpop.f32.mrf.mxu0
    %v1183 = vadd.f32 0.0, %v1182
    %1184 = vdwg.mxu0
    %v1187 = vrot.slane %v1183, 7
    %vm1188 = vcmask 1040384
    %v1189 = vsel %vm1188, %v1163, %v1187
    %v1191 = vmul.f32 %v188, %v1189
    %v1193 = vperm.slane %v1191, 0
    %v1194 = vperm.slane %v1191, 1
    %v1197 = vmul.f32 %v1120, %v1193
    %v1198 = vmul.f32 %v1140, %v1194
    %v1201 = vrot.slane %v1198, 7
    %v1202 = vsel %vm1188, %v1197, %v1201
    %v1204 = vsub.f32 %v190, %v1202
    %v1205 = vmul.f32 %v575, %v1193
    %v1206 = vmul.f32 %v576, %v1194
    %v1207 = vmul.f32 %v577, %v1193
    %v1208 = vmul.f32 %v578, %v1194
    %v1209 = vmul.f32 %v579, %v1193
    %v1210 = vmul.f32 %v580, %v1194
    %v1211 = vmul.f32 %v581, %v1193
    %v1212 = vmul.f32 %v582, %v1194
    %v1214 = vperm.slane %v1204, 0
    %v1215 = vperm.slane %v1204, 1
    %v1218 = vadd.f32 %v1205, %v1214
    %v1219 = vadd.f32 %v1206, %v1215
    %v1220 = vadd.f32 %v1207, %v1214
    %v1221 = vadd.f32 %v1208, %v1215
    %v1222 = vadd.f32 %v1209, %v1214
    %v1223 = vadd.f32 %v1210, %v1215
    %v1224 = vadd.f32 %v1211, %v1214
    %v1225 = vadd.f32 %v1212, %v1215
    %v1226 = vmul.f32 %v903, %v1193
    %v1227 = vmul.f32 %v904, %v1194
    %v1228 = vmul.f32 %v905, %v1193
    %v1229 = vmul.f32 %v906, %v1194
    %v1230 = vmul.f32 %v907, %v1193
    %v1231 = vmul.f32 %v908, %v1194
    %v1232 = vmul.f32 %v909, %v1193
    %v1233 = vmul.f32 %v910, %v1194
    %v1234 = vadd.f32 %v1226, %v1214
    %v1235 = vadd.f32 %v1227, %v1215
    %v1236 = vadd.f32 %v1228, %v1214
    %v1237 = vadd.f32 %v1229, %v1215
    %v1238 = vadd.f32 %v1230, %v1214
    %v1239 = vadd.f32 %v1231, %v1215
    %v1240 = vadd.f32 %v1232, %v1214
    %v1241 = vadd.f32 %v1233, %v1215
    %v1242 = vld [vmem:[#allocation7] sm:$0xff]
    %v1243 = vld [vmem:[#allocation7 + $0x8] sm:$0xff]
    %v1244 = vld [vmem:[#allocation7 + $0x10] sm:$0xff]
    %v1245 = vld [vmem:[#allocation7 + $0x18] sm:$0xff]
    %v1246 = vld [vmem:[#allocation7 + $0x20] sm:$0xff]
    %v1247 = vld [vmem:[#allocation7 + $0x28] sm:$0xff]
    %v1248 = vld [vmem:[#allocation7 + $0x30] sm:$0xff]
    %v1249 = vld [vmem:[#allocation7 + $0x38] sm:$0xff]
    %v1250 = vld [vmem:[#allocation7 + $0x40] sm:$0xff]
    %v1251 = vld [vmem:[#allocation7 + $0x48] sm:$0xff]
    %v1252 = vld [vmem:[#allocation7 + $0x50] sm:$0xff]
    %v1253 = vld [vmem:[#allocation7 + $0x58] sm:$0xff]
    %v1254 = vld [vmem:[#allocation7 + $0x60] sm:$0xff]
    %v1255 = vld [vmem:[#allocation7 + $0x68] sm:$0xff]
    %v1256 = vld [vmem:[#allocation7 + $0x70] sm:$0xff]
    %v1257 = vld [vmem:[#allocation7 + $0x78] sm:$0xff]
    %v1258 = vld [vmem:[#allocation7 + $0x80] sm:$0xff]
    %v1259 = vld [vmem:[#allocation7 + $0x88] sm:$0xff]
    %v1260 = vld [vmem:[#allocation7 + $0x90] sm:$0xff]
    %v1261 = vld [vmem:[#allocation7 + $0x98] sm:$0xff]
    %v1262 = vld [vmem:[#allocation7 + $0xa0] sm:$0xff]
    %v1263 = vld [vmem:[#allocation7 + $0xa8] sm:$0xff]
    %v1264 = vld [vmem:[#allocation7 + $0xb0] sm:$0xff]
    %v1265 = vld [vmem:[#allocation7 + $0xb8] sm:$0xff]
    %v1266 = vld [vmem:[#allocation7 + $0xc0] sm:$0xff]
    %v1267 = vld [vmem:[#allocation7 + $0xc8] sm:$0xff]
    %v1268 = vld [vmem:[#allocation7 + $0xd0] sm:$0xff]
    %v1269 = vld [vmem:[#allocation7 + $0xd8] sm:$0xff]
    %v1270 = vld [vmem:[#allocation7 + $0xe0] sm:$0xff]
    %v1271 = vld [vmem:[#allocation7 + $0xe8] sm:$0xff]
    %v1272 = vld [vmem:[#allocation7 + $0xf0] sm:$0xff]
    %v1273 = vld [vmem:[#allocation7 + $0xf8] sm:$0xff]
    %v1274 = vld [vmem:[#allocation7 + $0x100] sm:$0xff]
    %v1275 = vld [vmem:[#allocation7 + $0x108] sm:$0xff]
    %v1276 = vld [vmem:[#allocation7 + $0x110] sm:$0xff]
    %v1277 = vld [vmem:[#allocation7 + $0x118] sm:$0xff]
    %v1278 = vld [vmem:[#allocation7 + $0x120] sm:$0xff]
    %v1279 = vld [vmem:[#allocation7 + $0x128] sm:$0xff]
    %v1280 = vld [vmem:[#allocation7 + $0x130] sm:$0xff]
    %v1281 = vld [vmem:[#allocation7 + $0x138] sm:$0xff]
    %v1282 = vld [vmem:[#allocation7 + $0x140] sm:$0xff]
    %v1283 = vld [vmem:[#allocation7 + $0x148] sm:$0xff]
    %v1284 = vld [vmem:[#allocation7 + $0x150] sm:$0xff]
    %v1285 = vld [vmem:[#allocation7 + $0x158] sm:$0xff]
    %v1286 = vld [vmem:[#allocation7 + $0x160] sm:$0xff]
    %v1287 = vld [vmem:[#allocation7 + $0x168] sm:$0xff]
    %v1288 = vld [vmem:[#allocation7 + $0x170] sm:$0xff]
    %v1289 = vld [vmem:[#allocation7 + $0x178] sm:$0xff]
    %v1290 = vld [vmem:[#allocation7 + $0x180] sm:$0xff]
    %v1291 = vld [vmem:[#allocation7 + $0x188] sm:$0xff]
    %v1292 = vld [vmem:[#allocation7 + $0x190] sm:$0xff]
    %v1293 = vld [vmem:[#allocation7 + $0x198] sm:$0xff]
    %v1294 = vld [vmem:[#allocation7 + $0x1a0] sm:$0xff]
    %v1295 = vld [vmem:[#allocation7 + $0x1a8] sm:$0xff]
    %v1296 = vld [vmem:[#allocation7 + $0x1b0] sm:$0xff]
    %v1297 = vld [vmem:[#allocation7 + $0x1b8] sm:$0xff]
    %v1298 = vld [vmem:[#allocation7 + $0x1c0] sm:$0xff]
    %v1299 = vld [vmem:[#allocation7 + $0x1c8] sm:$0xff]
    %v1300 = vld [vmem:[#allocation7 + $0x1d0] sm:$0xff]
    %v1301 = vld [vmem:[#allocation7 + $0x1d8] sm:$0xff]
    %v1302 = vld [vmem:[#allocation7 + $0x1e0] sm:$0xff]
    %v1303 = vld [vmem:[#allocation7 + $0x1e8] sm:$0xff]
    %v1304 = vld [vmem:[#allocation7 + $0x1f0] sm:$0xff]
    %v1305 = vld [vmem:[#allocation7 + $0x1f8] sm:$0xff]
    %v1306 = vld [vmem:[#allocation8] sm:$0xff]
    %v1307 = vld [vmem:[#allocation8 + $0x8] sm:$0xff]
    %v1308 = vld [vmem:[#allocation8 + $0x10] sm:$0xff]
    %v1309 = vld [vmem:[#allocation8 + $0x18] sm:$0xff]
    %v1310 = vld [vmem:[#allocation8 + $0x20] sm:$0xff]
    %v1311 = vld [vmem:[#allocation8 + $0x28] sm:$0xff]
    %v1312 = vld [vmem:[#allocation8 + $0x30] sm:$0xff]
    %v1313 = vld [vmem:[#allocation8 + $0x38] sm:$0xff]
    %v1314 = vld [vmem:[#allocation8 + $0x40] sm:$0xff]
    %v1315 = vld [vmem:[#allocation8 + $0x48] sm:$0xff]
    %v1316 = vld [vmem:[#allocation8 + $0x50] sm:$0xff]
    %v1317 = vld [vmem:[#allocation8 + $0x58] sm:$0xff]
    %v1318 = vld [vmem:[#allocation8 + $0x60] sm:$0xff]
    %v1319 = vld [vmem:[#allocation8 + $0x68] sm:$0xff]
    %v1320 = vld [vmem:[#allocation8 + $0x70] sm:$0xff]
    %v1321 = vld [vmem:[#allocation8 + $0x78] sm:$0xff]
    %v1322 = vld [vmem:[#allocation8 + $0x80] sm:$0xff]
    %v1323 = vld [vmem:[#allocation8 + $0x88] sm:$0xff]
    %v1324 = vld [vmem:[#allocation8 + $0x90] sm:$0xff]
    %v1325 = vld [vmem:[#allocation8 + $0x98] sm:$0xff]
    %v1326 = vld [vmem:[#allocation8 + $0xa0] sm:$0xff]
    %v1327 = vld [vmem:[#allocation8 + $0xa8] sm:$0xff]
    %v1328 = vld [vmem:[#allocation8 + $0xb0] sm:$0xff]
    %v1329 = vld [vmem:[#allocation8 + $0xb8] sm:$0xff]
    %v1330 = vld [vmem:[#allocation8 + $0xc0] sm:$0xff]
    %v1331 = vld [vmem:[#allocation8 + $0xc8] sm:$0xff]
    %v1332 = vld [vmem:[#allocation8 + $0xd0] sm:$0xff]
    %v1333 = vld [vmem:[#allocation8 + $0xd8] sm:$0xff]
    %v1334 = vld [vmem:[#allocation8 + $0xe0] sm:$0xff]
    %v1335 = vld [vmem:[#allocation8 + $0xe8] sm:$0xff]
    %v1336 = vld [vmem:[#allocation8 + $0xf0] sm:$0xff]
    %v1337 = vld [vmem:[#allocation8 + $0xf8] sm:$0xff]
    %v1338 = vld [vmem:[#allocation8 + $0x100] sm:$0xff]
    %v1339 = vld [vmem:[#allocation8 + $0x108] sm:$0xff]
    %v1340 = vld [vmem:[#allocation8 + $0x110] sm:$0xff]
    %v1341 = vld [vmem:[#allocation8 + $0x118] sm:$0xff]
    %v1342 = vld [vmem:[#allocation8 + $0x120] sm:$0xff]
    %v1343 = vld [vmem:[#allocation8 + $0x128] sm:$0xff]
    %v1344 = vld [vmem:[#allocation8 + $0x130] sm:$0xff]
    %v1345 = vld [vmem:[#allocation8 + $0x138] sm:$0xff]
    %v1346 = vld [vmem:[#allocation8 + $0x140] sm:$0xff]
    %v1347 = vld [vmem:[#allocation8 + $0x148] sm:$0xff]
    %v1348 = vld [vmem:[#allocation8 + $0x150] sm:$0xff]
    %v1349 = vld [vmem:[#allocation8 + $0x158] sm:$0xff]
    %v1350 = vld [vmem:[#allocation8 + $0x160] sm:$0xff]
    %v1351 = vld [vmem:[#allocation8 + $0x168] sm:$0xff]
    %v1352 = vld [vmem:[#allocation8 + $0x170] sm:$0xff]
    %v1353 = vld [vmem:[#allocation8 + $0x178] sm:$0xff]
    %v1354 = vld [vmem:[#allocation8 + $0x180] sm:$0xff]
    %v1355 = vld [vmem:[#allocation8 + $0x188] sm:$0xff]
    %v1356 = vld [vmem:[#allocation8 + $0x190] sm:$0xff]
    %v1357 = vld [vmem:[#allocation8 + $0x198] sm:$0xff]
    %v1358 = vld [vmem:[#allocation8 + $0x1a0] sm:$0xff]
    %v1359 = vld [vmem:[#allocation8 + $0x1a8] sm:$0xff]
    %v1360 = vld [vmem:[#allocation8 + $0x1b0] sm:$0xff]
    %v1361 = vld [vmem:[#allocation8 + $0x1b8] sm:$0xff]
    %v1362 = vld [vmem:[#allocation8 + $0x1c0] sm:$0xff]
    %v1363 = vld [vmem:[#allocation8 + $0x1c8] sm:$0xff]
    %v1364 = vld [vmem:[#allocation8 + $0x1d0] sm:$0xff]
    %v1365 = vld [vmem:[#allocation8 + $0x1d8] sm:$0xff]
    %v1366 = vld [vmem:[#allocation8 + $0x1e0] sm:$0xff]
    %v1367 = vld [vmem:[#allocation8 + $0x1e8] sm:$0xff]
    %v1368 = vld [vmem:[#allocation8 + $0x1f0] sm:$0xff]
    %v1369 = vld [vmem:[#allocation8 + $0x1f8] sm:$0xff]
    %v1370 = vld [vmem:[#allocation10] sm:$0xff]
    %v1371 = vld [vmem:[#allocation10 + $0x8] sm:$0xff]
    %v1372 = vld [vmem:[#allocation10 + $0x10] sm:$0xff]
    %v1373 = vld [vmem:[#allocation10 + $0x18] sm:$0xff]
    %v1374 = vld [vmem:[#allocation10 + $0x20] sm:$0xff]
    %v1375 = vld [vmem:[#allocation10 + $0x28] sm:$0xff]
    %v1376 = vld [vmem:[#allocation10 + $0x30] sm:$0xff]
    %v1377 = vld [vmem:[#allocation10 + $0x38] sm:$0xff]
    %v1378 = vld [vmem:[#allocation10 + $0x40] sm:$0xff]
    %v1379 = vld [vmem:[#allocation10 + $0x48] sm:$0xff]
    %v1380 = vld [vmem:[#allocation10 + $0x50] sm:$0xff]
    %v1381 = vld [vmem:[#allocation10 + $0x58] sm:$0xff]
    %v1382 = vld [vmem:[#allocation10 + $0x60] sm:$0xff]
    %v1383 = vld [vmem:[#allocation10 + $0x68] sm:$0xff]
    %v1384 = vld [vmem:[#allocation10 + $0x70] sm:$0xff]
    %v1385 = vld [vmem:[#allocation10 + $0x78] sm:$0xff]
    %v1386 = vld [vmem:[#allocation10 + $0x80] sm:$0xff]
    %v1387 = vld [vmem:[#allocation10 + $0x88] sm:$0xff]
    %v1388 = vld [vmem:[#allocation10 + $0x90] sm:$0xff]
    %v1389 = vld [vmem:[#allocation10 + $0x98] sm:$0xff]
    %v1390 = vld [vmem:[#allocation10 + $0xa0] sm:$0xff]
    %v1391 = vld [vmem:[#allocation10 + $0xa8] sm:$0xff]
    %v1392 = vld [vmem:[#allocation10 + $0xb0] sm:$0xff]
    %v1393 = vld [vmem:[#allocation10 + $0xb8] sm:$0xff]
    %v1394 = vld [vmem:[#allocation10 + $0xc0] sm:$0xff]
    %v1395 = vld [vmem:[#allocation10 + $0xc8] sm:$0xff]
    %v1396 = vld [vmem:[#allocation10 + $0xd0] sm:$0xff]
    %v1397 = vld [vmem:[#allocation10 + $0xd8] sm:$0xff]
    %v1398 = vld [vmem:[#allocation10 + $0xe0] sm:$0xff]
    %v1399 = vld [vmem:[#allocation10 + $0xe8] sm:$0xff]
    %v1400 = vld [vmem:[#allocation10 + $0xf0] sm:$0xff]
    %v1401 = vld [vmem:[#allocation10 + $0xf8] sm:$0xff]
    %v1402 = vld [vmem:[#allocation10 + $0x100] sm:$0xff]
    %v1403 = vld [vmem:[#allocation10 + $0x108] sm:$0xff]
    %v1404 = vld [vmem:[#allocation10 + $0x110] sm:$0xff]
    %v1405 = vld [vmem:[#allocation10 + $0x118] sm:$0xff]
    %v1406 = vld [vmem:[#allocation10 + $0x120] sm:$0xff]
    %v1407 = vld [vmem:[#allocation10 + $0x128] sm:$0xff]
    %v1408 = vld [vmem:[#allocation10 + $0x130] sm:$0xff]
    %v1409 = vld [vmem:[#allocation10 + $0x138] sm:$0xff]
    %v1410 = vld [vmem:[#allocation10 + $0x140] sm:$0xff]
    %v1411 = vld [vmem:[#allocation10 + $0x148] sm:$0xff]
    %v1412 = vld [vmem:[#allocation10 + $0x150] sm:$0xff]
    %v1413 = vld [vmem:[#allocation10 + $0x158] sm:$0xff]
    %v1414 = vld [vmem:[#allocation10 + $0x160] sm:$0xff]
    %v1415 = vld [vmem:[#allocation10 + $0x168] sm:$0xff]
    %v1416 = vld [vmem:[#allocation10 + $0x170] sm:$0xff]
    %v1417 = vld [vmem:[#allocation10 + $0x178] sm:$0xff]
    %v1418 = vld [vmem:[#allocation10 + $0x180] sm:$0xff]
    %v1419 = vld [vmem:[#allocation10 + $0x188] sm:$0xff]
    %v1420 = vld [vmem:[#allocation10 + $0x190] sm:$0xff]
    %v1421 = vld [vmem:[#allocation10 + $0x198] sm:$0xff]
    %v1422 = vld [vmem:[#allocation10 + $0x1a0] sm:$0xff]
    %v1423 = vld [vmem:[#allocation10 + $0x1a8] sm:$0xff]
    %v1424 = vld [vmem:[#allocation10 + $0x1b0] sm:$0xff]
    %v1425 = vld [vmem:[#allocation10 + $0x1b8] sm:$0xff]
    %v1426 = vld [vmem:[#allocation10 + $0x1c0] sm:$0xff]
    %v1427 = vld [vmem:[#allocation10 + $0x1c8] sm:$0xff]
    %v1428 = vld [vmem:[#allocation10 + $0x1d0] sm:$0xff]
    %v1429 = vld [vmem:[#allocation10 + $0x1d8] sm:$0xff]
    %v1430 = vld [vmem:[#allocation10 + $0x1e0] sm:$0xff]
    %v1431 = vld [vmem:[#allocation10 + $0x1e8] sm:$0xff]
    %v1432 = vld [vmem:[#allocation10 + $0x1f0] sm:$0xff]
    %v1433 = vld [vmem:[#allocation10 + $0x1f8] sm:$0xff]
    %v1442 = vrot.slane %v1234, 7
    %v1443 = vrot.slane %v1235, 7
    %v1444 = vrot.slane %v1236, 7
    %v1445 = vsel %vm1188, %v1442, %v1444
    %v1446 = vrot.slane %v1237, 7
    %v1447 = vsel %vm1188, %v1443, %v1446
    %v1448 = vrot.slane %v1238, 7
    %v1449 = vsel %vm1188, %v1444, %v1448
    %v1450 = vrot.slane %v1239, 7
    %v1451 = vsel %vm1188, %v1446, %v1450
    %v1452 = vrot.slane %v1240, 7
    %v1453 = vsel %vm1188, %v1448, %v1452
    %v1454 = vrot.slane %v1241, 7
    %v1455 = vsel %vm1188, %v1450, %v1454
    %v1464 = vsel %vm1188, 0.0, %v1442
    %v1465 = vsel %vm1188, 0.0, %v1443
    %v1466 = vmul.f32 %v1464, %v260
    %v1467 = vmul.f32 %v1465, %v260
    %v1468 = vmul.f32 %v1445, %v261
    %v1469 = vmul.f32 %v1447, %v261
    %v1470 = vmul.f32 %v1449, %v262
    %v1471 = vmul.f32 %v1451, %v262
    %v1472 = vmul.f32 %v1453, %v263
    %v1473 = vmul.f32 %v1455, %v263
    %v1482 = vrot.slane %v1218, 1
    %v1483 = vrot.slane %v1220, 1
    %v1484 = vsel %vm318, %v1482, %v1483
    %v1485 = vrot.slane %v1219, 1
    %v1486 = vrot.slane %v1221, 1
    %v1487 = vsel %vm318, %v1485, %v1486
    %v1488 = vrot.slane %v1222, 1
    %v1489 = vsel %vm318, %v1483, %v1488
    %v1490 = vrot.slane %v1223, 1
    %v1491 = vsel %vm318, %v1486, %v1490
    %v1492 = vrot.slane %v1224, 1
    %v1493 = vsel %vm318, %v1488, %v1492
    %v1494 = vrot.slane %v1225, 1
    %v1495 = vsel %vm318, %v1490, %v1494
    %v1504 = vsel %vm318, %v1492, 0.0
    %v1505 = vsel %vm318, %v1494, 0.0
    %v1506 = vmul.f32 %v1484, %v272
    %v1507 = vmul.f32 %v1487, %v272
    %v1508 = vmul.f32 %v1489, %v273
    %v1509 = vmul.f32 %v1491, %v273
    %v1510 = vmul.f32 %v1493, %v274
    %v1511 = vmul.f32 %v1495, %v274
    %v1512 = vmul.f32 %v1504, %v275
    %v1513 = vmul.f32 %v1505, %v275
    %1514 = vmatpush.msra.mxu0 %v1336
    %1515 = vmatpush.msra.mxu0 %v1334
    %1516 = vmatpush.msra.mxu0 %v1332
    %1517 = vmatpush.msra.mxu0 %v1330
    %1518 = vmatpush.msra.mxu0 %v1328
    %1519 = vmatpush.msra.mxu0 %v1326
    %1520 = vmatpush.msra.mxu0 %v1324
    %1521 = vmatpush.msra.mxu0 %v1322
    %1522 = vmatpush.msra.mxu0 %v1320
    %1523 = vmatpush.msra.mxu0 %v1318
    %1524 = vmatpush.msra.mxu0 %v1316
    %1525 = vmatpush.msra.mxu0 %v1314
    %1526 = vmatpush.msra.mxu0 %v1312
    %1527 = vmatpush.msra.mxu0 %v1310
    %1528 = vmatpush.msra.mxu0 %v1308
    %1529 = vmatpush.msra.mxu0 %v1306
    %1530 = vmatmul.f32.gmra.mxu0 %v1218
    %v1531 = vpop.f32.mrf.mxu0
    %v1532 = vadd.f32 0.0, %v1531
    %1533 = vmatmul.f32.gmra.mxu0 %v1220
    %v1534 = vpop.f32.mrf.mxu0
    %v1535 = vadd.f32 0.0, %v1534
    %1536 = vmatmul.f32.gmra.mxu0 %v1222
    %v1537 = vpop.f32.mrf.mxu0
    %v1538 = vadd.f32 0.0, %v1537
    %1539 = vmatmul.f32.gmra.mxu0 %v1224
    %v1540 = vpop.f32.mrf.mxu0
    %v1541 = vadd.f32 0.0, %v1540
    %1542 = vdwg.mxu0
    %1543 = vmatpush.msra.mxu0 %v1368
    %1544 = vmatpush.msra.mxu0 %v1366
    %1545 = vmatpush.msra.mxu0 %v1364
    %1546 = vmatpush.msra.mxu0 %v1362
    %1547 = vmatpush.msra.mxu0 %v1360
    %1548 = vmatpush.msra.mxu0 %v1358
    %1549 = vmatpush.msra.mxu0 %v1356
    %1550 = vmatpush.msra.mxu0 %v1354
    %1551 = vmatpush.msra.mxu0 %v1352
    %1552 = vmatpush.msra.mxu0 %v1350
    %1553 = vmatpush.msra.mxu0 %v1348
    %1554 = vmatpush.msra.mxu0 %v1346
    %1555 = vmatpush.msra.mxu0 %v1344
    %1556 = vmatpush.msra.mxu0 %v1342
    %1557 = vmatpush.msra.mxu0 %v1340
    %1558 = vmatpush.msra.mxu0 %v1338
    %1559 = vmatmul.f32.gmra.mxu0 %v1219
    %v1560 = vpop.f32.mrf.mxu0
    %v1561 = vadd.f32 %v1532, %v1560
    %1562 = vmatmul.f32.gmra.mxu0 %v1221
    %v1563 = vpop.f32.mrf.mxu0
    %v1564 = vadd.f32 %v1535, %v1563
    %1565 = vmatmul.f32.gmra.mxu0 %v1223
    %v1566 = vpop.f32.mrf.mxu0
    %v1567 = vadd.f32 %v1538, %v1566
    %1568 = vmatmul.f32.gmra.mxu0 %v1225
    %v1569 = vpop.f32.mrf.mxu0
    %v1570 = vadd.f32 %v1541, %v1569
    %1571 = vdwg.mxu0
    %1572 = vmatpush.msra.mxu0 %v1337
    %1573 = vmatpush.msra.mxu0 %v1335
    %1574 = vmatpush.msra.mxu0 %v1333
    %1575 = vmatpush.msra.mxu0 %v1331
    %1576 = vmatpush.msra.mxu0 %v1329
    %1577 = vmatpush.msra.mxu0 %v1327
    %1578 = vmatpush.msra.mxu0 %v1325
    %1579 = vmatpush.msra.mxu0 %v1323
    %1580 = vmatpush.msra.mxu0 %v1321
    %1581 = vmatpush.msra.mxu0 %v1319
    %1582 = vmatpush.msra.mxu0 %v1317
    %1583 = vmatpush.msra.mxu0 %v1315
    %1584 = vmatpush.msra.mxu0 %v1313
    %1585 = vmatpush.msra.mxu0 %v1311
    %1586 = vmatpush.msra.mxu0 %v1309
    %1587 = vmatpush.msra.mxu0 %v1307
    %1588 = vmatmul.f32.gmra.mxu0 %v1218
    %v1589 = vpop.f32.mrf.mxu0
    %v1590 = vadd.f32 0.0, %v1589
    %1591 = vmatmul.f32.gmra.mxu0 %v1220
    %v1592 = vpop.f32.mrf.mxu0
    %v1593 = vadd.f32 0.0, %v1592
    %1594 = vmatmul.f32.gmra.mxu0 %v1222
    %v1595 = vpop.f32.mrf.mxu0
    %v1596 = vadd.f32 0.0, %v1595
    %1597 = vmatmul.f32.gmra.mxu0 %v1224
    %v1598 = vpop.f32.mrf.mxu0
    %v1599 = vadd.f32 0.0, %v1598
    %1600 = vdwg.mxu0
    %1601 = vmatpush.msra.mxu0 %v1369
    %1602 = vmatpush.msra.mxu0 %v1367
    %1603 = vmatpush.msra.mxu0 %v1365
    %1604 = vmatpush.msra.mxu0 %v1363
    %1605 = vmatpush.msra.mxu0 %v1361
    %1606 = vmatpush.msra.mxu0 %v1359
    %1607 = vmatpush.msra.mxu0 %v1357
    %1608 = vmatpush.msra.mxu0 %v1355
    %1609 = vmatpush.msra.mxu0 %v1353
    %1610 = vmatpush.msra.mxu0 %v1351
    %1611 = vmatpush.msra.mxu0 %v1349
    %1612 = vmatpush.msra.mxu0 %v1347
    %1613 = vmatpush.msra.mxu0 %v1345
    %1614 = vmatpush.msra.mxu0 %v1343
    %1615 = vmatpush.msra.mxu0 %v1341
    %1616 = vmatpush.msra.mxu0 %v1339
    %1617 = vmatmul.f32.gmra.mxu0 %v1219
    %v1618 = vpop.f32.mrf.mxu0
    %v1619 = vadd.f32 %v1590, %v1618
    %1620 = vmatmul.f32.gmra.mxu0 %v1221
    %v1621 = vpop.f32.mrf.mxu0
    %v1622 = vadd.f32 %v1593, %v1621
    %1623 = vmatmul.f32.gmra.mxu0 %v1223
    %v1624 = vpop.f32.mrf.mxu0
    %v1625 = vadd.f32 %v1596, %v1624
    %1626 = vmatmul.f32.gmra.mxu0 %v1225
    %v1627 = vpop.f32.mrf.mxu0
    %v1628 = vadd.f32 %v1599, %v1627
    %1629 = vdwg.mxu0
    %1630 = vmatpush.msra.mxu0 %v1272
    %1631 = vmatpush.msra.mxu0 %v1270
    %1632 = vmatpush.msra.mxu0 %v1268
    %1633 = vmatpush.msra.mxu0 %v1266
    %1634 = vmatpush.msra.mxu0 %v1264
    %1635 = vmatpush.msra.mxu0 %v1262
    %1636 = vmatpush.msra.mxu0 %v1260
    %1637 = vmatpush.msra.mxu0 %v1258
    %1638 = vmatpush.msra.mxu0 %v1256
    %1639 = vmatpush.msra.mxu0 %v1254
    %1640 = vmatpush.msra.mxu0 %v1252
    %1641 = vmatpush.msra.mxu0 %v1250
    %1642 = vmatpush.msra.mxu0 %v1248
    %1643 = vmatpush.msra.mxu0 %v1246
    %1644 = vmatpush.msra.mxu0 %v1244
    %1645 = vmatpush.msra.mxu0 %v1242
    %1646 = vmatmul.f32.gmra.mxu0 %v1466
    %v1647 = vpop.f32.mrf.mxu0
    %v1648 = vadd.f32 %v1561, %v1647
    %1649 = vmatmul.f32.gmra.mxu0 %v1468
    %v1650 = vpop.f32.mrf.mxu0
    %v1651 = vadd.f32 %v1564, %v1650
    %1652 = vmatmul.f32.gmra.mxu0 %v1470
    %v1653 = vpop.f32.mrf.mxu0
    %v1654 = vadd.f32 %v1567, %v1653
    %1655 = vmatmul.f32.gmra.mxu0 %v1472
    %v1656 = vpop.f32.mrf.mxu0
    %v1657 = vadd.f32 %v1570, %v1656
    %1658 = vdwg.mxu0
    %1659 = vmatpush.msra.mxu0 %v1304
    %1660 = vmatpush.msra.mxu0 %v1302
    %1661 = vmatpush.msra.mxu0 %v1300
    %1662 = vmatpush.msra.mxu0 %v1298
    %1663 = vmatpush.msra.mxu0 %v1296
    %1664 = vmatpush.msra.mxu0 %v1294
    %1665 = vmatpush.msra.mxu0 %v1292
    %1666 = vmatpush.msra.mxu0 %v1290
    %1667 = vmatpush.msra.mxu0 %v1288
    %1668 = vmatpush.msra.mxu0 %v1286
    %1669 = vmatpush.msra.mxu0 %v1284
    %1670 = vmatpush.msra.mxu0 %v1282
    %1671 = vmatpush.msra.mxu0 %v1280
    %1672 = vmatpush.msra.mxu0 %v1278
    %1673 = vmatpush.msra.mxu0 %v1276
    %1674 = vmatpush.msra.mxu0 %v1274
    %1675 = vmatmul.f32.gmra.mxu0 %v1467
    %v1676 = vpop.f32.mrf.mxu0
    %v1677 = vadd.f32 %v1648, %v1676
    %1678 = vmatmul.f32.gmra.mxu0 %v1469
    %v1679 = vpop.f32.mrf.mxu0
    %v1680 = vadd.f32 %v1651, %v1679
    %1681 = vmatmul.f32.gmra.mxu0 %v1471
    %v1682 = vpop.f32.mrf.mxu0
    %v1683 = vadd.f32 %v1654, %v1682
    %1684 = vmatmul.f32.gmra.mxu0 %v1473
    %v1685 = vpop.f32.mrf.mxu0
    %v1686 = vadd.f32 %v1657, %v1685
    %1687 = vdwg.mxu0
    %1688 = vmatpush.msra.mxu0 %v1273
    %1689 = vmatpush.msra.mxu0 %v1271
    %1690 = vmatpush.msra.mxu0 %v1269
    %1691 = vmatpush.msra.mxu0 %v1267
    %1692 = vmatpush.msra.mxu0 %v1265
    %1693 = vmatpush.msra.mxu0 %v1263
    %1694 = vmatpush.msra.mxu0 %v1261
    %1695 = vmatpush.msra.mxu0 %v1259
    %1696 = vmatpush.msra.mxu0 %v1257
    %1697 = vmatpush.msra.mxu0 %v1255
    %1698 = vmatpush.msra.mxu0 %v1253
    %1699 = vmatpush.msra.mxu0 %v1251
    %1700 = vmatpush.msra.mxu0 %v1249
    %1701 = vmatpush.msra.mxu0 %v1247
    %1702 = vmatpush.msra.mxu0 %v1245
    %1703 = vmatpush.msra.mxu0 %v1243
    %1704 = vmatmul.f32.gmra.mxu0 %v1466
    %v1705 = vpop.f32.mrf.mxu0
    %v1706 = vadd.f32 %v1619, %v1705
    %1707 = vmatmul.f32.gmra.mxu0 %v1468
    %v1708 = vpop.f32.mrf.mxu0
    %v1709 = vadd.f32 %v1622, %v1708
    %1710 = vmatmul.f32.gmra.mxu0 %v1470
    %v1711 = vpop.f32.mrf.mxu0
    %v1712 = vadd.f32 %v1625, %v1711
    %1713 = vmatmul.f32.gmra.mxu0 %v1472
    %v1714 = vpop.f32.mrf.mxu0
    %v1715 = vadd.f32 %v1628, %v1714
    %1716 = vdwg.mxu0
    %1717 = vmatpush.msra.mxu0 %v1305
    %1718 = vmatpush.msra.mxu0 %v1303
    %1719 = vmatpush.msra.mxu0 %v1301
    %1720 = vmatpush.msra.mxu0 %v1299
    %1721 = vmatpush.msra.mxu0 %v1297
    %1722 = vmatpush.msra.mxu0 %v1295
    %1723 = vmatpush.msra.mxu0 %v1293
    %1724 = vmatpush.msra.mxu0 %v1291
    %1725 = vmatpush.msra.mxu0 %v1289
    %1726 = vmatpush.msra.mxu0 %v1287
    %1727 = vmatpush.msra.mxu0 %v1285
    %1728 = vmatpush.msra.mxu0 %v1283
    %1729 = vmatpush.msra.mxu0 %v1281
    %1730 = vmatpush.msra.mxu0 %v1279
    %1731 = vmatpush.msra.mxu0 %v1277
    %1732 = vmatpush.msra.mxu0 %v1275
    %1733 = vmatmul.f32.gmra.mxu0 %v1467
    %v1734 = vpop.f32.mrf.mxu0
    %v1735 = vadd.f32 %v1706, %v1734
    %1736 = vmatmul.f32.gmra.mxu0 %v1469
    %v1737 = vpop.f32.mrf.mxu0
    %v1738 = vadd.f32 %v1709, %v1737
    %1739 = vmatmul.f32.gmra.mxu0 %v1471
    %v1740 = vpop.f32.mrf.mxu0
    %v1741 = vadd.f32 %v1712, %v1740
    %1742 = vmatmul.f32.gmra.mxu0 %v1473
    %v1743 = vpop.f32.mrf.mxu0
    %v1744 = vadd.f32 %v1715, %v1743
    %1745 = vdwg.mxu0
    %1746 = vmatpush.msra.mxu0 %v1400
    %1747 = vmatpush.msra.mxu0 %v1398
    %1748 = vmatpush.msra.mxu0 %v1396
    %1749 = vmatpush.msra.mxu0 %v1394
    %1750 = vmatpush.msra.mxu0 %v1392
    %1751 = vmatpush.msra.mxu0 %v1390
    %1752 = vmatpush.msra.mxu0 %v1388
    %1753 = vmatpush.msra.mxu0 %v1386
    %1754 = vmatpush.msra.mxu0 %v1384
    %1755 = vmatpush.msra.mxu0 %v1382
    %1756 = vmatpush.msra.mxu0 %v1380
    %1757 = vmatpush.msra.mxu0 %v1378
    %1758 = vmatpush.msra.mxu0 %v1376
    %1759 = vmatpush.msra.mxu0 %v1374
    %1760 = vmatpush.msra.mxu0 %v1372
    %1761 = vmatpush.msra.mxu0 %v1370
    %1762 = vmatmul.f32.gmra.mxu0 %v1234
    %v1763 = vpop.f32.mrf.mxu0
    %v1764 = vadd.f32 0.0, %v1763
    %1765 = vmatmul.f32.gmra.mxu0 %v1236
    %v1766 = vpop.f32.mrf.mxu0
    %v1767 = vadd.f32 0.0, %v1766
    %1768 = vmatmul.f32.gmra.mxu0 %v1238
    %v1769 = vpop.f32.mrf.mxu0
    %v1770 = vadd.f32 0.0, %v1769
    %1771 = vmatmul.f32.gmra.mxu0 %v1240
    %v1772 = vpop.f32.mrf.mxu0
    %v1773 = vadd.f32 0.0, %v1772
    %1774 = vdwg.mxu0
    %1775 = vmatpush.msra.mxu0 %v1432
    %1776 = vmatpush.msra.mxu0 %v1430
    %1777 = vmatpush.msra.mxu0 %v1428
    %1778 = vmatpush.msra.mxu0 %v1426
    %1779 = vmatpush.msra.mxu0 %v1424
    %1780 = vmatpush.msra.mxu0 %v1422
    %1781 = vmatpush.msra.mxu0 %v1420
    %1782 = vmatpush.msra.mxu0 %v1418
    %1783 = vmatpush.msra.mxu0 %v1416
    %1784 = vmatpush.msra.mxu0 %v1414
    %1785 = vmatpush.msra.mxu0 %v1412
    %1786 = vmatpush.msra.mxu0 %v1410
    %1787 = vmatpush.msra.mxu0 %v1408
    %1788 = vmatpush.msra.mxu0 %v1406
    %1789 = vmatpush.msra.mxu0 %v1404
    %1790 = vmatpush.msra.mxu0 %v1402
    %1791 = vmatmul.f32.gmra.mxu0 %v1235
    %v1792 = vpop.f32.mrf.mxu0
    %v1793 = vadd.f32 %v1764, %v1792
    %1794 = vmatmul.f32.gmra.mxu0 %v1237
    %v1795 = vpop.f32.mrf.mxu0
    %v1796 = vadd.f32 %v1767, %v1795
    %1797 = vmatmul.f32.gmra.mxu0 %v1239
    %v1798 = vpop.f32.mrf.mxu0
    %v1799 = vadd.f32 %v1770, %v1798
    %1800 = vmatmul.f32.gmra.mxu0 %v1241
    %v1801 = vpop.f32.mrf.mxu0
    %v1802 = vadd.f32 %v1773, %v1801
    %1803 = vdwg.mxu0
    %1804 = vmatpush.msra.mxu0 %v1401
    %1805 = vmatpush.msra.mxu0 %v1399
    %1806 = vmatpush.msra.mxu0 %v1397
    %1807 = vmatpush.msra.mxu0 %v1395
    %1808 = vmatpush.msra.mxu0 %v1393
    %1809 = vmatpush.msra.mxu0 %v1391
    %1810 = vmatpush.msra.mxu0 %v1389
    %1811 = vmatpush.msra.mxu0 %v1387
    %1812 = vmatpush.msra.mxu0 %v1385
    %1813 = vmatpush.msra.mxu0 %v1383
    %1814 = vmatpush.msra.mxu0 %v1381
    %1815 = vmatpush.msra.mxu0 %v1379
    %1816 = vmatpush.msra.mxu0 %v1377
    %1817 = vmatpush.msra.mxu0 %v1375
    %1818 = vmatpush.msra.mxu0 %v1373
    %1819 = vmatpush.msra.mxu0 %v1371
    %1820 = vmatmul.f32.gmra.mxu0 %v1234
    %v1821 = vpop.f32.mrf.mxu0
    %v1822 = vadd.f32 0.0, %v1821
    %1823 = vmatmul.f32.gmra.mxu0 %v1236
    %v1824 = vpop.f32.mrf.mxu0
    %v1825 = vadd.f32 0.0, %v1824
    %1826 = vmatmul.f32.gmra.mxu0 %v1238
    %v1827 = vpop.f32.mrf.mxu0
    %v1828 = vadd.f32 0.0, %v1827
    %1829 = vmatmul.f32.gmra.mxu0 %v1240
    %v1830 = vpop.f32.mrf.mxu0
    %v1831 = vadd.f32 0.0, %v1830
    %1832 = vdwg.mxu0
    %1833 = vmatpush.msra.mxu0 %v1433
    %1834 = vmatpush.msra.mxu0 %v1431
    %1835 = vmatpush.msra.mxu0 %v1429
    %1836 = vmatpush.msra.mxu0 %v1427
    %1837 = vmatpush.msra.mxu0 %v1425
    %1838 = vmatpush.msra.mxu0 %v1423
    %1839 = vmatpush.msra.mxu0 %v1421
    %1840 = vmatpush.msra.mxu0 %v1419
    %1841 = vmatpush.msra.mxu0 %v1417
    %1842 = vmatpush.msra.mxu0 %v1415
    %1843 = vmatpush.msra.mxu0 %v1413
    %1844 = vmatpush.msra.mxu0 %v1411
    %1845 = vmatpush.msra.mxu0 %v1409
    %1846 = vmatpush.msra.mxu0 %v1407
    %1847 = vmatpush.msra.mxu0 %v1405
    %1848 = vmatpush.msra.mxu0 %v1403
    %1849 = vmatmul.f32.gmra.mxu0 %v1235
    %v1850 = vpop.f32.mrf.mxu0
    %v1851 = vadd.f32 %v1822, %v1850
    %1852 = vmatmul.f32.gmra.mxu0 %v1237
    %v1853 = vpop.f32.mrf.mxu0
    %v1854 = vadd.f32 %v1825, %v1853
    %1855 = vmatmul.f32.gmra.mxu0 %v1239
    %v1856 = vpop.f32.mrf.mxu0
    %v1857 = vadd.f32 %v1828, %v1856
    %1858 = vmatmul.f32.gmra.mxu0 %v1241
    %v1859 = vpop.f32.mrf.mxu0
    %v1860 = vadd.f32 %v1831, %v1859
    %1861 = vdwg.mxu0
    %v1862 = vadd.f32 %v1677, %v1793
    %v1863 = vadd.f32 %v1735, %v1851
    %v1864 = vadd.f32 %v1680, %v1796
    %v1865 = vadd.f32 %v1738, %v1854
    %v1866 = vadd.f32 %v1683, %v1799
    %v1867 = vadd.f32 %v1741, %v1857
    %v1868 = vadd.f32 %v1686, %v1802
    %v1869 = vadd.f32 %v1744, %v1860
    %v1871 = vperm.slane %v192, 0
    %v1872 = vperm.slane %v192, 1
    %v1875 = vadd.f32 %v1862, %v1871
    %v1876 = vadd.f32 %v1863, %v1872
    %v1877 = vadd.f32 %v1864, %v1871
    %v1878 = vadd.f32 %v1865, %v1872
    %v1879 = vadd.f32 %v1866, %v1871
    %v1880 = vadd.f32 %v1867, %v1872
    %v1881 = vadd.f32 %v1868, %v1871
    %v1882 = vadd.f32 %v1869, %v1872
    %v1883 = vsub.f32 0.0, %v1875
    %v1884 = vsub.f32 0.0, %v1876
    %v1885 = vsub.f32 0.0, %v1877
    %v1886 = vsub.f32 0.0, %v1878
    %v1887 = vsub.f32 0.0, %v1879
    %v1888 = vsub.f32 0.0, %v1880
    %v1889 = vsub.f32 0.0, %v1881
    %v1890 = vsub.f32 0.0, %v1882
    %v1891 = vmul.f32 %v1883, 1.442695
    %v1892 = vpow.pop %v1891
    %v1893 = vmul.f32 %v1884, 1.442695
    %v1894 = vpow.pop %v1893
    %v1895 = vmul.f32 %v1885, 1.442695
    %v1896 = vpow.pop %v1895
    %v1897 = vmul.f32 %v1886, 1.442695
    %v1898 = vpow.pop %v1897
    %v1899 = vmul.f32 %v1887, 1.442695
    %v1900 = vpow.pop %v1899
    %v1901 = vmul.f32 %v1888, 1.442695
    %v1902 = vpow.pop %v1901
    %v1903 = vmul.f32 %v1889, 1.442695
    %v1904 = vpow.pop %v1903
    %v1905 = vmul.f32 %v1890, 1.442695
    %v1906 = vpow.pop %v1905
    %v1907 = vadd.f32 %v1892, 1.0
    %v1908 = vadd.f32 %v1894, 1.0
    %v1909 = vadd.f32 %v1896, 1.0
    %v1910 = vadd.f32 %v1898, 1.0
    %v1911 = vadd.f32 %v1900, 1.0
    %v1912 = vadd.f32 %v1902, 1.0
    %v1913 = vadd.f32 %v1904, 1.0
    %v1914 = vadd.f32 %v1906, 1.0
    %v1915 = vrcp.pop %v1907
    %v1916 = vmul.f32 %v1907, %v1915
    %v1917 = vsub.f32 1.0, %v1916
    %v1918 = vmul.f32 %v1915, %v1917
    %v1919 = vadd.f32 %v1915, %v1918
    %vm1920 = vweird.f32 %v1907
    %vm1921 = vweird.f32 %v1915
    %vm1922 = vmor %vm1920, %vm1921
    %v1923 = vsel %vm1922, %v1915, %v1919
    %v1924 = vand.u32 2147483647, %v1907
    %vm1925 = vcmp.eq.f32.partialorder %v1924, 8.507059e+37
    %v1926 = vand.u32 %v1907, 2147483648
    %v1927 = vor.u32 1.1754944e-38, %v1926
    %v1928 = vsel %vm1925, %v1927, %v1923
    %v1929 = vmul.f32 1.0, %v1928
    %v1930 = vrcp.pop %v1908
    %v1931 = vmul.f32 %v1908, %v1930
    %v1932 = vsub.f32 1.0, %v1931
    %v1933 = vmul.f32 %v1930, %v1932
    %v1934 = vadd.f32 %v1930, %v1933
    %vm1935 = vweird.f32 %v1908
    %vm1936 = vweird.f32 %v1930
    %vm1937 = vmor %vm1935, %vm1936
    %v1938 = vsel %vm1937, %v1930, %v1934
    %v1939 = vand.u32 2147483647, %v1908
    %vm1940 = vcmp.eq.f32.partialorder %v1939, 8.507059e+37
    %v1941 = vand.u32 %v1908, 2147483648
    %v1942 = vor.u32 1.1754944e-38, %v1941
    %v1943 = vsel %vm1940, %v1942, %v1938
    %v1944 = vmul.f32 1.0, %v1943
    %v1945 = vrcp.pop %v1909
    %v1946 = vmul.f32 %v1909, %v1945
    %v1947 = vsub.f32 1.0, %v1946
    %v1948 = vmul.f32 %v1945, %v1947
    %v1949 = vadd.f32 %v1945, %v1948
    %vm1950 = vweird.f32 %v1909
    %vm1951 = vweird.f32 %v1945
    %vm1952 = vmor %vm1950, %vm1951
    %v1953 = vsel %vm1952, %v1945, %v1949
    %v1954 = vand.u32 2147483647, %v1909
    %vm1955 = vcmp.eq.f32.partialorder %v1954, 8.507059e+37
    %v1956 = vand.u32 %v1909, 2147483648
    %v1957 = vor.u32 1.1754944e-38, %v1956
    %v1958 = vsel %vm1955, %v1957, %v1953
    %v1959 = vmul.f32 1.0, %v1958
    %v1960 = vrcp.pop %v1910
    %v1961 = vmul.f32 %v1910, %v1960
    %v1962 = vsub.f32 1.0, %v1961
    %v1963 = vmul.f32 %v1960, %v1962
    %v1964 = vadd.f32 %v1960, %v1963
    %vm1965 = vweird.f32 %v1910
    %vm1966 = vweird.f32 %v1960
    %vm1967 = vmor %vm1965, %vm1966
    %v1968 = vsel %vm1967, %v1960, %v1964
    %v1969 = vand.u32 2147483647, %v1910
    %vm1970 = vcmp.eq.f32.partialorder %v1969, 8.507059e+37
    %v1971 = vand.u32 %v1910, 2147483648
    %v1972 = vor.u32 1.1754944e-38, %v1971
    %v1973 = vsel %vm1970, %v1972, %v1968
    %v1974 = vmul.f32 1.0, %v1973
    %v1975 = vrcp.pop %v1911
    %v1976 = vmul.f32 %v1911, %v1975
    %v1977 = vsub.f32 1.0, %v1976
    %v1978 = vmul.f32 %v1975, %v1977
    %v1979 = vadd.f32 %v1975, %v1978
    %vm1980 = vweird.f32 %v1911
    %vm1981 = vweird.f32 %v1975
    %vm1982 = vmor %vm1980, %vm1981
    %v1983 = vsel %vm1982, %v1975, %v1979
    %v1984 = vand.u32 2147483647, %v1911
    %vm1985 = vcmp.eq.f32.partialorder %v1984, 8.507059e+37
    %v1986 = vand.u32 %v1911, 2147483648
    %v1987 = vor.u32 1.1754944e-38, %v1986
    %v1988 = vsel %vm1985, %v1987, %v1983
    %v1989 = vmul.f32 1.0, %v1988
    %v1990 = vrcp.pop %v1912
    %v1991 = vmul.f32 %v1912, %v1990
    %v1992 = vsub.f32 1.0, %v1991
    %v1993 = vmul.f32 %v1990, %v1992
    %v1994 = vadd.f32 %v1990, %v1993
    %vm1995 = vweird.f32 %v1912
    %vm1996 = vweird.f32 %v1990
    %vm1997 = vmor %vm1995, %vm1996
    %v1998 = vsel %vm1997, %v1990, %v1994
    %v1999 = vand.u32 2147483647, %v1912
    %vm2000 = vcmp.eq.f32.partialorder %v1999, 8.507059e+37
    %v2001 = vand.u32 %v1912, 2147483648
    %v2002 = vor.u32 1.1754944e-38, %v2001
    %v2003 = vsel %vm2000, %v2002, %v1998
    %v2004 = vmul.f32 1.0, %v2003
    %v2005 = vrcp.pop %v1913
    %v2006 = vmul.f32 %v1913, %v2005
    %v2007 = vsub.f32 1.0, %v2006
    %v2008 = vmul.f32 %v2005, %v2007
    %v2009 = vadd.f32 %v2005, %v2008
    %vm2010 = vweird.f32 %v1913
    %vm2011 = vweird.f32 %v2005
    %vm2012 = vmor %vm2010, %vm2011
    %v2013 = vsel %vm2012, %v2005, %v2009
    %v2014 = vand.u32 2147483647, %v1913
    %vm2015 = vcmp.eq.f32.partialorder %v2014, 8.507059e+37
    %v2016 = vand.u32 %v1913, 2147483648
    %v2017 = vor.u32 1.1754944e-38, %v2016
    %v2018 = vsel %vm2015, %v2017, %v2013
    %v2019 = vmul.f32 1.0, %v2018
    %v2020 = vrcp.pop %v1914
    %v2021 = vmul.f32 %v1914, %v2020
    %v2022 = vsub.f32 1.0, %v2021
    %v2023 = vmul.f32 %v2020, %v2022
    %v2024 = vadd.f32 %v2020, %v2023
    %vm2025 = vweird.f32 %v1914
    %vm2026 = vweird.f32 %v2020
    %vm2027 = vmor %vm2025, %vm2026
    %v2028 = vsel %vm2027, %v2020, %v2024
    %v2029 = vand.u32 2147483647, %v1914
    %vm2030 = vcmp.eq.f32.partialorder %v2029, 8.507059e+37
    %v2031 = vand.u32 %v1914, 2147483648
    %v2032 = vor.u32 1.1754944e-38, %v2031
    %v2033 = vsel %vm2030, %v2032, %v2028
    %v2034 = vmul.f32 1.0, %v2033
    %v2035 = vmul.f32 %v1875, %v1929
    %v2036 = vmul.f32 %v1876, %v1944
    %v2037 = vmul.f32 %v1877, %v1959
    %v2038 = vmul.f32 %v1878, %v1974
    %v2039 = vmul.f32 %v1879, %v1989
    %v2040 = vmul.f32 %v1880, %v2004
    %v2041 = vmul.f32 %v1881, %v2019
    %v2042 = vmul.f32 %v1882, %v2034
    %2043 = vmatpush.msra.mxu0 %v1336
    %2044 = vmatpush.msra.mxu0 %v1334
    %2045 = vmatpush.msra.mxu0 %v1332
    %2046 = vmatpush.msra.mxu0 %v1330
    %2047 = vmatpush.msra.mxu0 %v1328
    %2048 = vmatpush.msra.mxu0 %v1326
    %2049 = vmatpush.msra.mxu0 %v1324
    %2050 = vmatpush.msra.mxu0 %v1322
    %2051 = vmatpush.msra.mxu0 %v1320
    %2052 = vmatpush.msra.mxu0 %v1318
    %2053 = vmatpush.msra.mxu0 %v1316
    %2054 = vmatpush.msra.mxu0 %v1314
    %2055 = vmatpush.msra.mxu0 %v1312
    %2056 = vmatpush.msra.mxu0 %v1310
    %2057 = vmatpush.msra.mxu0 %v1308
    %2058 = vmatpush.msra.mxu0 %v1306
    %2059 = vmatmul.f32.gmra.mxu0 %v1234
    %v2060 = vpop.f32.mrf.mxu0
    %v2061 = vadd.f32 0.0, %v2060
    %2062 = vmatmul.f32.gmra.mxu0 %v1236
    %v2063 = vpop.f32.mrf.mxu0
    %v2064 = vadd.f32 0.0, %v2063
    %2065 = vmatmul.f32.gmra.mxu0 %v1238
    %v2066 = vpop.f32.mrf.mxu0
    %v2067 = vadd.f32 0.0, %v2066
    %2068 = vmatmul.f32.gmra.mxu0 %v1240
    %v2069 = vpop.f32.mrf.mxu0
    %v2070 = vadd.f32 0.0, %v2069
    %2071 = vdwg.mxu0
    %2072 = vmatpush.msra.mxu0 %v1368
    %2073 = vmatpush.msra.mxu0 %v1366
    %2074 = vmatpush.msra.mxu0 %v1364
    %2075 = vmatpush.msra.mxu0 %v1362
    %2076 = vmatpush.msra.mxu0 %v1360
    %2077 = vmatpush.msra.mxu0 %v1358
    %2078 = vmatpush.msra.mxu0 %v1356
    %2079 = vmatpush.msra.mxu0 %v1354
    %2080 = vmatpush.msra.mxu0 %v1352
    %2081 = vmatpush.msra.mxu0 %v1350
    %2082 = vmatpush.msra.mxu0 %v1348
    %2083 = vmatpush.msra.mxu0 %v1346
    %2084 = vmatpush.msra.mxu0 %v1344
    %2085 = vmatpush.msra.mxu0 %v1342
    %2086 = vmatpush.msra.mxu0 %v1340
    %2087 = vmatpush.msra.mxu0 %v1338
    %2088 = vmatmul.f32.gmra.mxu0 %v1235
    %v2089 = vpop.f32.mrf.mxu0
    %v2090 = vadd.f32 %v2061, %v2089
    %2091 = vmatmul.f32.gmra.mxu0 %v1237
    %v2092 = vpop.f32.mrf.mxu0
    %v2093 = vadd.f32 %v2064, %v2092
    %2094 = vmatmul.f32.gmra.mxu0 %v1239
    %v2095 = vpop.f32.mrf.mxu0
    %v2096 = vadd.f32 %v2067, %v2095
    %2097 = vmatmul.f32.gmra.mxu0 %v1241
    %v2098 = vpop.f32.mrf.mxu0
    %v2099 = vadd.f32 %v2070, %v2098
    %2100 = vdwg.mxu0
    %2101 = vmatpush.msra.mxu0 %v1337
    %2102 = vmatpush.msra.mxu0 %v1335
    %2103 = vmatpush.msra.mxu0 %v1333
    %2104 = vmatpush.msra.mxu0 %v1331
    %2105 = vmatpush.msra.mxu0 %v1329
    %2106 = vmatpush.msra.mxu0 %v1327
    %2107 = vmatpush.msra.mxu0 %v1325
    %2108 = vmatpush.msra.mxu0 %v1323
    %2109 = vmatpush.msra.mxu0 %v1321
    %2110 = vmatpush.msra.mxu0 %v1319
    %2111 = vmatpush.msra.mxu0 %v1317
    %2112 = vmatpush.msra.mxu0 %v1315
    %2113 = vmatpush.msra.mxu0 %v1313
    %2114 = vmatpush.msra.mxu0 %v1311
    %2115 = vmatpush.msra.mxu0 %v1309
    %2116 = vmatpush.msra.mxu0 %v1307
    %2117 = vmatmul.f32.gmra.mxu0 %v1234
    %v2118 = vpop.f32.mrf.mxu0
    %v2119 = vadd.f32 0.0, %v2118
    %2120 = vmatmul.f32.gmra.mxu0 %v1236
    %v2121 = vpop.f32.mrf.mxu0
    %v2122 = vadd.f32 0.0, %v2121
    %2123 = vmatmul.f32.gmra.mxu0 %v1238
    %v2124 = vpop.f32.mrf.mxu0
    %v2125 = vadd.f32 0.0, %v2124
    %2126 = vmatmul.f32.gmra.mxu0 %v1240
    %v2127 = vpop.f32.mrf.mxu0
    %v2128 = vadd.f32 0.0, %v2127
    %2129 = vdwg.mxu0
    %2130 = vmatpush.msra.mxu0 %v1369
    %2131 = vmatpush.msra.mxu0 %v1367
    %2132 = vmatpush.msra.mxu0 %v1365
    %2133 = vmatpush.msra.mxu0 %v1363
    %2134 = vmatpush.msra.mxu0 %v1361
    %2135 = vmatpush.msra.mxu0 %v1359
    %2136 = vmatpush.msra.mxu0 %v1357
    %2137 = vmatpush.msra.mxu0 %v1355
    %2138 = vmatpush.msra.mxu0 %v1353
    %2139 = vmatpush.msra.mxu0 %v1351
    %2140 = vmatpush.msra.mxu0 %v1349
    %2141 = vmatpush.msra.mxu0 %v1347
    %2142 = vmatpush.msra.mxu0 %v1345
    %2143 = vmatpush.msra.mxu0 %v1343
    %2144 = vmatpush.msra.mxu0 %v1341
    %2145 = vmatpush.msra.mxu0 %v1339
    %2146 = vmatmul.f32.gmra.mxu0 %v1235
    %v2147 = vpop.f32.mrf.mxu0
    %v2148 = vadd.f32 %v2119, %v2147
    %2149 = vmatmul.f32.gmra.mxu0 %v1237
    %v2150 = vpop.f32.mrf.mxu0
    %v2151 = vadd.f32 %v2122, %v2150
    %2152 = vmatmul.f32.gmra.mxu0 %v1239
    %v2153 = vpop.f32.mrf.mxu0
    %v2154 = vadd.f32 %v2125, %v2153
    %2155 = vmatmul.f32.gmra.mxu0 %v1241
    %v2156 = vpop.f32.mrf.mxu0
    %v2157 = vadd.f32 %v2128, %v2156
    %2158 = vdwg.mxu0
    %2159 = vmatpush.msra.mxu0 %v1272
    %2160 = vmatpush.msra.mxu0 %v1270
    %2161 = vmatpush.msra.mxu0 %v1268
    %2162 = vmatpush.msra.mxu0 %v1266
    %2163 = vmatpush.msra.mxu0 %v1264
    %2164 = vmatpush.msra.mxu0 %v1262
    %2165 = vmatpush.msra.mxu0 %v1260
    %2166 = vmatpush.msra.mxu0 %v1258
    %2167 = vmatpush.msra.mxu0 %v1256
    %2168 = vmatpush.msra.mxu0 %v1254
    %2169 = vmatpush.msra.mxu0 %v1252
    %2170 = vmatpush.msra.mxu0 %v1250
    %2171 = vmatpush.msra.mxu0 %v1248
    %2172 = vmatpush.msra.mxu0 %v1246
    %2173 = vmatpush.msra.mxu0 %v1244
    %2174 = vmatpush.msra.mxu0 %v1242
    %2175 = vmatmul.f32.gmra.mxu0 %v1218
    %v2176 = vpop.f32.mrf.mxu0
    %v2177 = vadd.f32 %v2090, %v2176
    %2178 = vmatmul.f32.gmra.mxu0 %v1220
    %v2179 = vpop.f32.mrf.mxu0
    %v2180 = vadd.f32 %v2093, %v2179
    %2181 = vmatmul.f32.gmra.mxu0 %v1222
    %v2182 = vpop.f32.mrf.mxu0
    %v2183 = vadd.f32 %v2096, %v2182
    %2184 = vmatmul.f32.gmra.mxu0 %v1224
    %v2185 = vpop.f32.mrf.mxu0
    %v2186 = vadd.f32 %v2099, %v2185
    %2187 = vdwg.mxu0
    %2188 = vmatpush.msra.mxu0 %v1304
    %2189 = vmatpush.msra.mxu0 %v1302
    %2190 = vmatpush.msra.mxu0 %v1300
    %2191 = vmatpush.msra.mxu0 %v1298
    %2192 = vmatpush.msra.mxu0 %v1296
    %2193 = vmatpush.msra.mxu0 %v1294
    %2194 = vmatpush.msra.mxu0 %v1292
    %2195 = vmatpush.msra.mxu0 %v1290
    %2196 = vmatpush.msra.mxu0 %v1288
    %2197 = vmatpush.msra.mxu0 %v1286
    %2198 = vmatpush.msra.mxu0 %v1284
    %2199 = vmatpush.msra.mxu0 %v1282
    %2200 = vmatpush.msra.mxu0 %v1280
    %2201 = vmatpush.msra.mxu0 %v1278
    %2202 = vmatpush.msra.mxu0 %v1276
    %2203 = vmatpush.msra.mxu0 %v1274
    %2204 = vmatmul.f32.gmra.mxu0 %v1219
    %v2205 = vpop.f32.mrf.mxu0
    %v2206 = vadd.f32 %v2177, %v2205
    %2207 = vmatmul.f32.gmra.mxu0 %v1221
    %v2208 = vpop.f32.mrf.mxu0
    %v2209 = vadd.f32 %v2180, %v2208
    %2210 = vmatmul.f32.gmra.mxu0 %v1223
    %v2211 = vpop.f32.mrf.mxu0
    %v2212 = vadd.f32 %v2183, %v2211
    %2213 = vmatmul.f32.gmra.mxu0 %v1225
    %v2214 = vpop.f32.mrf.mxu0
    %v2215 = vadd.f32 %v2186, %v2214
    %2216 = vdwg.mxu0
    %2217 = vmatpush.msra.mxu0 %v1273
    %2218 = vmatpush.msra.mxu0 %v1271
    %2219 = vmatpush.msra.mxu0 %v1269
    %2220 = vmatpush.msra.mxu0 %v1267
    %2221 = vmatpush.msra.mxu0 %v1265
    %2222 = vmatpush.msra.mxu0 %v1263
    %2223 = vmatpush.msra.mxu0 %v1261
    %2224 = vmatpush.msra.mxu0 %v1259
    %2225 = vmatpush.msra.mxu0 %v1257
    %2226 = vmatpush.msra.mxu0 %v1255
    %2227 = vmatpush.msra.mxu0 %v1253
    %2228 = vmatpush.msra.mxu0 %v1251
    %2229 = vmatpush.msra.mxu0 %v1249
    %2230 = vmatpush.msra.mxu0 %v1247
    %2231 = vmatpush.msra.mxu0 %v1245
    %2232 = vmatpush.msra.mxu0 %v1243
    %2233 = vmatmul.f32.gmra.mxu0 %v1218
    %v2234 = vpop.f32.mrf.mxu0
    %v2235 = vadd.f32 %v2148, %v2234
    %2236 = vmatmul.f32.gmra.mxu0 %v1220
    %v2237 = vpop.f32.mrf.mxu0
    %v2238 = vadd.f32 %v2151, %v2237
    %2239 = vmatmul.f32.gmra.mxu0 %v1222
    %v2240 = vpop.f32.mrf.mxu0
    %v2241 = vadd.f32 %v2154, %v2240
    %2242 = vmatmul.f32.gmra.mxu0 %v1224
    %v2243 = vpop.f32.mrf.mxu0
    %v2244 = vadd.f32 %v2157, %v2243
    %2245 = vdwg.mxu0
    %2246 = vmatpush.msra.mxu0 %v1305
    %2247 = vmatpush.msra.mxu0 %v1303
    %2248 = vmatpush.msra.mxu0 %v1301
    %2249 = vmatpush.msra.mxu0 %v1299
    %2250 = vmatpush.msra.mxu0 %v1297
    %2251 = vmatpush.msra.mxu0 %v1295
    %2252 = vmatpush.msra.mxu0 %v1293
    %2253 = vmatpush.msra.mxu0 %v1291
    %2254 = vmatpush.msra.mxu0 %v1289
    %2255 = vmatpush.msra.mxu0 %v1287
    %2256 = vmatpush.msra.mxu0 %v1285
    %2257 = vmatpush.msra.mxu0 %v1283
    %2258 = vmatpush.msra.mxu0 %v1281
    %2259 = vmatpush.msra.mxu0 %v1279
    %2260 = vmatpush.msra.mxu0 %v1277
    %2261 = vmatpush.msra.mxu0 %v1275
    %2262 = vmatmul.f32.gmra.mxu0 %v1219
    %v2263 = vpop.f32.mrf.mxu0
    %v2264 = vadd.f32 %v2235, %v2263
    %2265 = vmatmul.f32.gmra.mxu0 %v1221
    %v2266 = vpop.f32.mrf.mxu0
    %v2267 = vadd.f32 %v2238, %v2266
    %2268 = vmatmul.f32.gmra.mxu0 %v1223
    %v2269 = vpop.f32.mrf.mxu0
    %v2270 = vadd.f32 %v2241, %v2269
    %2271 = vmatmul.f32.gmra.mxu0 %v1225
    %v2272 = vpop.f32.mrf.mxu0
    %v2273 = vadd.f32 %v2244, %v2272
    %2274 = vdwg.mxu0
    %2275 = vmatpush.msra.mxu0 %v1400
    %2276 = vmatpush.msra.mxu0 %v1398
    %2277 = vmatpush.msra.mxu0 %v1396
    %2278 = vmatpush.msra.mxu0 %v1394
    %2279 = vmatpush.msra.mxu0 %v1392
    %2280 = vmatpush.msra.mxu0 %v1390
    %2281 = vmatpush.msra.mxu0 %v1388
    %2282 = vmatpush.msra.mxu0 %v1386
    %2283 = vmatpush.msra.mxu0 %v1384
    %2284 = vmatpush.msra.mxu0 %v1382
    %2285 = vmatpush.msra.mxu0 %v1380
    %2286 = vmatpush.msra.mxu0 %v1378
    %2287 = vmatpush.msra.mxu0 %v1376
    %2288 = vmatpush.msra.mxu0 %v1374
    %2289 = vmatpush.msra.mxu0 %v1372
    %2290 = vmatpush.msra.mxu0 %v1370
    %2291 = vmatmul.f32.gmra.mxu0 %v1506
    %v2292 = vpop.f32.mrf.mxu0
    %v2293 = vadd.f32 0.0, %v2292
    %2294 = vmatmul.f32.gmra.mxu0 %v1508
    %v2295 = vpop.f32.mrf.mxu0
    %v2296 = vadd.f32 0.0, %v2295
    %2297 = vmatmul.f32.gmra.mxu0 %v1510
    %v2298 = vpop.f32.mrf.mxu0
    %v2299 = vadd.f32 0.0, %v2298
    %2300 = vmatmul.f32.gmra.mxu0 %v1512
    %v2301 = vpop.f32.mrf.mxu0
    %v2302 = vadd.f32 0.0, %v2301
    %2303 = vdwg.mxu0
    %2304 = vmatpush.msra.mxu0 %v1432
    %2305 = vmatpush.msra.mxu0 %v1430
    %2306 = vmatpush.msra.mxu0 %v1428
    %2307 = vmatpush.msra.mxu0 %v1426
    %2308 = vmatpush.msra.mxu0 %v1424
    %2309 = vmatpush.msra.mxu0 %v1422
    %2310 = vmatpush.msra.mxu0 %v1420
    %2311 = vmatpush.msra.mxu0 %v1418
    %2312 = vmatpush.msra.mxu0 %v1416
    %2313 = vmatpush.msra.mxu0 %v1414
    %2314 = vmatpush.msra.mxu0 %v1412
    %2315 = vmatpush.msra.mxu0 %v1410
    %2316 = vmatpush.msra.mxu0 %v1408
    %2317 = vmatpush.msra.mxu0 %v1406
    %2318 = vmatpush.msra.mxu0 %v1404
    %2319 = vmatpush.msra.mxu0 %v1402
    %2320 = vmatmul.f32.gmra.mxu0 %v1507
    %v2321 = vpop.f32.mrf.mxu0
    %v2322 = vadd.f32 %v2293, %v2321
    %2323 = vmatmul.f32.gmra.mxu0 %v1509
    %v2324 = vpop.f32.mrf.mxu0
    %v2325 = vadd.f32 %v2296, %v2324
    %2326 = vmatmul.f32.gmra.mxu0 %v1511
    %v2327 = vpop.f32.mrf.mxu0
    %v2328 = vadd.f32 %v2299, %v2327
    %2329 = vmatmul.f32.gmra.mxu0 %v1513
    %v2330 = vpop.f32.mrf.mxu0
    %v2331 = vadd.f32 %v2302, %v2330
    %2332 = vdwg.mxu0
    %2333 = vmatpush.msra.mxu0 %v1401
    %2334 = vmatpush.msra.mxu0 %v1399
    %2335 = vmatpush.msra.mxu0 %v1397
    %2336 = vmatpush.msra.mxu0 %v1395
    %2337 = vmatpush.msra.mxu0 %v1393
    %2338 = vmatpush.msra.mxu0 %v1391
    %2339 = vmatpush.msra.mxu0 %v1389
    %2340 = vmatpush.msra.mxu0 %v1387
    %2341 = vmatpush.msra.mxu0 %v1385
    %2342 = vmatpush.msra.mxu0 %v1383
    %2343 = vmatpush.msra.mxu0 %v1381
    %2344 = vmatpush.msra.mxu0 %v1379
    %2345 = vmatpush.msra.mxu0 %v1377
    %2346 = vmatpush.msra.mxu0 %v1375
    %2347 = vmatpush.msra.mxu0 %v1373
    %2348 = vmatpush.msra.mxu0 %v1371
    %2349 = vmatmul.f32.gmra.mxu0 %v1506
    %v2350 = vpop.f32.mrf.mxu0
    %v2351 = vadd.f32 0.0, %v2350
    %2352 = vmatmul.f32.gmra.mxu0 %v1508
    %v2353 = vpop.f32.mrf.mxu0
    %v2354 = vadd.f32 0.0, %v2353
    %2355 = vmatmul.f32.gmra.mxu0 %v1510
    %v2356 = vpop.f32.mrf.mxu0
    %v2357 = vadd.f32 0.0, %v2356
    %2358 = vmatmul.f32.gmra.mxu0 %v1512
    %v2359 = vpop.f32.mrf.mxu0
    %v2360 = vadd.f32 0.0, %v2359
    %2361 = vdwg.mxu0
    %2362 = vmatpush.msra.mxu0 %v1433
    %2363 = vmatpush.msra.mxu0 %v1431
    %2364 = vmatpush.msra.mxu0 %v1429
    %2365 = vmatpush.msra.mxu0 %v1427
    %2366 = vmatpush.msra.mxu0 %v1425
    %2367 = vmatpush.msra.mxu0 %v1423
    %2368 = vmatpush.msra.mxu0 %v1421
    %2369 = vmatpush.msra.mxu0 %v1419
    %2370 = vmatpush.msra.mxu0 %v1417
    %2371 = vmatpush.msra.mxu0 %v1415
    %2372 = vmatpush.msra.mxu0 %v1413
    %2373 = vmatpush.msra.mxu0 %v1411
    %2374 = vmatpush.msra.mxu0 %v1409
    %2375 = vmatpush.msra.mxu0 %v1407
    %2376 = vmatpush.msra.mxu0 %v1405
    %2377 = vmatpush.msra.mxu0 %v1403
    %2378 = vmatmul.f32.gmra.mxu0 %v1507
    %v2379 = vpop.f32.mrf.mxu0
    %v2380 = vadd.f32 %v2351, %v2379
    %2381 = vmatmul.f32.gmra.mxu0 %v1509
    %v2382 = vpop.f32.mrf.mxu0
    %v2383 = vadd.f32 %v2354, %v2382
    %2384 = vmatmul.f32.gmra.mxu0 %v1511
    %v2385 = vpop.f32.mrf.mxu0
    %v2386 = vadd.f32 %v2357, %v2385
    %2387 = vmatmul.f32.gmra.mxu0 %v1513
    %v2388 = vpop.f32.mrf.mxu0
    %v2389 = vadd.f32 %v2360, %v2388
    %2390 = vdwg.mxu0
    %v2391 = vadd.f32 %v2206, %v2322
    %v2392 = vadd.f32 %v2264, %v2380
    %v2393 = vadd.f32 %v2209, %v2325
    %v2394 = vadd.f32 %v2267, %v2383
    %v2395 = vadd.f32 %v2212, %v2328
    %v2396 = vadd.f32 %v2270, %v2386
    %v2397 = vadd.f32 %v2215, %v2331
    %v2398 = vadd.f32 %v2273, %v2389
    %v2399 = vadd.f32 %v2391, %v1871
    %v2400 = vadd.f32 %v2392, %v1872
    %v2401 = vadd.f32 %v2393, %v1871
    %v2402 = vadd.f32 %v2394, %v1872
    %v2403 = vadd.f32 %v2395, %v1871
    %v2404 = vadd.f32 %v2396, %v1872
    %v2405 = vadd.f32 %v2397, %v1871
    %v2406 = vadd.f32 %v2398, %v1872
    %v2407 = vsub.f32 0.0, %v2399
    %v2408 = vsub.f32 0.0, %v2400
    %v2409 = vsub.f32 0.0, %v2401
    %v2410 = vsub.f32 0.0, %v2402
    %v2411 = vsub.f32 0.0, %v2403
    %v2412 = vsub.f32 0.0, %v2404
    %v2413 = vsub.f32 0.0, %v2405
    %v2414 = vsub.f32 0.0, %v2406
    %v2415 = vmul.f32 %v2407, 1.442695
    %v2416 = vpow.pop %v2415
    %v2417 = vmul.f32 %v2408, 1.442695
    %v2418 = vpow.pop %v2417
    %v2419 = vmul.f32 %v2409, 1.442695
    %v2420 = vpow.pop %v2419
    %v2421 = vmul.f32 %v2410, 1.442695
    %v2422 = vpow.pop %v2421
    %v2423 = vmul.f32 %v2411, 1.442695
    %v2424 = vpow.pop %v2423
    %v2425 = vmul.f32 %v2412, 1.442695
    %v2426 = vpow.pop %v2425
    %v2427 = vmul.f32 %v2413, 1.442695
    %v2428 = vpow.pop %v2427
    %v2429 = vmul.f32 %v2414, 1.442695
    %v2430 = vpow.pop %v2429
    %v2431 = vadd.f32 %v2416, 1.0
    %v2432 = vadd.f32 %v2418, 1.0
    %v2433 = vadd.f32 %v2420, 1.0
    %v2434 = vadd.f32 %v2422, 1.0
    %v2435 = vadd.f32 %v2424, 1.0
    %v2436 = vadd.f32 %v2426, 1.0
    %v2437 = vadd.f32 %v2428, 1.0
    %v2438 = vadd.f32 %v2430, 1.0
    %v2439 = vrcp.pop %v2431
    %v2440 = vmul.f32 %v2431, %v2439
    %v2441 = vsub.f32 1.0, %v2440
    %v2442 = vmul.f32 %v2439, %v2441
    %v2443 = vadd.f32 %v2439, %v2442
    %vm2444 = vweird.f32 %v2431
    %vm2445 = vweird.f32 %v2439
    %vm2446 = vmor %vm2444, %vm2445
    %v2447 = vsel %vm2446, %v2439, %v2443
    %v2448 = vand.u32 2147483647, %v2431
    %vm2449 = vcmp.eq.f32.partialorder %v2448, 8.507059e+37
    %v2450 = vand.u32 %v2431, 2147483648
    %v2451 = vor.u32 1.1754944e-38, %v2450
    %v2452 = vsel %vm2449, %v2451, %v2447
    %v2453 = vmul.f32 1.0, %v2452
    %v2454 = vrcp.pop %v2432
    %v2455 = vmul.f32 %v2432, %v2454
    %v2456 = vsub.f32 1.0, %v2455
    %v2457 = vmul.f32 %v2454, %v2456
    %v2458 = vadd.f32 %v2454, %v2457
    %vm2459 = vweird.f32 %v2432
    %vm2460 = vweird.f32 %v2454
    %vm2461 = vmor %vm2459, %vm2460
    %v2462 = vsel %vm2461, %v2454, %v2458
    %v2463 = vand.u32 2147483647, %v2432
    %vm2464 = vcmp.eq.f32.partialorder %v2463, 8.507059e+37
    %v2465 = vand.u32 %v2432, 2147483648
    %v2466 = vor.u32 1.1754944e-38, %v2465
    %v2467 = vsel %vm2464, %v2466, %v2462
    %v2468 = vmul.f32 1.0, %v2467
    %v2469 = vrcp.pop %v2433
    %v2470 = vmul.f32 %v2433, %v2469
    %v2471 = vsub.f32 1.0, %v2470
    %v2472 = vmul.f32 %v2469, %v2471
    %v2473 = vadd.f32 %v2469, %v2472
    %vm2474 = vweird.f32 %v2433
    %vm2475 = vweird.f32 %v2469
    %vm2476 = vmor %vm2474, %vm2475
    %v2477 = vsel %vm2476, %v2469, %v2473
    %v2478 = vand.u32 2147483647, %v2433
    %vm2479 = vcmp.eq.f32.partialorder %v2478, 8.507059e+37
    %v2480 = vand.u32 %v2433, 2147483648
    %v2481 = vor.u32 1.1754944e-38, %v2480
    %v2482 = vsel %vm2479, %v2481, %v2477
    %v2483 = vmul.f32 1.0, %v2482
    %v2484 = vrcp.pop %v2434
    %v2485 = vmul.f32 %v2434, %v2484
    %v2486 = vsub.f32 1.0, %v2485
    %v2487 = vmul.f32 %v2484, %v2486
    %v2488 = vadd.f32 %v2484, %v2487
    %vm2489 = vweird.f32 %v2434
    %vm2490 = vweird.f32 %v2484
    %vm2491 = vmor %vm2489, %vm2490
    %v2492 = vsel %vm2491, %v2484, %v2488
    %v2493 = vand.u32 2147483647, %v2434
    %vm2494 = vcmp.eq.f32.partialorder %v2493, 8.507059e+37
    %v2495 = vand.u32 %v2434, 2147483648
    %v2496 = vor.u32 1.1754944e-38, %v2495
    %v2497 = vsel %vm2494, %v2496, %v2492
    %v2498 = vmul.f32 1.0, %v2497
    %v2499 = vrcp.pop %v2435
    %v2500 = vmul.f32 %v2435, %v2499
    %v2501 = vsub.f32 1.0, %v2500
    %v2502 = vmul.f32 %v2499, %v2501
    %v2503 = vadd.f32 %v2499, %v2502
    %vm2504 = vweird.f32 %v2435
    %vm2505 = vweird.f32 %v2499
    %vm2506 = vmor %vm2504, %vm2505
    %v2507 = vsel %vm2506, %v2499, %v2503
    %v2508 = vand.u32 2147483647, %v2435
    %vm2509 = vcmp.eq.f32.partialorder %v2508, 8.507059e+37
    %v2510 = vand.u32 %v2435, 2147483648
    %v2511 = vor.u32 1.1754944e-38, %v2510
    %v2512 = vsel %vm2509, %v2511, %v2507
    %v2513 = vmul.f32 1.0, %v2512
    %v2514 = vrcp.pop %v2436
    %v2515 = vmul.f32 %v2436, %v2514
    %v2516 = vsub.f32 1.0, %v2515
    %v2517 = vmul.f32 %v2514, %v2516
    %v2518 = vadd.f32 %v2514, %v2517
    %vm2519 = vweird.f32 %v2436
    %vm2520 = vweird.f32 %v2514
    %vm2521 = vmor %vm2519, %vm2520
    %v2522 = vsel %vm2521, %v2514, %v2518
    %v2523 = vand.u32 2147483647, %v2436
    %vm2524 = vcmp.eq.f32.partialorder %v2523, 8.507059e+37
    %v2525 = vand.u32 %v2436, 2147483648
    %v2526 = vor.u32 1.1754944e-38, %v2525
    %v2527 = vsel %vm2524, %v2526, %v2522
    %v2528 = vmul.f32 1.0, %v2527
    %v2529 = vrcp.pop %v2437
    %v2530 = vmul.f32 %v2437, %v2529
    %v2531 = vsub.f32 1.0, %v2530
    %v2532 = vmul.f32 %v2529, %v2531
    %v2533 = vadd.f32 %v2529, %v2532
    %vm2534 = vweird.f32 %v2437
    %vm2535 = vweird.f32 %v2529
    %vm2536 = vmor %vm2534, %vm2535
    %v2537 = vsel %vm2536, %v2529, %v2533
    %v2538 = vand.u32 2147483647, %v2437
    %vm2539 = vcmp.eq.f32.partialorder %v2538, 8.507059e+37
    %v2540 = vand.u32 %v2437, 2147483648
    %v2541 = vor.u32 1.1754944e-38, %v2540
    %v2542 = vsel %vm2539, %v2541, %v2537
    %v2543 = vmul.f32 1.0, %v2542
    %v2544 = vrcp.pop %v2438
    %v2545 = vmul.f32 %v2438, %v2544
    %v2546 = vsub.f32 1.0, %v2545
    %v2547 = vmul.f32 %v2544, %v2546
    %v2548 = vadd.f32 %v2544, %v2547
    %vm2549 = vweird.f32 %v2438
    %vm2550 = vweird.f32 %v2544
    %vm2551 = vmor %vm2549, %vm2550
    %v2552 = vsel %vm2551, %v2544, %v2548
    %v2553 = vand.u32 2147483647, %v2438
    %vm2554 = vcmp.eq.f32.partialorder %v2553, 8.507059e+37
    %v2555 = vand.u32 %v2438, 2147483648
    %v2556 = vor.u32 1.1754944e-38, %v2555
    %v2557 = vsel %vm2554, %v2556, %v2552
    %v2558 = vmul.f32 1.0, %v2557
    %v2559 = vmul.f32 %v2399, %v2453
    %v2560 = vmul.f32 %v2400, %v2468
    %v2561 = vmul.f32 %v2401, %v2483
    %v2562 = vmul.f32 %v2402, %v2498
    %v2563 = vmul.f32 %v2403, %v2513
    %v2564 = vmul.f32 %v2404, %v2528
    %v2565 = vmul.f32 %v2405, %v2543
    %v2566 = vmul.f32 %v2406, %v2558
    %v2567 = vadd.f32 %v2035, %v2037
    %v2568 = vadd.f32 %v2567, %v2039
    %v2569 = vadd.f32 %v2568, %v2041
    %v2570 = vrot.slane %v2569, 4
    %v2571 = vadd.f32 %v2569, %v2570
    %v2572 = vrot.slane %v2571, 2
    %v2573 = vadd.f32 %v2571, %v2572
    %v2574 = vrot.slane %v2573, 1
    %v2575 = vadd.f32 %v2573, %v2574
    %v2576 = vadd.f32 %v2036, %v2038
    %v2577 = vadd.f32 %v2576, %v2040
    %v2578 = vadd.f32 %v2577, %v2042
    %v2579 = vrot.slane %v2578, 4
    %v2580 = vadd.f32 %v2578, %v2579
    %v2581 = vrot.slane %v2580, 2
    %v2582 = vadd.f32 %v2580, %v2581
    %v2583 = vrot.slane %v2582, 1
    %v2584 = vadd.f32 %v2582, %v2583
    %v2585 = vadd.f32 %v2559, %v2561
    %v2586 = vadd.f32 %v2585, %v2563
    %v2587 = vadd.f32 %v2586, %v2565
    %v2588 = vrot.slane %v2587, 4
    %v2589 = vadd.f32 %v2587, %v2588
    %v2590 = vrot.slane %v2589, 2
    %v2591 = vadd.f32 %v2589, %v2590
    %v2592 = vrot.slane %v2591, 1
    %v2593 = vadd.f32 %v2591, %v2592
    %v2594 = vadd.f32 %v2560, %v2562
    %v2595 = vadd.f32 %v2594, %v2564
    %v2596 = vadd.f32 %v2595, %v2566
    %v2597 = vrot.slane %v2596, 4
    %v2598 = vadd.f32 %v2596, %v2597
    %v2599 = vrot.slane %v2598, 2
    %v2600 = vadd.f32 %v2598, %v2599
    %v2601 = vrot.slane %v2600, 1
    %v2602 = vadd.f32 %v2600, %v2601
    %v2603 = vadd.f32 %v2575, %v2593
    %v2604 = vadd.f32 %v2584, %v2602
    %v2605 = vmul.f32 %v2035, %v2035
    %v2606 = vmul.f32 %v2036, %v2036
    %v2607 = vmul.f32 %v2037, %v2037
    %v2608 = vmul.f32 %v2038, %v2038
    %v2609 = vmul.f32 %v2039, %v2039
    %v2610 = vmul.f32 %v2040, %v2040
    %v2611 = vmul.f32 %v2041, %v2041
    %v2612 = vmul.f32 %v2042, %v2042
    %v2613 = vadd.f32 %v2605, %v2607
    %v2614 = vadd.f32 %v2613, %v2609
    %v2615 = vadd.f32 %v2614, %v2611
    %v2616 = vrot.slane %v2615, 4
    %v2617 = vadd.f32 %v2615, %v2616
    %v2618 = vrot.slane %v2617, 2
    %v2619 = vadd.f32 %v2617, %v2618
    %v2620 = vrot.slane %v2619, 1
    %v2621 = vadd.f32 %v2619, %v2620
    %v2622 = vadd.f32 %v2606, %v2608
    %v2623 = vadd.f32 %v2622, %v2610
    %v2624 = vadd.f32 %v2623, %v2612
    %v2625 = vrot.slane %v2624, 4
    %v2626 = vadd.f32 %v2624, %v2625
    %v2627 = vrot.slane %v2626, 2
    %v2628 = vadd.f32 %v2626, %v2627
    %v2629 = vrot.slane %v2628, 1
    %v2630 = vadd.f32 %v2628, %v2629
    %v2631 = vmul.f32 %v2559, %v2559
    %v2632 = vmul.f32 %v2560, %v2560
    %v2633 = vmul.f32 %v2561, %v2561
    %v2634 = vmul.f32 %v2562, %v2562
    %v2635 = vmul.f32 %v2563, %v2563
    %v2636 = vmul.f32 %v2564, %v2564
    %v2637 = vmul.f32 %v2565, %v2565
    %v2638 = vmul.f32 %v2566, %v2566
    %v2639 = vadd.f32 %v2631, %v2633
    %v2640 = vadd.f32 %v2639, %v2635
    %v2641 = vadd.f32 %v2640, %v2637
    %v2642 = vrot.slane %v2641, 4
    %v2643 = vadd.f32 %v2641, %v2642
    %v2644 = vrot.slane %v2643, 2
    %v2645 = vadd.f32 %v2643, %v2644
    %v2646 = vrot.slane %v2645, 1
    %v2647 = vadd.f32 %v2645, %v2646
    %v2648 = vadd.f32 %v2632, %v2634
    %v2649 = vadd.f32 %v2648, %v2636
    %v2650 = vadd.f32 %v2649, %v2638
    %v2651 = vrot.slane %v2650, 4
    %v2652 = vadd.f32 %v2650, %v2651
    %v2653 = vrot.slane %v2652, 2
    %v2654 = vadd.f32 %v2652, %v2653
    %v2655 = vrot.slane %v2654, 1
    %v2656 = vadd.f32 %v2654, %v2655
    %v2657 = vadd.f32 %v2621, %v2647
    %v2658 = vadd.f32 %v2630, %v2656
    %2659 = vmatpush.msra.mxu0 %v291
    %2660 = vmatpush.msra.mxu0 %v290
    %2661 = vmatpush.msra.mxu0 %v289
    %2662 = vmatpush.msra.mxu0 %v288
    %2663 = vmatpush.msra.mxu0 %v287
    %2664 = vmatpush.msra.mxu0 %v286
    %2665 = vmatpush.msra.mxu0 %v285
    %2666 = vmatpush.msra.mxu0 %v284
    %2667 = vmatpush.msra.mxu0 %v283
    %2668 = vmatpush.msra.mxu0 %v282
    %2669 = vmatpush.msra.mxu0 %v281
    %2670 = vmatpush.msra.mxu0 %v280
    %2671 = vmatpush.msra.mxu0 %v279
    %2672 = vmatpush.msra.mxu0 %v278
    %2673 = vmatpush.msra.mxu0 %v277
    %2674 = vmatpush.msra.mxu0 %v276
    %2675 = vmatmul.f32.gmra.mxu0 %v2603
    %v2676 = vpop.f32.mrf.mxu0
    %v2677 = vadd.f32 0.0, %v2676
    %2678 = vdwg.mxu0
    %2679 = vmatpush.msra.mxu0 %v307
    %2680 = vmatpush.msra.mxu0 %v306
    %2681 = vmatpush.msra.mxu0 %v305
    %2682 = vmatpush.msra.mxu0 %v304
    %2683 = vmatpush.msra.mxu0 %v303
    %2684 = vmatpush.msra.mxu0 %v302
    %2685 = vmatpush.msra.mxu0 %v301
    %2686 = vmatpush.msra.mxu0 %v300
    %2687 = vmatpush.msra.mxu0 %v299
    %2688 = vmatpush.msra.mxu0 %v298
    %2689 = vmatpush.msra.mxu0 %v297
    %2690 = vmatpush.msra.mxu0 %v296
    %2691 = vmatpush.msra.mxu0 %v295
    %2692 = vmatpush.msra.mxu0 %v294
    %2693 = vmatpush.msra.mxu0 %v293
    %2694 = vmatpush.msra.mxu0 %v292
    %2695 = vmatmul.f32.gmra.mxu0 %v2604
    %v2696 = vpop.f32.mrf.mxu0
    %v2697 = vadd.f32 %v2677, %v2696
    %2698 = vdwg.mxu0
    %2699 = vmatpush.msra.mxu0 %v291
    %2700 = vmatpush.msra.mxu0 %v290
    %2701 = vmatpush.msra.mxu0 %v289
    %2702 = vmatpush.msra.mxu0 %v288
    %2703 = vmatpush.msra.mxu0 %v287
    %2704 = vmatpush.msra.mxu0 %v286
    %2705 = vmatpush.msra.mxu0 %v285
    %2706 = vmatpush.msra.mxu0 %v284
    %2707 = vmatpush.msra.mxu0 %v283
    %2708 = vmatpush.msra.mxu0 %v282
    %2709 = vmatpush.msra.mxu0 %v281
    %2710 = vmatpush.msra.mxu0 %v280
    %2711 = vmatpush.msra.mxu0 %v279
    %2712 = vmatpush.msra.mxu0 %v278
    %2713 = vmatpush.msra.mxu0 %v277
    %2714 = vmatpush.msra.mxu0 %v276
    %2715 = vmatmul.f32.gmra.mxu0 %v2657
    %v2716 = vpop.f32.mrf.mxu0
    %v2717 = vadd.f32 0.0, %v2716
    %2718 = vdwg.mxu0
    %2719 = vmatpush.msra.mxu0 %v307
    %2720 = vmatpush.msra.mxu0 %v306
    %2721 = vmatpush.msra.mxu0 %v305
    %2722 = vmatpush.msra.mxu0 %v304
    %2723 = vmatpush.msra.mxu0 %v303
    %2724 = vmatpush.msra.mxu0 %v302
    %2725 = vmatpush.msra.mxu0 %v301
    %2726 = vmatpush.msra.mxu0 %v300
    %2727 = vmatpush.msra.mxu0 %v299
    %2728 = vmatpush.msra.mxu0 %v298
    %2729 = vmatpush.msra.mxu0 %v297
    %2730 = vmatpush.msra.mxu0 %v296
    %2731 = vmatpush.msra.mxu0 %v295
    %2732 = vmatpush.msra.mxu0 %v294
    %2733 = vmatpush.msra.mxu0 %v293
    %2734 = vmatpush.msra.mxu0 %v292
    %2735 = vmatmul.f32.gmra.mxu0 %v2658
    %v2736 = vpop.f32.mrf.mxu0
    %v2737 = vadd.f32 %v2717, %v2736
    %2738 = vdwg.mxu0
    %v2739 = vmul.f32 %v2697, 0.00048828125
    %v2740 = vmul.f32 %v2737, 0.00048828125
    %v2741 = vmul.f32 %v2739, %v2739
    %v2742 = vsub.f32 %v2740, %v2741
    %v2743 = vadd.f32 %v2742, 1e-05
    %v2744 = vrsqrt.pop %v2743
    %v2745 = vmul.f32 %v2744, %v2743
    %v2746 = vmul.f32 %v2745, %v2744
    %v2747 = vmul.f32 0.5, %v2746
    %v2748 = vsub.f32 1.5, %v2747
    %v2749 = vmul.f32 %v2744, %v2748
    %vm2750 = vweird.f32 %v2743
    %vm2751 = vweird.f32 %v2744
    %vm2752 = vmor %vm2750, %vm2751
    %v2753 = vsel %vm2752, %v2744, %v2749
    %v2755 = vsel %vm1098, %v2739, 0
    %2757 = vmatpush.msra.mxu0 0.0
    %2758 = vmatpush.msra.mxu0 0.0
    %2759 = vmatpush.msra.mxu0 0.0
    %2760 = vmatpush.msra.mxu0 0.0
    %2761 = vmatpush.msra.mxu0 0.0
    %2762 = vmatpush.msra.mxu0 0.0
    %2763 = vmatpush.msra.mxu0 0.0
    %2764 = vmatpush.msra.mxu0 0.0
    %2765 = vmatpush.msra.mxu0 0.0
    %2766 = vmatpush.msra.mxu0 0.0
    %2767 = vmatpush.msra.mxu0 0.0
    %2768 = vmatpush.msra.mxu0 0.0
    %2769 = vmatpush.msra.mxu0 0.0
    %2770 = vmatpush.msra.mxu0 0.0
    %2771 = vmatpush.msra.mxu0 0.0
    %2772 = vmatpush.msra.mxu0 %v308
    %2773 = vmatmul.f32.gmra.mxu0 %v2755
    %v2774 = vpop.f32.mrf.mxu0
    %v2775 = vadd.f32 0.0, %v2774
    %2776 = vdwg.mxu0
    %2777 = vmatpush.msra.mxu0 0.0
    %2778 = vmatpush.msra.mxu0 0.0
    %2779 = vmatpush.msra.mxu0 0.0
    %2780 = vmatpush.msra.mxu0 0.0
    %2781 = vmatpush.msra.mxu0 0.0
    %2782 = vmatpush.msra.mxu0 0.0
    %2783 = vmatpush.msra.mxu0 0.0
    %2784 = vmatpush.msra.mxu0 0.0
    %2785 = vmatpush.msra.mxu0 0.0
    %2786 = vmatpush.msra.mxu0 0.0
    %2787 = vmatpush.msra.mxu0 0.0
    %2788 = vmatpush.msra.mxu0 0.0
    %2789 = vmatpush.msra.mxu0 0.0
    %2790 = vmatpush.msra.mxu0 0.0
    %2791 = vmatpush.msra.mxu0 0.0
    %2792 = vmatpush.msra.mxu0 %v309
    %2793 = vmatmul.f32.gmra.mxu0 %v2755
    %v2794 = vpop.f32.mrf.mxu0
    %v2795 = vadd.f32 0.0, %v2794
    %2796 = vdwg.mxu0
    %v2798 = vsel %vm1098, %v2753, 0
    %2800 = vmatpush.msra.mxu0 0.0
    %2801 = vmatpush.msra.mxu0 0.0
    %2802 = vmatpush.msra.mxu0 0.0
    %2803 = vmatpush.msra.mxu0 0.0
    %2804 = vmatpush.msra.mxu0 0.0
    %2805 = vmatpush.msra.mxu0 0.0
    %2806 = vmatpush.msra.mxu0 0.0
    %2807 = vmatpush.msra.mxu0 0.0
    %2808 = vmatpush.msra.mxu0 0.0
    %2809 = vmatpush.msra.mxu0 0.0
    %2810 = vmatpush.msra.mxu0 0.0
    %2811 = vmatpush.msra.mxu0 0.0
    %2812 = vmatpush.msra.mxu0 0.0
    %2813 = vmatpush.msra.mxu0 0.0
    %2814 = vmatpush.msra.mxu0 0.0
    %2815 = vmatpush.msra.mxu0 %v308
    %2816 = vmatmul.f32.gmra.mxu0 %v2798
    %v2817 = vpop.f32.mrf.mxu0
    %v2818 = vadd.f32 0.0, %v2817
    %2819 = vdwg.mxu0
    %2820 = vmatpush.msra.mxu0 0.0
    %2821 = vmatpush.msra.mxu0 0.0
    %2822 = vmatpush.msra.mxu0 0.0
    %2823 = vmatpush.msra.mxu0 0.0
    %2824 = vmatpush.msra.mxu0 0.0
    %2825 = vmatpush.msra.mxu0 0.0
    %2826 = vmatpush.msra.mxu0 0.0
    %2827 = vmatpush.msra.mxu0 0.0
    %2828 = vmatpush.msra.mxu0 0.0
    %2829 = vmatpush.msra.mxu0 0.0
    %2830 = vmatpush.msra.mxu0 0.0
    %2831 = vmatpush.msra.mxu0 0.0
    %2832 = vmatpush.msra.mxu0 0.0
    %2833 = vmatpush.msra.mxu0 0.0
    %2834 = vmatpush.msra.mxu0 0.0
    %2835 = vmatpush.msra.mxu0 %v309
    %2836 = vmatmul.f32.gmra.mxu0 %v2798
    %v2837 = vpop.f32.mrf.mxu0
    %v2838 = vadd.f32 0.0, %v2837
    %2839 = vdwg.mxu0
    %v2842 = vrot.slane %v2838, 7
    %v2843 = vsel %vm1188, %v2818, %v2842
    %v2845 = vmul.f32 %v194, %v2843
    %v2847 = vperm.slane %v2845, 0
    %v2848 = vperm.slane %v2845, 1
    %v2851 = vmul.f32 %v2775, %v2847
    %v2852 = vmul.f32 %v2795, %v2848
    %v2855 = vrot.slane %v2852, 7
    %v2856 = vsel %vm1188, %v2851, %v2855
    %v2858 = vsub.f32 %v196, %v2856
    %v2859 = vmul.f32 %v2035, %v2847
    %v2860 = vmul.f32 %v2036, %v2848
    %v2861 = vmul.f32 %v2037, %v2847
    %v2862 = vmul.f32 %v2038, %v2848
    %v2863 = vmul.f32 %v2039, %v2847
    %v2864 = vmul.f32 %v2040, %v2848
    %v2865 = vmul.f32 %v2041, %v2847
    %v2866 = vmul.f32 %v2042, %v2848
    %v2868 = vperm.slane %v2858, 0
    %v2869 = vperm.slane %v2858, 1
    %v2872 = vadd.f32 %v2859, %v2868
    %v2873 = vadd.f32 %v2860, %v2869
    %v2874 = vadd.f32 %v2861, %v2868
    %v2875 = vadd.f32 %v2862, %v2869
    %v2876 = vadd.f32 %v2863, %v2868
    %v2877 = vadd.f32 %v2864, %v2869
    %v2878 = vadd.f32 %v2865, %v2868
    %v2879 = vadd.f32 %v2866, %v2869
    %v2880 = vmul.f32 %v2559, %v2847
    %v2881 = vmul.f32 %v2560, %v2848
    %v2882 = vmul.f32 %v2561, %v2847
    %v2883 = vmul.f32 %v2562, %v2848
    %v2884 = vmul.f32 %v2563, %v2847
    %v2885 = vmul.f32 %v2564, %v2848
    %v2886 = vmul.f32 %v2565, %v2847
    %v2887 = vmul.f32 %v2566, %v2848
    %v2888 = vadd.f32 %v2880, %v2868
    %v2889 = vadd.f32 %v2881, %v2869
    %v2890 = vadd.f32 %v2882, %v2868
    %v2891 = vadd.f32 %v2883, %v2869
    %v2892 = vadd.f32 %v2884, %v2868
    %v2893 = vadd.f32 %v2885, %v2869
    %v2894 = vadd.f32 %v2886, %v2868
    %v2895 = vadd.f32 %v2887, %v2869
    %v2896 = vld [vmem:[#allocation11] sm:$0xff]
    %v2897 = vld [vmem:[#allocation11 + $0x8] sm:$0xff]
    %v2898 = vld [vmem:[#allocation11 + $0x10] sm:$0xff]
    %v2899 = vld [vmem:[#allocation11 + $0x18] sm:$0xff]
    %v2900 = vld [vmem:[#allocation11 + $0x20] sm:$0xff]
    %v2901 = vld [vmem:[#allocation11 + $0x28] sm:$0xff]
    %v2902 = vld [vmem:[#allocation11 + $0x30] sm:$0xff]
    %v2903 = vld [vmem:[#allocation11 + $0x38] sm:$0xff]
    %v2904 = vld [vmem:[#allocation11 + $0x40] sm:$0xff]
    %v2905 = vld [vmem:[#allocation11 + $0x48] sm:$0xff]
    %v2906 = vld [vmem:[#allocation11 + $0x50] sm:$0xff]
    %v2907 = vld [vmem:[#allocation11 + $0x58] sm:$0xff]
    %v2908 = vld [vmem:[#allocation11 + $0x60] sm:$0xff]
    %v2909 = vld [vmem:[#allocation11 + $0x68] sm:$0xff]
    %v2910 = vld [vmem:[#allocation11 + $0x70] sm:$0xff]
    %v2911 = vld [vmem:[#allocation11 + $0x78] sm:$0xff]
    %v2912 = vld [vmem:[#allocation11 + $0x80] sm:$0xff]
    %v2913 = vld [vmem:[#allocation11 + $0x88] sm:$0xff]
    %v2914 = vld [vmem:[#allocation11 + $0x90] sm:$0xff]
    %v2915 = vld [vmem:[#allocation11 + $0x98] sm:$0xff]
    %v2916 = vld [vmem:[#allocation11 + $0xa0] sm:$0xff]
    %v2917 = vld [vmem:[#allocation11 + $0xa8] sm:$0xff]
    %v2918 = vld [vmem:[#allocation11 + $0xb0] sm:$0xff]
    %v2919 = vld [vmem:[#allocation11 + $0xb8] sm:$0xff]
    %v2920 = vld [vmem:[#allocation11 + $0xc0] sm:$0xff]
    %v2921 = vld [vmem:[#allocation11 + $0xc8] sm:$0xff]
    %v2922 = vld [vmem:[#allocation11 + $0xd0] sm:$0xff]
    %v2923 = vld [vmem:[#allocation11 + $0xd8] sm:$0xff]
    %v2924 = vld [vmem:[#allocation11 + $0xe0] sm:$0xff]
    %v2925 = vld [vmem:[#allocation11 + $0xe8] sm:$0xff]
    %v2926 = vld [vmem:[#allocation11 + $0xf0] sm:$0xff]
    %v2927 = vld [vmem:[#allocation11 + $0xf8] sm:$0xff]
    %v2928 = vld [vmem:[#allocation11 + $0x100] sm:$0xff]
    %v2929 = vld [vmem:[#allocation11 + $0x108] sm:$0xff]
    %v2930 = vld [vmem:[#allocation11 + $0x110] sm:$0xff]
    %v2931 = vld [vmem:[#allocation11 + $0x118] sm:$0xff]
    %v2932 = vld [vmem:[#allocation11 + $0x120] sm:$0xff]
    %v2933 = vld [vmem:[#allocation11 + $0x128] sm:$0xff]
    %v2934 = vld [vmem:[#allocation11 + $0x130] sm:$0xff]
    %v2935 = vld [vmem:[#allocation11 + $0x138] sm:$0xff]
    %v2936 = vld [vmem:[#allocation11 + $0x140] sm:$0xff]
    %v2937 = vld [vmem:[#allocation11 + $0x148] sm:$0xff]
    %v2938 = vld [vmem:[#allocation11 + $0x150] sm:$0xff]
    %v2939 = vld [vmem:[#allocation11 + $0x158] sm:$0xff]
    %v2940 = vld [vmem:[#allocation11 + $0x160] sm:$0xff]
    %v2941 = vld [vmem:[#allocation11 + $0x168] sm:$0xff]
    %v2942 = vld [vmem:[#allocation11 + $0x170] sm:$0xff]
    %v2943 = vld [vmem:[#allocation11 + $0x178] sm:$0xff]
    %v2944 = vld [vmem:[#allocation11 + $0x180] sm:$0xff]
    %v2945 = vld [vmem:[#allocation11 + $0x188] sm:$0xff]
    %v2946 = vld [vmem:[#allocation11 + $0x190] sm:$0xff]
    %v2947 = vld [vmem:[#allocation11 + $0x198] sm:$0xff]
    %v2948 = vld [vmem:[#allocation11 + $0x1a0] sm:$0xff]
    %v2949 = vld [vmem:[#allocation11 + $0x1a8] sm:$0xff]
    %v2950 = vld [vmem:[#allocation11 + $0x1b0] sm:$0xff]
    %v2951 = vld [vmem:[#allocation11 + $0x1b8] sm:$0xff]
    %v2952 = vld [vmem:[#allocation11 + $0x1c0] sm:$0xff]
    %v2953 = vld [vmem:[#allocation11 + $0x1c8] sm:$0xff]
    %v2954 = vld [vmem:[#allocation11 + $0x1d0] sm:$0xff]
    %v2955 = vld [vmem:[#allocation11 + $0x1d8] sm:$0xff]
    %v2956 = vld [vmem:[#allocation11 + $0x1e0] sm:$0xff]
    %v2957 = vld [vmem:[#allocation11 + $0x1e8] sm:$0xff]
    %v2958 = vld [vmem:[#allocation11 + $0x1f0] sm:$0xff]
    %v2959 = vld [vmem:[#allocation11 + $0x1f8] sm:$0xff]
    %v2960 = vld [vmem:[#allocation13] sm:$0xff]
    %v2961 = vld [vmem:[#allocation13 + $0x8] sm:$0xff]
    %v2962 = vld [vmem:[#allocation13 + $0x10] sm:$0xff]
    %v2963 = vld [vmem:[#allocation13 + $0x18] sm:$0xff]
    %v2964 = vld [vmem:[#allocation13 + $0x20] sm:$0xff]
    %v2965 = vld [vmem:[#allocation13 + $0x28] sm:$0xff]
    %v2966 = vld [vmem:[#allocation13 + $0x30] sm:$0xff]
    %v2967 = vld [vmem:[#allocation13 + $0x38] sm:$0xff]
    %v2968 = vld [vmem:[#allocation13 + $0x40] sm:$0xff]
    %v2969 = vld [vmem:[#allocation13 + $0x48] sm:$0xff]
    %v2970 = vld [vmem:[#allocation13 + $0x50] sm:$0xff]
    %v2971 = vld [vmem:[#allocation13 + $0x58] sm:$0xff]
    %v2972 = vld [vmem:[#allocation13 + $0x60] sm:$0xff]
    %v2973 = vld [vmem:[#allocation13 + $0x68] sm:$0xff]
    %v2974 = vld [vmem:[#allocation13 + $0x70] sm:$0xff]
    %v2975 = vld [vmem:[#allocation13 + $0x78] sm:$0xff]
    %v2976 = vld [vmem:[#allocation13 + $0x80] sm:$0xff]
    %v2977 = vld [vmem:[#allocation13 + $0x88] sm:$0xff]
    %v2978 = vld [vmem:[#allocation13 + $0x90] sm:$0xff]
    %v2979 = vld [vmem:[#allocation13 + $0x98] sm:$0xff]
    %v2980 = vld [vmem:[#allocation13 + $0xa0] sm:$0xff]
    %v2981 = vld [vmem:[#allocation13 + $0xa8] sm:$0xff]
    %v2982 = vld [vmem:[#allocation13 + $0xb0] sm:$0xff]
    %v2983 = vld [vmem:[#allocation13 + $0xb8] sm:$0xff]
    %v2984 = vld [vmem:[#allocation13 + $0xc0] sm:$0xff]
    %v2985 = vld [vmem:[#allocation13 + $0xc8] sm:$0xff]
    %v2986 = vld [vmem:[#allocation13 + $0xd0] sm:$0xff]
    %v2987 = vld [vmem:[#allocation13 + $0xd8] sm:$0xff]
    %v2988 = vld [vmem:[#allocation13 + $0xe0] sm:$0xff]
    %v2989 = vld [vmem:[#allocation13 + $0xe8] sm:$0xff]
    %v2990 = vld [vmem:[#allocation13 + $0xf0] sm:$0xff]
    %v2991 = vld [vmem:[#allocation13 + $0xf8] sm:$0xff]
    %v2992 = vld [vmem:[#allocation13 + $0x100] sm:$0xff]
    %v2993 = vld [vmem:[#allocation13 + $0x108] sm:$0xff]
    %v2994 = vld [vmem:[#allocation13 + $0x110] sm:$0xff]
    %v2995 = vld [vmem:[#allocation13 + $0x118] sm:$0xff]
    %v2996 = vld [vmem:[#allocation13 + $0x120] sm:$0xff]
    %v2997 = vld [vmem:[#allocation13 + $0x128] sm:$0xff]
    %v2998 = vld [vmem:[#allocation13 + $0x130] sm:$0xff]
    %v2999 = vld [vmem:[#allocation13 + $0x138] sm:$0xff]
    %v3000 = vld [vmem:[#allocation13 + $0x140] sm:$0xff]
    %v3001 = vld [vmem:[#allocation13 + $0x148] sm:$0xff]
    %v3002 = vld [vmem:[#allocation13 + $0x150] sm:$0xff]
    %v3003 = vld [vmem:[#allocation13 + $0x158] sm:$0xff]
    %v3004 = vld [vmem:[#allocation13 + $0x160] sm:$0xff]
    %v3005 = vld [vmem:[#allocation13 + $0x168] sm:$0xff]
    %v3006 = vld [vmem:[#allocation13 + $0x170] sm:$0xff]
    %v3007 = vld [vmem:[#allocation13 + $0x178] sm:$0xff]
    %v3008 = vld [vmem:[#allocation13 + $0x180] sm:$0xff]
    %v3009 = vld [vmem:[#allocation13 + $0x188] sm:$0xff]
    %v3010 = vld [vmem:[#allocation13 + $0x190] sm:$0xff]
    %v3011 = vld [vmem:[#allocation13 + $0x198] sm:$0xff]
    %v3012 = vld [vmem:[#allocation13 + $0x1a0] sm:$0xff]
    %v3013 = vld [vmem:[#allocation13 + $0x1a8] sm:$0xff]
    %v3014 = vld [vmem:[#allocation13 + $0x1b0] sm:$0xff]
    %v3015 = vld [vmem:[#allocation13 + $0x1b8] sm:$0xff]
    %v3016 = vld [vmem:[#allocation13 + $0x1c0] sm:$0xff]
    %v3017 = vld [vmem:[#allocation13 + $0x1c8] sm:$0xff]
    %v3018 = vld [vmem:[#allocation13 + $0x1d0] sm:$0xff]
    %v3019 = vld [vmem:[#allocation13 + $0x1d8] sm:$0xff]
    %v3020 = vld [vmem:[#allocation13 + $0x1e0] sm:$0xff]
    %v3021 = vld [vmem:[#allocation13 + $0x1e8] sm:$0xff]
    %v3022 = vld [vmem:[#allocation13 + $0x1f0] sm:$0xff]
    %v3023 = vld [vmem:[#allocation13 + $0x1f8] sm:$0xff]
    %v3024 = vld [vmem:[#allocation14] sm:$0xff]
    %v3025 = vld [vmem:[#allocation14 + $0x8] sm:$0xff]
    %v3026 = vld [vmem:[#allocation14 + $0x10] sm:$0xff]
    %v3027 = vld [vmem:[#allocation14 + $0x18] sm:$0xff]
    %v3028 = vld [vmem:[#allocation14 + $0x20] sm:$0xff]
    %v3029 = vld [vmem:[#allocation14 + $0x28] sm:$0xff]
    %v3030 = vld [vmem:[#allocation14 + $0x30] sm:$0xff]
    %v3031 = vld [vmem:[#allocation14 + $0x38] sm:$0xff]
    %v3032 = vld [vmem:[#allocation14 + $0x40] sm:$0xff]
    %v3033 = vld [vmem:[#allocation14 + $0x48] sm:$0xff]
    %v3034 = vld [vmem:[#allocation14 + $0x50] sm:$0xff]
    %v3035 = vld [vmem:[#allocation14 + $0x58] sm:$0xff]
    %v3036 = vld [vmem:[#allocation14 + $0x60] sm:$0xff]
    %v3037 = vld [vmem:[#allocation14 + $0x68] sm:$0xff]
    %v3038 = vld [vmem:[#allocation14 + $0x70] sm:$0xff]
    %v3039 = vld [vmem:[#allocation14 + $0x78] sm:$0xff]
    %v3040 = vld [vmem:[#allocation14 + $0x80] sm:$0xff]
    %v3041 = vld [vmem:[#allocation14 + $0x88] sm:$0xff]
    %v3042 = vld [vmem:[#allocation14 + $0x90] sm:$0xff]
    %v3043 = vld [vmem:[#allocation14 + $0x98] sm:$0xff]
    %v3044 = vld [vmem:[#allocation14 + $0xa0] sm:$0xff]
    %v3045 = vld [vmem:[#allocation14 + $0xa8] sm:$0xff]
    %v3046 = vld [vmem:[#allocation14 + $0xb0] sm:$0xff]
    %v3047 = vld [vmem:[#allocation14 + $0xb8] sm:$0xff]
    %v3048 = vld [vmem:[#allocation14 + $0xc0] sm:$0xff]
    %v3049 = vld [vmem:[#allocation14 + $0xc8] sm:$0xff]
    %v3050 = vld [vmem:[#allocation14 + $0xd0] sm:$0xff]
    %v3051 = vld [vmem:[#allocation14 + $0xd8] sm:$0xff]
    %v3052 = vld [vmem:[#allocation14 + $0xe0] sm:$0xff]
    %v3053 = vld [vmem:[#allocation14 + $0xe8] sm:$0xff]
    %v3054 = vld [vmem:[#allocation14 + $0xf0] sm:$0xff]
    %v3055 = vld [vmem:[#allocation14 + $0xf8] sm:$0xff]
    %v3056 = vld [vmem:[#allocation14 + $0x100] sm:$0xff]
    %v3057 = vld [vmem:[#allocation14 + $0x108] sm:$0xff]
    %v3058 = vld [vmem:[#allocation14 + $0x110] sm:$0xff]
    %v3059 = vld [vmem:[#allocation14 + $0x118] sm:$0xff]
    %v3060 = vld [vmem:[#allocation14 + $0x120] sm:$0xff]
    %v3061 = vld [vmem:[#allocation14 + $0x128] sm:$0xff]
    %v3062 = vld [vmem:[#allocation14 + $0x130] sm:$0xff]
    %v3063 = vld [vmem:[#allocation14 + $0x138] sm:$0xff]
    %v3064 = vld [vmem:[#allocation14 + $0x140] sm:$0xff]
    %v3065 = vld [vmem:[#allocation14 + $0x148] sm:$0xff]
    %v3066 = vld [vmem:[#allocation14 + $0x150] sm:$0xff]
    %v3067 = vld [vmem:[#allocation14 + $0x158] sm:$0xff]
    %v3068 = vld [vmem:[#allocation14 + $0x160] sm:$0xff]
    %v3069 = vld [vmem:[#allocation14 + $0x168] sm:$0xff]
    %v3070 = vld [vmem:[#allocation14 + $0x170] sm:$0xff]
    %v3071 = vld [vmem:[#allocation14 + $0x178] sm:$0xff]
    %v3072 = vld [vmem:[#allocation14 + $0x180] sm:$0xff]
    %v3073 = vld [vmem:[#allocation14 + $0x188] sm:$0xff]
    %v3074 = vld [vmem:[#allocation14 + $0x190] sm:$0xff]
    %v3075 = vld [vmem:[#allocation14 + $0x198] sm:$0xff]
    %v3076 = vld [vmem:[#allocation14 + $0x1a0] sm:$0xff]
    %v3077 = vld [vmem:[#allocation14 + $0x1a8] sm:$0xff]
    %v3078 = vld [vmem:[#allocation14 + $0x1b0] sm:$0xff]
    %v3079 = vld [vmem:[#allocation14 + $0x1b8] sm:$0xff]
    %v3080 = vld [vmem:[#allocation14 + $0x1c0] sm:$0xff]
    %v3081 = vld [vmem:[#allocation14 + $0x1c8] sm:$0xff]
    %v3082 = vld [vmem:[#allocation14 + $0x1d0] sm:$0xff]
    %v3083 = vld [vmem:[#allocation14 + $0x1d8] sm:$0xff]
    %v3084 = vld [vmem:[#allocation14 + $0x1e0] sm:$0xff]
    %v3085 = vld [vmem:[#allocation14 + $0x1e8] sm:$0xff]
    %v3086 = vld [vmem:[#allocation14 + $0x1f0] sm:$0xff]
    %v3087 = vld [vmem:[#allocation14 + $0x1f8] sm:$0xff]
    %v3096 = vrot.slane %v2888, 7
    %v3097 = vrot.slane %v2889, 7
    %v3098 = vrot.slane %v2890, 7
    %v3099 = vsel %vm1188, %v3096, %v3098
    %v3100 = vrot.slane %v2891, 7
    %v3101 = vsel %vm1188, %v3097, %v3100
    %v3102 = vrot.slane %v2892, 7
    %v3103 = vsel %vm1188, %v3098, %v3102
    %v3104 = vrot.slane %v2893, 7
    %v3105 = vsel %vm1188, %v3100, %v3104
    %v3106 = vrot.slane %v2894, 7
    %v3107 = vsel %vm1188, %v3102, %v3106
    %v3108 = vrot.slane %v2895, 7
    %v3109 = vsel %vm1188, %v3104, %v3108
    %v3118 = vsel %vm1188, 0.0, %v3096
    %v3119 = vsel %vm1188, 0.0, %v3097
    %v3120 = vmul.f32 %v3118, %v260
    %v3121 = vmul.f32 %v3119, %v260
    %v3122 = vmul.f32 %v3099, %v261
    %v3123 = vmul.f32 %v3101, %v261
    %v3124 = vmul.f32 %v3103, %v262
    %v3125 = vmul.f32 %v3105, %v262
    %v3126 = vmul.f32 %v3107, %v263
    %v3127 = vmul.f32 %v3109, %v263
    %v3136 = vrot.slane %v2872, 1
    %v3137 = vrot.slane %v2874, 1
    %v3138 = vsel %vm318, %v3136, %v3137
    %v3139 = vrot.slane %v2873, 1
    %v3140 = vrot.slane %v2875, 1
    %v3141 = vsel %vm318, %v3139, %v3140
    %v3142 = vrot.slane %v2876, 1
    %v3143 = vsel %vm318, %v3137, %v3142
    %v3144 = vrot.slane %v2877, 1
    %v3145 = vsel %vm318, %v3140, %v3144
    %v3146 = vrot.slane %v2878, 1
    %v3147 = vsel %vm318, %v3142, %v3146
    %v3148 = vrot.slane %v2879, 1
    %v3149 = vsel %vm318, %v3144, %v3148
    %v3158 = vsel %vm318, %v3146, 0.0
    %v3159 = vsel %vm318, %v3148, 0.0
    %v3160 = vmul.f32 %v3138, %v272
    %v3161 = vmul.f32 %v3141, %v272
    %v3162 = vmul.f32 %v3143, %v273
    %v3163 = vmul.f32 %v3145, %v273
    %v3164 = vmul.f32 %v3147, %v274
    %v3165 = vmul.f32 %v3149, %v274
    %v3166 = vmul.f32 %v3158, %v275
    %v3167 = vmul.f32 %v3159, %v275
    %3168 = vmatpush.msra.mxu0 %v2990
    %3169 = vmatpush.msra.mxu0 %v2988
    %3170 = vmatpush.msra.mxu0 %v2986
    %3171 = vmatpush.msra.mxu0 %v2984
    %3172 = vmatpush.msra.mxu0 %v2982
    %3173 = vmatpush.msra.mxu0 %v2980
    %3174 = vmatpush.msra.mxu0 %v2978
    %3175 = vmatpush.msra.mxu0 %v2976
    %3176 = vmatpush.msra.mxu0 %v2974
    %3177 = vmatpush.msra.mxu0 %v2972
    %3178 = vmatpush.msra.mxu0 %v2970
    %3179 = vmatpush.msra.mxu0 %v2968
    %3180 = vmatpush.msra.mxu0 %v2966
    %3181 = vmatpush.msra.mxu0 %v2964
    %3182 = vmatpush.msra.mxu0 %v2962
    %3183 = vmatpush.msra.mxu0 %v2960
    %3184 = vmatmul.f32.gmra.mxu0 %v2872
    %v3185 = vpop.f32.mrf.mxu0
    %v3186 = vadd.f32 0.0, %v3185
    %3187 = vmatmul.f32.gmra.mxu0 %v2874
    %v3188 = vpop.f32.mrf.mxu0
    %v3189 = vadd.f32 0.0, %v3188
    %3190 = vmatmul.f32.gmra.mxu0 %v2876
    %v3191 = vpop.f32.mrf.mxu0
    %v3192 = vadd.f32 0.0, %v3191
    %3193 = vmatmul.f32.gmra.mxu0 %v2878
    %v3194 = vpop.f32.mrf.mxu0
    %v3195 = vadd.f32 0.0, %v3194
    %3196 = vdwg.mxu0
    %3197 = vmatpush.msra.mxu0 %v3022
    %3198 = vmatpush.msra.mxu0 %v3020
    %3199 = vmatpush.msra.mxu0 %v3018
    %3200 = vmatpush.msra.mxu0 %v3016
    %3201 = vmatpush.msra.mxu0 %v3014
    %3202 = vmatpush.msra.mxu0 %v3012
    %3203 = vmatpush.msra.mxu0 %v3010
    %3204 = vmatpush.msra.mxu0 %v3008
    %3205 = vmatpush.msra.mxu0 %v3006
    %3206 = vmatpush.msra.mxu0 %v3004
    %3207 = vmatpush.msra.mxu0 %v3002
    %3208 = vmatpush.msra.mxu0 %v3000
    %3209 = vmatpush.msra.mxu0 %v2998
    %3210 = vmatpush.msra.mxu0 %v2996
    %3211 = vmatpush.msra.mxu0 %v2994
    %3212 = vmatpush.msra.mxu0 %v2992
    %3213 = vmatmul.f32.gmra.mxu0 %v2873
    %v3214 = vpop.f32.mrf.mxu0
    %v3215 = vadd.f32 %v3186, %v3214
    %3216 = vmatmul.f32.gmra.mxu0 %v2875
    %v3217 = vpop.f32.mrf.mxu0
    %v3218 = vadd.f32 %v3189, %v3217
    %3219 = vmatmul.f32.gmra.mxu0 %v2877
    %v3220 = vpop.f32.mrf.mxu0
    %v3221 = vadd.f32 %v3192, %v3220
    %3222 = vmatmul.f32.gmra.mxu0 %v2879
    %v3223 = vpop.f32.mrf.mxu0
    %v3224 = vadd.f32 %v3195, %v3223
    %3225 = vdwg.mxu0
    %3226 = vmatpush.msra.mxu0 %v2991
    %3227 = vmatpush.msra.mxu0 %v2989
    %3228 = vmatpush.msra.mxu0 %v2987
    %3229 = vmatpush.msra.mxu0 %v2985
    %3230 = vmatpush.msra.mxu0 %v2983
    %3231 = vmatpush.msra.mxu0 %v2981
    %3232 = vmatpush.msra.mxu0 %v2979
    %3233 = vmatpush.msra.mxu0 %v2977
    %3234 = vmatpush.msra.mxu0 %v2975
    %3235 = vmatpush.msra.mxu0 %v2973
    %3236 = vmatpush.msra.mxu0 %v2971
    %3237 = vmatpush.msra.mxu0 %v2969
    %3238 = vmatpush.msra.mxu0 %v2967
    %3239 = vmatpush.msra.mxu0 %v2965
    %3240 = vmatpush.msra.mxu0 %v2963
    %3241 = vmatpush.msra.mxu0 %v2961
    %3242 = vmatmul.f32.gmra.mxu0 %v2872
    %v3243 = vpop.f32.mrf.mxu0
    %v3244 = vadd.f32 0.0, %v3243
    %3245 = vmatmul.f32.gmra.mxu0 %v2874
    %v3246 = vpop.f32.mrf.mxu0
    %v3247 = vadd.f32 0.0, %v3246
    %3248 = vmatmul.f32.gmra.mxu0 %v2876
    %v3249 = vpop.f32.mrf.mxu0
    %v3250 = vadd.f32 0.0, %v3249
    %3251 = vmatmul.f32.gmra.mxu0 %v2878
    %v3252 = vpop.f32.mrf.mxu0
    %v3253 = vadd.f32 0.0, %v3252
    %3254 = vdwg.mxu0
    %3255 = vmatpush.msra.mxu0 %v3023
    %3256 = vmatpush.msra.mxu0 %v3021
    %3257 = vmatpush.msra.mxu0 %v3019
    %3258 = vmatpush.msra.mxu0 %v3017
    %3259 = vmatpush.msra.mxu0 %v3015
    %3260 = vmatpush.msra.mxu0 %v3013
    %3261 = vmatpush.msra.mxu0 %v3011
    %3262 = vmatpush.msra.mxu0 %v3009
    %3263 = vmatpush.msra.mxu0 %v3007
    %3264 = vmatpush.msra.mxu0 %v3005
    %3265 = vmatpush.msra.mxu0 %v3003
    %3266 = vmatpush.msra.mxu0 %v3001
    %3267 = vmatpush.msra.mxu0 %v2999
    %3268 = vmatpush.msra.mxu0 %v2997
    %3269 = vmatpush.msra.mxu0 %v2995
    %3270 = vmatpush.msra.mxu0 %v2993
    %3271 = vmatmul.f32.gmra.mxu0 %v2873
    %v3272 = vpop.f32.mrf.mxu0
    %v3273 = vadd.f32 %v3244, %v3272
    %3274 = vmatmul.f32.gmra.mxu0 %v2875
    %v3275 = vpop.f32.mrf.mxu0
    %v3276 = vadd.f32 %v3247, %v3275
    %3277 = vmatmul.f32.gmra.mxu0 %v2877
    %v3278 = vpop.f32.mrf.mxu0
    %v3279 = vadd.f32 %v3250, %v3278
    %3280 = vmatmul.f32.gmra.mxu0 %v2879
    %v3281 = vpop.f32.mrf.mxu0
    %v3282 = vadd.f32 %v3253, %v3281
    %3283 = vdwg.mxu0
    %3284 = vmatpush.msra.mxu0 %v2926
    %3285 = vmatpush.msra.mxu0 %v2924
    %3286 = vmatpush.msra.mxu0 %v2922
    %3287 = vmatpush.msra.mxu0 %v2920
    %3288 = vmatpush.msra.mxu0 %v2918
    %3289 = vmatpush.msra.mxu0 %v2916
    %3290 = vmatpush.msra.mxu0 %v2914
    %3291 = vmatpush.msra.mxu0 %v2912
    %3292 = vmatpush.msra.mxu0 %v2910
    %3293 = vmatpush.msra.mxu0 %v2908
    %3294 = vmatpush.msra.mxu0 %v2906
    %3295 = vmatpush.msra.mxu0 %v2904
    %3296 = vmatpush.msra.mxu0 %v2902
    %3297 = vmatpush.msra.mxu0 %v2900
    %3298 = vmatpush.msra.mxu0 %v2898
    %3299 = vmatpush.msra.mxu0 %v2896
    %3300 = vmatmul.f32.gmra.mxu0 %v3120
    %v3301 = vpop.f32.mrf.mxu0
    %v3302 = vadd.f32 %v3215, %v3301
    %3303 = vmatmul.f32.gmra.mxu0 %v3122
    %v3304 = vpop.f32.mrf.mxu0
    %v3305 = vadd.f32 %v3218, %v3304
    %3306 = vmatmul.f32.gmra.mxu0 %v3124
    %v3307 = vpop.f32.mrf.mxu0
    %v3308 = vadd.f32 %v3221, %v3307
    %3309 = vmatmul.f32.gmra.mxu0 %v3126
    %v3310 = vpop.f32.mrf.mxu0
    %v3311 = vadd.f32 %v3224, %v3310
    %3312 = vdwg.mxu0
    %3313 = vmatpush.msra.mxu0 %v2958
    %3314 = vmatpush.msra.mxu0 %v2956
    %3315 = vmatpush.msra.mxu0 %v2954
    %3316 = vmatpush.msra.mxu0 %v2952
    %3317 = vmatpush.msra.mxu0 %v2950
    %3318 = vmatpush.msra.mxu0 %v2948
    %3319 = vmatpush.msra.mxu0 %v2946
    %3320 = vmatpush.msra.mxu0 %v2944
    %3321 = vmatpush.msra.mxu0 %v2942
    %3322 = vmatpush.msra.mxu0 %v2940
    %3323 = vmatpush.msra.mxu0 %v2938
    %3324 = vmatpush.msra.mxu0 %v2936
    %3325 = vmatpush.msra.mxu0 %v2934
    %3326 = vmatpush.msra.mxu0 %v2932
    %3327 = vmatpush.msra.mxu0 %v2930
    %3328 = vmatpush.msra.mxu0 %v2928
    %3329 = vmatmul.f32.gmra.mxu0 %v3121
    %v3330 = vpop.f32.mrf.mxu0
    %v3331 = vadd.f32 %v3302, %v3330
    %3332 = vmatmul.f32.gmra.mxu0 %v3123
    %v3333 = vpop.f32.mrf.mxu0
    %v3334 = vadd.f32 %v3305, %v3333
    %3335 = vmatmul.f32.gmra.mxu0 %v3125
    %v3336 = vpop.f32.mrf.mxu0
    %v3337 = vadd.f32 %v3308, %v3336
    %3338 = vmatmul.f32.gmra.mxu0 %v3127
    %v3339 = vpop.f32.mrf.mxu0
    %v3340 = vadd.f32 %v3311, %v3339
    %3341 = vdwg.mxu0
    %3342 = vmatpush.msra.mxu0 %v2927
    %3343 = vmatpush.msra.mxu0 %v2925
    %3344 = vmatpush.msra.mxu0 %v2923
    %3345 = vmatpush.msra.mxu0 %v2921
    %3346 = vmatpush.msra.mxu0 %v2919
    %3347 = vmatpush.msra.mxu0 %v2917
    %3348 = vmatpush.msra.mxu0 %v2915
    %3349 = vmatpush.msra.mxu0 %v2913
    %3350 = vmatpush.msra.mxu0 %v2911
    %3351 = vmatpush.msra.mxu0 %v2909
    %3352 = vmatpush.msra.mxu0 %v2907
    %3353 = vmatpush.msra.mxu0 %v2905
    %3354 = vmatpush.msra.mxu0 %v2903
    %3355 = vmatpush.msra.mxu0 %v2901
    %3356 = vmatpush.msra.mxu0 %v2899
    %3357 = vmatpush.msra.mxu0 %v2897
    %3358 = vmatmul.f32.gmra.mxu0 %v3120
    %v3359 = vpop.f32.mrf.mxu0
    %v3360 = vadd.f32 %v3273, %v3359
    %3361 = vmatmul.f32.gmra.mxu0 %v3122
    %v3362 = vpop.f32.mrf.mxu0
    %v3363 = vadd.f32 %v3276, %v3362
    %3364 = vmatmul.f32.gmra.mxu0 %v3124
    %v3365 = vpop.f32.mrf.mxu0
    %v3366 = vadd.f32 %v3279, %v3365
    %3367 = vmatmul.f32.gmra.mxu0 %v3126
    %v3368 = vpop.f32.mrf.mxu0
    %v3369 = vadd.f32 %v3282, %v3368
    %3370 = vdwg.mxu0
    %3371 = vmatpush.msra.mxu0 %v2959
    %3372 = vmatpush.msra.mxu0 %v2957
    %3373 = vmatpush.msra.mxu0 %v2955
    %3374 = vmatpush.msra.mxu0 %v2953
    %3375 = vmatpush.msra.mxu0 %v2951
    %3376 = vmatpush.msra.mxu0 %v2949
    %3377 = vmatpush.msra.mxu0 %v2947
    %3378 = vmatpush.msra.mxu0 %v2945
    %3379 = vmatpush.msra.mxu0 %v2943
    %3380 = vmatpush.msra.mxu0 %v2941
    %3381 = vmatpush.msra.mxu0 %v2939
    %3382 = vmatpush.msra.mxu0 %v2937
    %3383 = vmatpush.msra.mxu0 %v2935
    %3384 = vmatpush.msra.mxu0 %v2933
    %3385 = vmatpush.msra.mxu0 %v2931
    %3386 = vmatpush.msra.mxu0 %v2929
    %3387 = vmatmul.f32.gmra.mxu0 %v3121
    %v3388 = vpop.f32.mrf.mxu0
    %v3389 = vadd.f32 %v3360, %v3388
    %3390 = vmatmul.f32.gmra.mxu0 %v3123
    %v3391 = vpop.f32.mrf.mxu0
    %v3392 = vadd.f32 %v3363, %v3391
    %3393 = vmatmul.f32.gmra.mxu0 %v3125
    %v3394 = vpop.f32.mrf.mxu0
    %v3395 = vadd.f32 %v3366, %v3394
    %3396 = vmatmul.f32.gmra.mxu0 %v3127
    %v3397 = vpop.f32.mrf.mxu0
    %v3398 = vadd.f32 %v3369, %v3397
    %3399 = vdwg.mxu0
    %3400 = vmatpush.msra.mxu0 %v3054
    %3401 = vmatpush.msra.mxu0 %v3052
    %3402 = vmatpush.msra.mxu0 %v3050
    %3403 = vmatpush.msra.mxu0 %v3048
    %3404 = vmatpush.msra.mxu0 %v3046
    %3405 = vmatpush.msra.mxu0 %v3044
    %3406 = vmatpush.msra.mxu0 %v3042
    %3407 = vmatpush.msra.mxu0 %v3040
    %3408 = vmatpush.msra.mxu0 %v3038
    %3409 = vmatpush.msra.mxu0 %v3036
    %3410 = vmatpush.msra.mxu0 %v3034
    %3411 = vmatpush.msra.mxu0 %v3032
    %3412 = vmatpush.msra.mxu0 %v3030
    %3413 = vmatpush.msra.mxu0 %v3028
    %3414 = vmatpush.msra.mxu0 %v3026
    %3415 = vmatpush.msra.mxu0 %v3024
    %3416 = vmatmul.f32.gmra.mxu0 %v2888
    %v3417 = vpop.f32.mrf.mxu0
    %v3418 = vadd.f32 0.0, %v3417
    %3419 = vmatmul.f32.gmra.mxu0 %v2890
    %v3420 = vpop.f32.mrf.mxu0
    %v3421 = vadd.f32 0.0, %v3420
    %3422 = vmatmul.f32.gmra.mxu0 %v2892
    %v3423 = vpop.f32.mrf.mxu0
    %v3424 = vadd.f32 0.0, %v3423
    %3425 = vmatmul.f32.gmra.mxu0 %v2894
    %v3426 = vpop.f32.mrf.mxu0
    %v3427 = vadd.f32 0.0, %v3426
    %3428 = vdwg.mxu0
    %3429 = vmatpush.msra.mxu0 %v3086
    %3430 = vmatpush.msra.mxu0 %v3084
    %3431 = vmatpush.msra.mxu0 %v3082
    %3432 = vmatpush.msra.mxu0 %v3080
    %3433 = vmatpush.msra.mxu0 %v3078
    %3434 = vmatpush.msra.mxu0 %v3076
    %3435 = vmatpush.msra.mxu0 %v3074
    %3436 = vmatpush.msra.mxu0 %v3072
    %3437 = vmatpush.msra.mxu0 %v3070
    %3438 = vmatpush.msra.mxu0 %v3068
    %3439 = vmatpush.msra.mxu0 %v3066
    %3440 = vmatpush.msra.mxu0 %v3064
    %3441 = vmatpush.msra.mxu0 %v3062
    %3442 = vmatpush.msra.mxu0 %v3060
    %3443 = vmatpush.msra.mxu0 %v3058
    %3444 = vmatpush.msra.mxu0 %v3056
    %3445 = vmatmul.f32.gmra.mxu0 %v2889
    %v3446 = vpop.f32.mrf.mxu0
    %v3447 = vadd.f32 %v3418, %v3446
    %3448 = vmatmul.f32.gmra.mxu0 %v2891
    %v3449 = vpop.f32.mrf.mxu0
    %v3450 = vadd.f32 %v3421, %v3449
    %3451 = vmatmul.f32.gmra.mxu0 %v2893
    %v3452 = vpop.f32.mrf.mxu0
    %v3453 = vadd.f32 %v3424, %v3452
    %3454 = vmatmul.f32.gmra.mxu0 %v2895
    %v3455 = vpop.f32.mrf.mxu0
    %v3456 = vadd.f32 %v3427, %v3455
    %3457 = vdwg.mxu0
    %3458 = vmatpush.msra.mxu0 %v3055
    %3459 = vmatpush.msra.mxu0 %v3053
    %3460 = vmatpush.msra.mxu0 %v3051
    %3461 = vmatpush.msra.mxu0 %v3049
    %3462 = vmatpush.msra.mxu0 %v3047
    %3463 = vmatpush.msra.mxu0 %v3045
    %3464 = vmatpush.msra.mxu0 %v3043
    %3465 = vmatpush.msra.mxu0 %v3041
    %3466 = vmatpush.msra.mxu0 %v3039
    %3467 = vmatpush.msra.mxu0 %v3037
    %3468 = vmatpush.msra.mxu0 %v3035
    %3469 = vmatpush.msra.mxu0 %v3033
    %3470 = vmatpush.msra.mxu0 %v3031
    %3471 = vmatpush.msra.mxu0 %v3029
    %3472 = vmatpush.msra.mxu0 %v3027
    %3473 = vmatpush.msra.mxu0 %v3025
    %3474 = vmatmul.f32.gmra.mxu0 %v2888
    %v3475 = vpop.f32.mrf.mxu0
    %v3476 = vadd.f32 0.0, %v3475
    %3477 = vmatmul.f32.gmra.mxu0 %v2890
    %v3478 = vpop.f32.mrf.mxu0
    %v3479 = vadd.f32 0.0, %v3478
    %3480 = vmatmul.f32.gmra.mxu0 %v2892
    %v3481 = vpop.f32.mrf.mxu0
    %v3482 = vadd.f32 0.0, %v3481
    %3483 = vmatmul.f32.gmra.mxu0 %v2894
    %v3484 = vpop.f32.mrf.mxu0
    %v3485 = vadd.f32 0.0, %v3484
    %3486 = vdwg.mxu0
    %3487 = vmatpush.msra.mxu0 %v3087
    %3488 = vmatpush.msra.mxu0 %v3085
    %3489 = vmatpush.msra.mxu0 %v3083
    %3490 = vmatpush.msra.mxu0 %v3081
    %3491 = vmatpush.msra.mxu0 %v3079
    %3492 = vmatpush.msra.mxu0 %v3077
    %3493 = vmatpush.msra.mxu0 %v3075
    %3494 = vmatpush.msra.mxu0 %v3073
    %3495 = vmatpush.msra.mxu0 %v3071
    %3496 = vmatpush.msra.mxu0 %v3069
    %3497 = vmatpush.msra.mxu0 %v3067
    %3498 = vmatpush.msra.mxu0 %v3065
    %3499 = vmatpush.msra.mxu0 %v3063
    %3500 = vmatpush.msra.mxu0 %v3061
    %3501 = vmatpush.msra.mxu0 %v3059
    %3502 = vmatpush.msra.mxu0 %v3057
    %3503 = vmatmul.f32.gmra.mxu0 %v2889
    %v3504 = vpop.f32.mrf.mxu0
    %v3505 = vadd.f32 %v3476, %v3504
    %3506 = vmatmul.f32.gmra.mxu0 %v2891
    %v3507 = vpop.f32.mrf.mxu0
    %v3508 = vadd.f32 %v3479, %v3507
    %3509 = vmatmul.f32.gmra.mxu0 %v2893
    %v3510 = vpop.f32.mrf.mxu0
    %v3511 = vadd.f32 %v3482, %v3510
    %3512 = vmatmul.f32.gmra.mxu0 %v2895
    %v3513 = vpop.f32.mrf.mxu0
    %v3514 = vadd.f32 %v3485, %v3513
    %3515 = vdwg.mxu0
    %v3516 = vadd.f32 %v3331, %v3447
    %v3517 = vadd.f32 %v3389, %v3505
    %v3518 = vadd.f32 %v3334, %v3450
    %v3519 = vadd.f32 %v3392, %v3508
    %v3520 = vadd.f32 %v3337, %v3453
    %v3521 = vadd.f32 %v3395, %v3511
    %v3522 = vadd.f32 %v3340, %v3456
    %v3523 = vadd.f32 %v3398, %v3514
    %v3525 = vperm.slane %v198, 0
    %v3526 = vperm.slane %v198, 1
    %v3529 = vadd.f32 %v3516, %v3525
    %v3530 = vadd.f32 %v3517, %v3526
    %v3531 = vadd.f32 %v3518, %v3525
    %v3532 = vadd.f32 %v3519, %v3526
    %v3533 = vadd.f32 %v3520, %v3525
    %v3534 = vadd.f32 %v3521, %v3526
    %v3535 = vadd.f32 %v3522, %v3525
    %v3536 = vadd.f32 %v3523, %v3526
    %v3537 = vsub.f32 0.0, %v3529
    %v3538 = vsub.f32 0.0, %v3530
    %v3539 = vsub.f32 0.0, %v3531
    %v3540 = vsub.f32 0.0, %v3532
    %v3541 = vsub.f32 0.0, %v3533
    %v3542 = vsub.f32 0.0, %v3534
    %v3543 = vsub.f32 0.0, %v3535
    %v3544 = vsub.f32 0.0, %v3536
    %v3545 = vmul.f32 %v3537, 1.442695
    %v3546 = vpow.pop %v3545
    %v3547 = vmul.f32 %v3538, 1.442695
    %v3548 = vpow.pop %v3547
    %v3549 = vmul.f32 %v3539, 1.442695
    %v3550 = vpow.pop %v3549
    %v3551 = vmul.f32 %v3540, 1.442695
    %v3552 = vpow.pop %v3551
    %v3553 = vmul.f32 %v3541, 1.442695
    %v3554 = vpow.pop %v3553
    %v3555 = vmul.f32 %v3542, 1.442695
    %v3556 = vpow.pop %v3555
    %v3557 = vmul.f32 %v3543, 1.442695
    %v3558 = vpow.pop %v3557
    %v3559 = vmul.f32 %v3544, 1.442695
    %v3560 = vpow.pop %v3559
    %v3561 = vadd.f32 %v3546, 1.0
    %v3562 = vadd.f32 %v3548, 1.0
    %v3563 = vadd.f32 %v3550, 1.0
    %v3564 = vadd.f32 %v3552, 1.0
    %v3565 = vadd.f32 %v3554, 1.0
    %v3566 = vadd.f32 %v3556, 1.0
    %v3567 = vadd.f32 %v3558, 1.0
    %v3568 = vadd.f32 %v3560, 1.0
    %v3569 = vrcp.pop %v3561
    %v3570 = vmul.f32 %v3561, %v3569
    %v3571 = vsub.f32 1.0, %v3570
    %v3572 = vmul.f32 %v3569, %v3571
    %v3573 = vadd.f32 %v3569, %v3572
    %vm3574 = vweird.f32 %v3561
    %vm3575 = vweird.f32 %v3569
    %vm3576 = vmor %vm3574, %vm3575
    %v3577 = vsel %vm3576, %v3569, %v3573
    %v3578 = vand.u32 2147483647, %v3561
    %vm3579 = vcmp.eq.f32.partialorder %v3578, 8.507059e+37
    %v3580 = vand.u32 %v3561, 2147483648
    %v3581 = vor.u32 1.1754944e-38, %v3580
    %v3582 = vsel %vm3579, %v3581, %v3577
    %v3583 = vmul.f32 1.0, %v3582
    %v3584 = vrcp.pop %v3562
    %v3585 = vmul.f32 %v3562, %v3584
    %v3586 = vsub.f32 1.0, %v3585
    %v3587 = vmul.f32 %v3584, %v3586
    %v3588 = vadd.f32 %v3584, %v3587
    %vm3589 = vweird.f32 %v3562
    %vm3590 = vweird.f32 %v3584
    %vm3591 = vmor %vm3589, %vm3590
    %v3592 = vsel %vm3591, %v3584, %v3588
    %v3593 = vand.u32 2147483647, %v3562
    %vm3594 = vcmp.eq.f32.partialorder %v3593, 8.507059e+37
    %v3595 = vand.u32 %v3562, 2147483648
    %v3596 = vor.u32 1.1754944e-38, %v3595
    %v3597 = vsel %vm3594, %v3596, %v3592
    %v3598 = vmul.f32 1.0, %v3597
    %v3599 = vrcp.pop %v3563
    %v3600 = vmul.f32 %v3563, %v3599
    %v3601 = vsub.f32 1.0, %v3600
    %v3602 = vmul.f32 %v3599, %v3601
    %v3603 = vadd.f32 %v3599, %v3602
    %vm3604 = vweird.f32 %v3563
    %vm3605 = vweird.f32 %v3599
    %vm3606 = vmor %vm3604, %vm3605
    %v3607 = vsel %vm3606, %v3599, %v3603
    %v3608 = vand.u32 2147483647, %v3563
    %vm3609 = vcmp.eq.f32.partialorder %v3608, 8.507059e+37
    %v3610 = vand.u32 %v3563, 2147483648
    %v3611 = vor.u32 1.1754944e-38, %v3610
    %v3612 = vsel %vm3609, %v3611, %v3607
    %v3613 = vmul.f32 1.0, %v3612
    %v3614 = vrcp.pop %v3564
    %v3615 = vmul.f32 %v3564, %v3614
    %v3616 = vsub.f32 1.0, %v3615
    %v3617 = vmul.f32 %v3614, %v3616
    %v3618 = vadd.f32 %v3614, %v3617
    %vm3619 = vweird.f32 %v3564
    %vm3620 = vweird.f32 %v3614
    %vm3621 = vmor %vm3619, %vm3620
    %v3622 = vsel %vm3621, %v3614, %v3618
    %v3623 = vand.u32 2147483647, %v3564
    %vm3624 = vcmp.eq.f32.partialorder %v3623, 8.507059e+37
    %v3625 = vand.u32 %v3564, 2147483648
    %v3626 = vor.u32 1.1754944e-38, %v3625
    %v3627 = vsel %vm3624, %v3626, %v3622
    %v3628 = vmul.f32 1.0, %v3627
    %v3629 = vrcp.pop %v3565
    %v3630 = vmul.f32 %v3565, %v3629
    %v3631 = vsub.f32 1.0, %v3630
    %v3632 = vmul.f32 %v3629, %v3631
    %v3633 = vadd.f32 %v3629, %v3632
    %vm3634 = vweird.f32 %v3565
    %vm3635 = vweird.f32 %v3629
    %vm3636 = vmor %vm3634, %vm3635
    %v3637 = vsel %vm3636, %v3629, %v3633
    %v3638 = vand.u32 2147483647, %v3565
    %vm3639 = vcmp.eq.f32.partialorder %v3638, 8.507059e+37
    %v3640 = vand.u32 %v3565, 2147483648
    %v3641 = vor.u32 1.1754944e-38, %v3640
    %v3642 = vsel %vm3639, %v3641, %v3637
    %v3643 = vmul.f32 1.0, %v3642
    %v3644 = vrcp.pop %v3566
    %v3645 = vmul.f32 %v3566, %v3644
    %v3646 = vsub.f32 1.0, %v3645
    %v3647 = vmul.f32 %v3644, %v3646
    %v3648 = vadd.f32 %v3644, %v3647
    %vm3649 = vweird.f32 %v3566
    %vm3650 = vweird.f32 %v3644
    %vm3651 = vmor %vm3649, %vm3650
    %v3652 = vsel %vm3651, %v3644, %v3648
    %v3653 = vand.u32 2147483647, %v3566
    %vm3654 = vcmp.eq.f32.partialorder %v3653, 8.507059e+37
    %v3655 = vand.u32 %v3566, 2147483648
    %v3656 = vor.u32 1.1754944e-38, %v3655
    %v3657 = vsel %vm3654, %v3656, %v3652
    %v3658 = vmul.f32 1.0, %v3657
    %v3659 = vrcp.pop %v3567
    %v3660 = vmul.f32 %v3567, %v3659
    %v3661 = vsub.f32 1.0, %v3660
    %v3662 = vmul.f32 %v3659, %v3661
    %v3663 = vadd.f32 %v3659, %v3662
    %vm3664 = vweird.f32 %v3567
    %vm3665 = vweird.f32 %v3659
    %vm3666 = vmor %vm3664, %vm3665
    %v3667 = vsel %vm3666, %v3659, %v3663
    %v3668 = vand.u32 2147483647, %v3567
    %vm3669 = vcmp.eq.f32.partialorder %v3668, 8.507059e+37
    %v3670 = vand.u32 %v3567, 2147483648
    %v3671 = vor.u32 1.1754944e-38, %v3670
    %v3672 = vsel %vm3669, %v3671, %v3667
    %v3673 = vmul.f32 1.0, %v3672
    %v3674 = vrcp.pop %v3568
    %v3675 = vmul.f32 %v3568, %v3674
    %v3676 = vsub.f32 1.0, %v3675
    %v3677 = vmul.f32 %v3674, %v3676
    %v3678 = vadd.f32 %v3674, %v3677
    %vm3679 = vweird.f32 %v3568
    %vm3680 = vweird.f32 %v3674
    %vm3681 = vmor %vm3679, %vm3680
    %v3682 = vsel %vm3681, %v3674, %v3678
    %v3683 = vand.u32 2147483647, %v3568
    %vm3684 = vcmp.eq.f32.partialorder %v3683, 8.507059e+37
    %v3685 = vand.u32 %v3568, 2147483648
    %v3686 = vor.u32 1.1754944e-38, %v3685
    %v3687 = vsel %vm3684, %v3686, %v3682
    %v3688 = vmul.f32 1.0, %v3687
    %v3689 = vmul.f32 %v3529, %v3583
    %v3690 = vmul.f32 %v3530, %v3598
    %v3691 = vmul.f32 %v3531, %v3613
    %v3692 = vmul.f32 %v3532, %v3628
    %v3693 = vmul.f32 %v3533, %v3643
    %v3694 = vmul.f32 %v3534, %v3658
    %v3695 = vmul.f32 %v3535, %v3673
    %v3696 = vmul.f32 %v3536, %v3688
    %3697 = vmatpush.msra.mxu0 %v2990
    %3698 = vmatpush.msra.mxu0 %v2988
    %3699 = vmatpush.msra.mxu0 %v2986
    %3700 = vmatpush.msra.mxu0 %v2984
    %3701 = vmatpush.msra.mxu0 %v2982
    %3702 = vmatpush.msra.mxu0 %v2980
    %3703 = vmatpush.msra.mxu0 %v2978
    %3704 = vmatpush.msra.mxu0 %v2976
    %3705 = vmatpush.msra.mxu0 %v2974
    %3706 = vmatpush.msra.mxu0 %v2972
    %3707 = vmatpush.msra.mxu0 %v2970
    %3708 = vmatpush.msra.mxu0 %v2968
    %3709 = vmatpush.msra.mxu0 %v2966
    %3710 = vmatpush.msra.mxu0 %v2964
    %3711 = vmatpush.msra.mxu0 %v2962
    %3712 = vmatpush.msra.mxu0 %v2960
    %3713 = vmatmul.f32.gmra.mxu0 %v2888
    %v3714 = vpop.f32.mrf.mxu0
    %v3715 = vadd.f32 0.0, %v3714
    %3716 = vmatmul.f32.gmra.mxu0 %v2890
    %v3717 = vpop.f32.mrf.mxu0
    %v3718 = vadd.f32 0.0, %v3717
    %3719 = vmatmul.f32.gmra.mxu0 %v2892
    %v3720 = vpop.f32.mrf.mxu0
    %v3721 = vadd.f32 0.0, %v3720
    %3722 = vmatmul.f32.gmra.mxu0 %v2894
    %v3723 = vpop.f32.mrf.mxu0
    %v3724 = vadd.f32 0.0, %v3723
    %3725 = vdwg.mxu0
    %3726 = vmatpush.msra.mxu0 %v3022
    %3727 = vmatpush.msra.mxu0 %v3020
    %3728 = vmatpush.msra.mxu0 %v3018
    %3729 = vmatpush.msra.mxu0 %v3016
    %3730 = vmatpush.msra.mxu0 %v3014
    %3731 = vmatpush.msra.mxu0 %v3012
    %3732 = vmatpush.msra.mxu0 %v3010
    %3733 = vmatpush.msra.mxu0 %v3008
    %3734 = vmatpush.msra.mxu0 %v3006
    %3735 = vmatpush.msra.mxu0 %v3004
    %3736 = vmatpush.msra.mxu0 %v3002
    %3737 = vmatpush.msra.mxu0 %v3000
    %3738 = vmatpush.msra.mxu0 %v2998
    %3739 = vmatpush.msra.mxu0 %v2996
    %3740 = vmatpush.msra.mxu0 %v2994
    %3741 = vmatpush.msra.mxu0 %v2992
    %3742 = vmatmul.f32.gmra.mxu0 %v2889
    %v3743 = vpop.f32.mrf.mxu0
    %v3744 = vadd.f32 %v3715, %v3743
    %3745 = vmatmul.f32.gmra.mxu0 %v2891
    %v3746 = vpop.f32.mrf.mxu0
    %v3747 = vadd.f32 %v3718, %v3746
    %3748 = vmatmul.f32.gmra.mxu0 %v2893
    %v3749 = vpop.f32.mrf.mxu0
    %v3750 = vadd.f32 %v3721, %v3749
    %3751 = vmatmul.f32.gmra.mxu0 %v2895
    %v3752 = vpop.f32.mrf.mxu0
    %v3753 = vadd.f32 %v3724, %v3752
    %3754 = vdwg.mxu0
    %3755 = vmatpush.msra.mxu0 %v2991
    %3756 = vmatpush.msra.mxu0 %v2989
    %3757 = vmatpush.msra.mxu0 %v2987
    %3758 = vmatpush.msra.mxu0 %v2985
    %3759 = vmatpush.msra.mxu0 %v2983
    %3760 = vmatpush.msra.mxu0 %v2981
    %3761 = vmatpush.msra.mxu0 %v2979
    %3762 = vmatpush.msra.mxu0 %v2977
    %3763 = vmatpush.msra.mxu0 %v2975
    %3764 = vmatpush.msra.mxu0 %v2973
    %3765 = vmatpush.msra.mxu0 %v2971
    %3766 = vmatpush.msra.mxu0 %v2969
    %3767 = vmatpush.msra.mxu0 %v2967
    %3768 = vmatpush.msra.mxu0 %v2965
    %3769 = vmatpush.msra.mxu0 %v2963
    %3770 = vmatpush.msra.mxu0 %v2961
    %3771 = vmatmul.f32.gmra.mxu0 %v2888
    %v3772 = vpop.f32.mrf.mxu0
    %v3773 = vadd.f32 0.0, %v3772
    %3774 = vmatmul.f32.gmra.mxu0 %v2890
    %v3775 = vpop.f32.mrf.mxu0
    %v3776 = vadd.f32 0.0, %v3775
    %3777 = vmatmul.f32.gmra.mxu0 %v2892
    %v3778 = vpop.f32.mrf.mxu0
    %v3779 = vadd.f32 0.0, %v3778
    %3780 = vmatmul.f32.gmra.mxu0 %v2894
    %v3781 = vpop.f32.mrf.mxu0
    %v3782 = vadd.f32 0.0, %v3781
    %3783 = vdwg.mxu0
    %3784 = vmatpush.msra.mxu0 %v3023
    %3785 = vmatpush.msra.mxu0 %v3021
    %3786 = vmatpush.msra.mxu0 %v3019
    %3787 = vmatpush.msra.mxu0 %v3017
    %3788 = vmatpush.msra.mxu0 %v3015
    %3789 = vmatpush.msra.mxu0 %v3013
    %3790 = vmatpush.msra.mxu0 %v3011
    %3791 = vmatpush.msra.mxu0 %v3009
    %3792 = vmatpush.msra.mxu0 %v3007
    %3793 = vmatpush.msra.mxu0 %v3005
    %3794 = vmatpush.msra.mxu0 %v3003
    %3795 = vmatpush.msra.mxu0 %v3001
    %3796 = vmatpush.msra.mxu0 %v2999
    %3797 = vmatpush.msra.mxu0 %v2997
    %3798 = vmatpush.msra.mxu0 %v2995
    %3799 = vmatpush.msra.mxu0 %v2993
    %3800 = vmatmul.f32.gmra.mxu0 %v2889
    %v3801 = vpop.f32.mrf.mxu0
    %v3802 = vadd.f32 %v3773, %v3801
    %3803 = vmatmul.f32.gmra.mxu0 %v2891
    %v3804 = vpop.f32.mrf.mxu0
    %v3805 = vadd.f32 %v3776, %v3804
    %3806 = vmatmul.f32.gmra.mxu0 %v2893
    %v3807 = vpop.f32.mrf.mxu0
    %v3808 = vadd.f32 %v3779, %v3807
    %3809 = vmatmul.f32.gmra.mxu0 %v2895
    %v3810 = vpop.f32.mrf.mxu0
    %v3811 = vadd.f32 %v3782, %v3810
    %3812 = vdwg.mxu0
    %3813 = vmatpush.msra.mxu0 %v2926
    %3814 = vmatpush.msra.mxu0 %v2924
    %3815 = vmatpush.msra.mxu0 %v2922
    %3816 = vmatpush.msra.mxu0 %v2920
    %3817 = vmatpush.msra.mxu0 %v2918
    %3818 = vmatpush.msra.mxu0 %v2916
    %3819 = vmatpush.msra.mxu0 %v2914
    %3820 = vmatpush.msra.mxu0 %v2912
    %3821 = vmatpush.msra.mxu0 %v2910
    %3822 = vmatpush.msra.mxu0 %v2908
    %3823 = vmatpush.msra.mxu0 %v2906
    %3824 = vmatpush.msra.mxu0 %v2904
    %3825 = vmatpush.msra.mxu0 %v2902
    %3826 = vmatpush.msra.mxu0 %v2900
    %3827 = vmatpush.msra.mxu0 %v2898
    %3828 = vmatpush.msra.mxu0 %v2896
    %3829 = vmatmul.f32.gmra.mxu0 %v2872
    %v3830 = vpop.f32.mrf.mxu0
    %v3831 = vadd.f32 %v3744, %v3830
    %3832 = vmatmul.f32.gmra.mxu0 %v2874
    %v3833 = vpop.f32.mrf.mxu0
    %v3834 = vadd.f32 %v3747, %v3833
    %3835 = vmatmul.f32.gmra.mxu0 %v2876
    %v3836 = vpop.f32.mrf.mxu0
    %v3837 = vadd.f32 %v3750, %v3836
    %3838 = vmatmul.f32.gmra.mxu0 %v2878
    %v3839 = vpop.f32.mrf.mxu0
    %v3840 = vadd.f32 %v3753, %v3839
    %3841 = vdwg.mxu0
    %3842 = vmatpush.msra.mxu0 %v2958
    %3843 = vmatpush.msra.mxu0 %v2956
    %3844 = vmatpush.msra.mxu0 %v2954
    %3845 = vmatpush.msra.mxu0 %v2952
    %3846 = vmatpush.msra.mxu0 %v2950
    %3847 = vmatpush.msra.mxu0 %v2948
    %3848 = vmatpush.msra.mxu0 %v2946
    %3849 = vmatpush.msra.mxu0 %v2944
    %3850 = vmatpush.msra.mxu0 %v2942
    %3851 = vmatpush.msra.mxu0 %v2940
    %3852 = vmatpush.msra.mxu0 %v2938
    %3853 = vmatpush.msra.mxu0 %v2936
    %3854 = vmatpush.msra.mxu0 %v2934
    %3855 = vmatpush.msra.mxu0 %v2932
    %3856 = vmatpush.msra.mxu0 %v2930
    %3857 = vmatpush.msra.mxu0 %v2928
    %3858 = vmatmul.f32.gmra.mxu0 %v2873
    %v3859 = vpop.f32.mrf.mxu0
    %v3860 = vadd.f32 %v3831, %v3859
    %3861 = vmatmul.f32.gmra.mxu0 %v2875
    %v3862 = vpop.f32.mrf.mxu0
    %v3863 = vadd.f32 %v3834, %v3862
    %3864 = vmatmul.f32.gmra.mxu0 %v2877
    %v3865 = vpop.f32.mrf.mxu0
    %v3866 = vadd.f32 %v3837, %v3865
    %3867 = vmatmul.f32.gmra.mxu0 %v2879
    %v3868 = vpop.f32.mrf.mxu0
    %v3869 = vadd.f32 %v3840, %v3868
    %3870 = vdwg.mxu0
    %3871 = vmatpush.msra.mxu0 %v2927
    %3872 = vmatpush.msra.mxu0 %v2925
    %3873 = vmatpush.msra.mxu0 %v2923
    %3874 = vmatpush.msra.mxu0 %v2921
    %3875 = vmatpush.msra.mxu0 %v2919
    %3876 = vmatpush.msra.mxu0 %v2917
    %3877 = vmatpush.msra.mxu0 %v2915
    %3878 = vmatpush.msra.mxu0 %v2913
    %3879 = vmatpush.msra.mxu0 %v2911
    %3880 = vmatpush.msra.mxu0 %v2909
    %3881 = vmatpush.msra.mxu0 %v2907
    %3882 = vmatpush.msra.mxu0 %v2905
    %3883 = vmatpush.msra.mxu0 %v2903
    %3884 = vmatpush.msra.mxu0 %v2901
    %3885 = vmatpush.msra.mxu0 %v2899
    %3886 = vmatpush.msra.mxu0 %v2897
    %3887 = vmatmul.f32.gmra.mxu0 %v2872
    %v3888 = vpop.f32.mrf.mxu0
    %v3889 = vadd.f32 %v3802, %v3888
    %3890 = vmatmul.f32.gmra.mxu0 %v2874
    %v3891 = vpop.f32.mrf.mxu0
    %v3892 = vadd.f32 %v3805, %v3891
    %3893 = vmatmul.f32.gmra.mxu0 %v2876
    %v3894 = vpop.f32.mrf.mxu0
    %v3895 = vadd.f32 %v3808, %v3894
    %3896 = vmatmul.f32.gmra.mxu0 %v2878
    %v3897 = vpop.f32.mrf.mxu0
    %v3898 = vadd.f32 %v3811, %v3897
    %3899 = vdwg.mxu0
    %3900 = vmatpush.msra.mxu0 %v2959
    %3901 = vmatpush.msra.mxu0 %v2957
    %3902 = vmatpush.msra.mxu0 %v2955
    %3903 = vmatpush.msra.mxu0 %v2953
    %3904 = vmatpush.msra.mxu0 %v2951
    %3905 = vmatpush.msra.mxu0 %v2949
    %3906 = vmatpush.msra.mxu0 %v2947
    %3907 = vmatpush.msra.mxu0 %v2945
    %3908 = vmatpush.msra.mxu0 %v2943
    %3909 = vmatpush.msra.mxu0 %v2941
    %3910 = vmatpush.msra.mxu0 %v2939
    %3911 = vmatpush.msra.mxu0 %v2937
    %3912 = vmatpush.msra.mxu0 %v2935
    %3913 = vmatpush.msra.mxu0 %v2933
    %3914 = vmatpush.msra.mxu0 %v2931
    %3915 = vmatpush.msra.mxu0 %v2929
    %3916 = vmatmul.f32.gmra.mxu0 %v2873
    %v3917 = vpop.f32.mrf.mxu0
    %v3918 = vadd.f32 %v3889, %v3917
    %3919 = vmatmul.f32.gmra.mxu0 %v2875
    %v3920 = vpop.f32.mrf.mxu0
    %v3921 = vadd.f32 %v3892, %v3920
    %3922 = vmatmul.f32.gmra.mxu0 %v2877
    %v3923 = vpop.f32.mrf.mxu0
    %v3924 = vadd.f32 %v3895, %v3923
    %3925 = vmatmul.f32.gmra.mxu0 %v2879
    %v3926 = vpop.f32.mrf.mxu0
    %v3927 = vadd.f32 %v3898, %v3926
    %3928 = vdwg.mxu0
    %3929 = vmatpush.msra.mxu0 %v3054
    %3930 = vmatpush.msra.mxu0 %v3052
    %3931 = vmatpush.msra.mxu0 %v3050
    %3932 = vmatpush.msra.mxu0 %v3048
    %3933 = vmatpush.msra.mxu0 %v3046
    %3934 = vmatpush.msra.mxu0 %v3044
    %3935 = vmatpush.msra.mxu0 %v3042
    %3936 = vmatpush.msra.mxu0 %v3040
    %3937 = vmatpush.msra.mxu0 %v3038
    %3938 = vmatpush.msra.mxu0 %v3036
    %3939 = vmatpush.msra.mxu0 %v3034
    %3940 = vmatpush.msra.mxu0 %v3032
    %3941 = vmatpush.msra.mxu0 %v3030
    %3942 = vmatpush.msra.mxu0 %v3028
    %3943 = vmatpush.msra.mxu0 %v3026
    %3944 = vmatpush.msra.mxu0 %v3024
    %3945 = vmatmul.f32.gmra.mxu0 %v3160
    %v3946 = vpop.f32.mrf.mxu0
    %v3947 = vadd.f32 0.0, %v3946
    %3948 = vmatmul.f32.gmra.mxu0 %v3162
    %v3949 = vpop.f32.mrf.mxu0
    %v3950 = vadd.f32 0.0, %v3949
    %3951 = vmatmul.f32.gmra.mxu0 %v3164
    %v3952 = vpop.f32.mrf.mxu0
    %v3953 = vadd.f32 0.0, %v3952
    %3954 = vmatmul.f32.gmra.mxu0 %v3166
    %v3955 = vpop.f32.mrf.mxu0
    %v3956 = vadd.f32 0.0, %v3955
    %3957 = vdwg.mxu0
    %3958 = vmatpush.msra.mxu0 %v3086
    %3959 = vmatpush.msra.mxu0 %v3084
    %3960 = vmatpush.msra.mxu0 %v3082
    %3961 = vmatpush.msra.mxu0 %v3080
    %3962 = vmatpush.msra.mxu0 %v3078
    %3963 = vmatpush.msra.mxu0 %v3076
    %3964 = vmatpush.msra.mxu0 %v3074
    %3965 = vmatpush.msra.mxu0 %v3072
    %3966 = vmatpush.msra.mxu0 %v3070
    %3967 = vmatpush.msra.mxu0 %v3068
    %3968 = vmatpush.msra.mxu0 %v3066
    %3969 = vmatpush.msra.mxu0 %v3064
    %3970 = vmatpush.msra.mxu0 %v3062
    %3971 = vmatpush.msra.mxu0 %v3060
    %3972 = vmatpush.msra.mxu0 %v3058
    %3973 = vmatpush.msra.mxu0 %v3056
    %3974 = vmatmul.f32.gmra.mxu0 %v3161
    %v3975 = vpop.f32.mrf.mxu0
    %v3976 = vadd.f32 %v3947, %v3975
    %3977 = vmatmul.f32.gmra.mxu0 %v3163
    %v3978 = vpop.f32.mrf.mxu0
    %v3979 = vadd.f32 %v3950, %v3978
    %3980 = vmatmul.f32.gmra.mxu0 %v3165
    %v3981 = vpop.f32.mrf.mxu0
    %v3982 = vadd.f32 %v3953, %v3981
    %3983 = vmatmul.f32.gmra.mxu0 %v3167
    %v3984 = vpop.f32.mrf.mxu0
    %v3985 = vadd.f32 %v3956, %v3984
    %3986 = vdwg.mxu0
    %3987 = vmatpush.msra.mxu0 %v3055
    %3988 = vmatpush.msra.mxu0 %v3053
    %3989 = vmatpush.msra.mxu0 %v3051
    %3990 = vmatpush.msra.mxu0 %v3049
    %3991 = vmatpush.msra.mxu0 %v3047
    %3992 = vmatpush.msra.mxu0 %v3045
    %3993 = vmatpush.msra.mxu0 %v3043
    %3994 = vmatpush.msra.mxu0 %v3041
    %3995 = vmatpush.msra.mxu0 %v3039
    %3996 = vmatpush.msra.mxu0 %v3037
    %3997 = vmatpush.msra.mxu0 %v3035
    %3998 = vmatpush.msra.mxu0 %v3033
    %3999 = vmatpush.msra.mxu0 %v3031
    %4000 = vmatpush.msra.mxu0 %v3029
    %4001 = vmatpush.msra.mxu0 %v3027
    %4002 = vmatpush.msra.mxu0 %v3025
    %4003 = vmatmul.f32.gmra.mxu0 %v3160
    %v4004 = vpop.f32.mrf.mxu0
    %v4005 = vadd.f32 0.0, %v4004
    %4006 = vmatmul.f32.gmra.mxu0 %v3162
    %v4007 = vpop.f32.mrf.mxu0
    %v4008 = vadd.f32 0.0, %v4007
    %4009 = vmatmul.f32.gmra.mxu0 %v3164
    %v4010 = vpop.f32.mrf.mxu0
    %v4011 = vadd.f32 0.0, %v4010
    %4012 = vmatmul.f32.gmra.mxu0 %v3166
    %v4013 = vpop.f32.mrf.mxu0
    %v4014 = vadd.f32 0.0, %v4013
    %4015 = vdwg.mxu0
    %4016 = vmatpush.msra.mxu0 %v3087
    %4017 = vmatpush.msra.mxu0 %v3085
    %4018 = vmatpush.msra.mxu0 %v3083
    %4019 = vmatpush.msra.mxu0 %v3081
    %4020 = vmatpush.msra.mxu0 %v3079
    %4021 = vmatpush.msra.mxu0 %v3077
    %4022 = vmatpush.msra.mxu0 %v3075
    %4023 = vmatpush.msra.mxu0 %v3073
    %4024 = vmatpush.msra.mxu0 %v3071
    %4025 = vmatpush.msra.mxu0 %v3069
    %4026 = vmatpush.msra.mxu0 %v3067
    %4027 = vmatpush.msra.mxu0 %v3065
    %4028 = vmatpush.msra.mxu0 %v3063
    %4029 = vmatpush.msra.mxu0 %v3061
    %4030 = vmatpush.msra.mxu0 %v3059
    %4031 = vmatpush.msra.mxu0 %v3057
    %4032 = vmatmul.f32.gmra.mxu0 %v3161
    %v4033 = vpop.f32.mrf.mxu0
    %v4034 = vadd.f32 %v4005, %v4033
    %4035 = vmatmul.f32.gmra.mxu0 %v3163
    %v4036 = vpop.f32.mrf.mxu0
    %v4037 = vadd.f32 %v4008, %v4036
    %4038 = vmatmul.f32.gmra.mxu0 %v3165
    %v4039 = vpop.f32.mrf.mxu0
    %v4040 = vadd.f32 %v4011, %v4039
    %4041 = vmatmul.f32.gmra.mxu0 %v3167
    %v4042 = vpop.f32.mrf.mxu0
    %v4043 = vadd.f32 %v4014, %v4042
    %4044 = vdwg.mxu0
    %v4045 = vadd.f32 %v3860, %v3976
    %v4046 = vadd.f32 %v3918, %v4034
    %v4047 = vadd.f32 %v3863, %v3979
    %v4048 = vadd.f32 %v3921, %v4037
    %v4049 = vadd.f32 %v3866, %v3982
    %v4050 = vadd.f32 %v3924, %v4040
    %v4051 = vadd.f32 %v3869, %v3985
    %v4052 = vadd.f32 %v3927, %v4043
    %v4053 = vadd.f32 %v4045, %v3525
    %v4054 = vadd.f32 %v4046, %v3526
    %v4055 = vadd.f32 %v4047, %v3525
    %v4056 = vadd.f32 %v4048, %v3526
    %v4057 = vadd.f32 %v4049, %v3525
    %v4058 = vadd.f32 %v4050, %v3526
    %v4059 = vadd.f32 %v4051, %v3525
    %v4060 = vadd.f32 %v4052, %v3526
    %v4061 = vsub.f32 0.0, %v4053
    %v4062 = vsub.f32 0.0, %v4054
    %v4063 = vsub.f32 0.0, %v4055
    %v4064 = vsub.f32 0.0, %v4056
    %v4065 = vsub.f32 0.0, %v4057
    %v4066 = vsub.f32 0.0, %v4058
    %v4067 = vsub.f32 0.0, %v4059
    %v4068 = vsub.f32 0.0, %v4060
    %v4069 = vmul.f32 %v4061, 1.442695
    %v4070 = vpow.pop %v4069
    %v4071 = vmul.f32 %v4062, 1.442695
    %v4072 = vpow.pop %v4071
    %v4073 = vmul.f32 %v4063, 1.442695
    %v4074 = vpow.pop %v4073
    %v4075 = vmul.f32 %v4064, 1.442695
    %v4076 = vpow.pop %v4075
    %v4077 = vmul.f32 %v4065, 1.442695
    %v4078 = vpow.pop %v4077
    %v4079 = vmul.f32 %v4066, 1.442695
    %v4080 = vpow.pop %v4079
    %v4081 = vmul.f32 %v4067, 1.442695
    %v4082 = vpow.pop %v4081
    %v4083 = vmul.f32 %v4068, 1.442695
    %v4084 = vpow.pop %v4083
    %v4085 = vadd.f32 %v4070, 1.0
    %v4086 = vadd.f32 %v4072, 1.0
    %v4087 = vadd.f32 %v4074, 1.0
    %v4088 = vadd.f32 %v4076, 1.0
    %v4089 = vadd.f32 %v4078, 1.0
    %v4090 = vadd.f32 %v4080, 1.0
    %v4091 = vadd.f32 %v4082, 1.0
    %v4092 = vadd.f32 %v4084, 1.0
    %v4093 = vrcp.pop %v4085
    %v4094 = vmul.f32 %v4085, %v4093
    %v4095 = vsub.f32 1.0, %v4094
    %v4096 = vmul.f32 %v4093, %v4095
    %v4097 = vadd.f32 %v4093, %v4096
    %vm4098 = vweird.f32 %v4085
    %vm4099 = vweird.f32 %v4093
    %vm4100 = vmor %vm4098, %vm4099
    %v4101 = vsel %vm4100, %v4093, %v4097
    %v4102 = vand.u32 2147483647, %v4085
    %vm4103 = vcmp.eq.f32.partialorder %v4102, 8.507059e+37
    %v4104 = vand.u32 %v4085, 2147483648
    %v4105 = vor.u32 1.1754944e-38, %v4104
    %v4106 = vsel %vm4103, %v4105, %v4101
    %v4107 = vmul.f32 1.0, %v4106
    %v4108 = vrcp.pop %v4086
    %v4109 = vmul.f32 %v4086, %v4108
    %v4110 = vsub.f32 1.0, %v4109
    %v4111 = vmul.f32 %v4108, %v4110
    %v4112 = vadd.f32 %v4108, %v4111
    %vm4113 = vweird.f32 %v4086
    %vm4114 = vweird.f32 %v4108
    %vm4115 = vmor %vm4113, %vm4114
    %v4116 = vsel %vm4115, %v4108, %v4112
    %v4117 = vand.u32 2147483647, %v4086
    %vm4118 = vcmp.eq.f32.partialorder %v4117, 8.507059e+37
    %v4119 = vand.u32 %v4086, 2147483648
    %v4120 = vor.u32 1.1754944e-38, %v4119
    %v4121 = vsel %vm4118, %v4120, %v4116
    %v4122 = vmul.f32 1.0, %v4121
    %v4123 = vrcp.pop %v4087
    %v4124 = vmul.f32 %v4087, %v4123
    %v4125 = vsub.f32 1.0, %v4124
    %v4126 = vmul.f32 %v4123, %v4125
    %v4127 = vadd.f32 %v4123, %v4126
    %vm4128 = vweird.f32 %v4087
    %vm4129 = vweird.f32 %v4123
    %vm4130 = vmor %vm4128, %vm4129
    %v4131 = vsel %vm4130, %v4123, %v4127
    %v4132 = vand.u32 2147483647, %v4087
    %vm4133 = vcmp.eq.f32.partialorder %v4132, 8.507059e+37
    %v4134 = vand.u32 %v4087, 2147483648
    %v4135 = vor.u32 1.1754944e-38, %v4134
    %v4136 = vsel %vm4133, %v4135, %v4131
    %v4137 = vmul.f32 1.0, %v4136
    %v4138 = vrcp.pop %v4088
    %v4139 = vmul.f32 %v4088, %v4138
    %v4140 = vsub.f32 1.0, %v4139
    %v4141 = vmul.f32 %v4138, %v4140
    %v4142 = vadd.f32 %v4138, %v4141
    %vm4143 = vweird.f32 %v4088
    %vm4144 = vweird.f32 %v4138
    %vm4145 = vmor %vm4143, %vm4144
    %v4146 = vsel %vm4145, %v4138, %v4142
    %v4147 = vand.u32 2147483647, %v4088
    %vm4148 = vcmp.eq.f32.partialorder %v4147, 8.507059e+37
    %v4149 = vand.u32 %v4088, 2147483648
    %v4150 = vor.u32 1.1754944e-38, %v4149
    %v4151 = vsel %vm4148, %v4150, %v4146
    %v4152 = vmul.f32 1.0, %v4151
    %v4153 = vrcp.pop %v4089
    %v4154 = vmul.f32 %v4089, %v4153
    %v4155 = vsub.f32 1.0, %v4154
    %v4156 = vmul.f32 %v4153, %v4155
    %v4157 = vadd.f32 %v4153, %v4156
    %vm4158 = vweird.f32 %v4089
    %vm4159 = vweird.f32 %v4153
    %vm4160 = vmor %vm4158, %vm4159
    %v4161 = vsel %vm4160, %v4153, %v4157
    %v4162 = vand.u32 2147483647, %v4089
    %vm4163 = vcmp.eq.f32.partialorder %v4162, 8.507059e+37
    %v4164 = vand.u32 %v4089, 2147483648
    %v4165 = vor.u32 1.1754944e-38, %v4164
    %v4166 = vsel %vm4163, %v4165, %v4161
    %v4167 = vmul.f32 1.0, %v4166
    %v4168 = vrcp.pop %v4090
    %v4169 = vmul.f32 %v4090, %v4168
    %v4170 = vsub.f32 1.0, %v4169
    %v4171 = vmul.f32 %v4168, %v4170
    %v4172 = vadd.f32 %v4168, %v4171
    %vm4173 = vweird.f32 %v4090
    %vm4174 = vweird.f32 %v4168
    %vm4175 = vmor %vm4173, %vm4174
    %v4176 = vsel %vm4175, %v4168, %v4172
    %v4177 = vand.u32 2147483647, %v4090
    %vm4178 = vcmp.eq.f32.partialorder %v4177, 8.507059e+37
    %v4179 = vand.u32 %v4090, 2147483648
    %v4180 = vor.u32 1.1754944e-38, %v4179
    %v4181 = vsel %vm4178, %v4180, %v4176
    %v4182 = vmul.f32 1.0, %v4181
    %v4183 = vrcp.pop %v4091
    %v4184 = vmul.f32 %v4091, %v4183
    %v4185 = vsub.f32 1.0, %v4184
    %v4186 = vmul.f32 %v4183, %v4185
    %v4187 = vadd.f32 %v4183, %v4186
    %vm4188 = vweird.f32 %v4091
    %vm4189 = vweird.f32 %v4183
    %vm4190 = vmor %vm4188, %vm4189
    %v4191 = vsel %vm4190, %v4183, %v4187
    %v4192 = vand.u32 2147483647, %v4091
    %vm4193 = vcmp.eq.f32.partialorder %v4192, 8.507059e+37
    %v4194 = vand.u32 %v4091, 2147483648
    %v4195 = vor.u32 1.1754944e-38, %v4194
    %v4196 = vsel %vm4193, %v4195, %v4191
    %v4197 = vmul.f32 1.0, %v4196
    %v4198 = vrcp.pop %v4092
    %v4199 = vmul.f32 %v4092, %v4198
    %v4200 = vsub.f32 1.0, %v4199
    %v4201 = vmul.f32 %v4198, %v4200
    %v4202 = vadd.f32 %v4198, %v4201
    %vm4203 = vweird.f32 %v4092
    %vm4204 = vweird.f32 %v4198
    %vm4205 = vmor %vm4203, %vm4204
    %v4206 = vsel %vm4205, %v4198, %v4202
    %v4207 = vand.u32 2147483647, %v4092
    %vm4208 = vcmp.eq.f32.partialorder %v4207, 8.507059e+37
    %v4209 = vand.u32 %v4092, 2147483648
    %v4210 = vor.u32 1.1754944e-38, %v4209
    %v4211 = vsel %vm4208, %v4210, %v4206
    %v4212 = vmul.f32 1.0, %v4211
    %v4213 = vmul.f32 %v4053, %v4107
    %v4214 = vmul.f32 %v4054, %v4122
    %v4215 = vmul.f32 %v4055, %v4137
    %v4216 = vmul.f32 %v4056, %v4152
    %v4217 = vmul.f32 %v4057, %v4167
    %v4218 = vmul.f32 %v4058, %v4182
    %v4219 = vmul.f32 %v4059, %v4197
    %v4220 = vmul.f32 %v4060, %v4212
    %4221 = vst [vmem:[#allocation17] sm:$0xff] %v3689
    %4222 = vst [vmem:[#allocation17 + $0x8] sm:$0xff] %v3690
    %4223 = vst [vmem:[#allocation17 + $0x10] sm:$0xff] %v3691
    %4224 = vst [vmem:[#allocation17 + $0x18] sm:$0xff] %v3692
    %4225 = vst [vmem:[#allocation17 + $0x20] sm:$0xff] %v3693
    %4226 = vst [vmem:[#allocation17 + $0x28] sm:$0xff] %v3694
    %4227 = vst [vmem:[#allocation17 + $0x30] sm:$0xff] %v3695
    %4228 = vst [vmem:[#allocation17 + $0x38] sm:$0xff] %v3696
    %4229 = vst [vmem:[#allocation18] sm:$0xff] %v4213
    %4230 = vst [vmem:[#allocation18 + $0x8] sm:$0xff] %v4214
    %4231 = vst [vmem:[#allocation18 + $0x10] sm:$0xff] %v4215
    %4232 = vst [vmem:[#allocation18 + $0x18] sm:$0xff] %v4216
    %4233 = vst [vmem:[#allocation18 + $0x20] sm:$0xff] %v4217
    %4234 = vst [vmem:[#allocation18 + $0x28] sm:$0xff] %v4218
    %4235 = vst [vmem:[#allocation18 + $0x30] sm:$0xff] %v4219
    %4236 = vst [vmem:[#allocation18 + $0x38] sm:$0xff] %v4220
    // Predicated region
    $region90: #{tpu_custom_call.1} parent=1 // pred_check
      _
    $region91: #{tpu_custom_call.1} parent=1 // pred_check_branch
      %4238 = sbr.rel (0) target = $region93
    $region92: #{tpu_custom_call.1} parent=1 // pred_region
      %4240 = vsyncadd [#allocation4], 0
      %s4241 = sshll.u32 [#allocation17], 4
      %s4242 = int_to_ptr.vmem [resolvable:$true] %s4241
      %s4243 = sshll.u32 %s13, 4
      %s4244 = int_to_ptr.hbm [resolvable:$true] %s4243
      %4249 = dma.vmem_to_hbm [thread:$0]  %s4242, 1024, %s4244, [#allocation4], 256, 256, 16
    $region93: #{tpu_custom_call.1} parent=1 // pred_fallthru
      _
    // Predicated region
    $region94: #{tpu_custom_call.1} parent=1 // pred_check
      _
    $region95: #{tpu_custom_call.1} parent=1 // pred_check_branch
      %4251 = sbr.rel (0) target = $region97
    $region96: #{tpu_custom_call.1} parent=1 // pred_region
      %4253 = vsyncadd [#allocation19], 0
      %s4254 = sshll.u32 [#allocation18], 4
      %s4255 = int_to_ptr.vmem [resolvable:$true] %s4254
      %s4256 = sshll.u32 %s14, 4
      %s4257 = int_to_ptr.hbm [resolvable:$true] %s4256
      %4262 = dma.vmem_to_hbm [thread:$0]  %s4255, 1024, %s4257, [#allocation19], 256, 256, 16
    $region97: #{tpu_custom_call.1} parent=1 // pred_fallthru
      _
    // Predicated region
    $region98: #{tpu_custom_call.1} parent=1 // pred_check
      _
    $region99: #{tpu_custom_call.1} parent=1 // pred_check_branch
      %4264 = sbr.rel (0) target = $region101
    $region100: #{tpu_custom_call.1} parent=1 // pred_region
      %4266 = dma.done [#allocation4], 1024
    $region101: #{tpu_custom_call.1} parent=1 // pred_fallthru
      _
    // Predicated region
    $region102: #{tpu_custom_call.1} parent=1 // pred_check
      _
    $region103: #{tpu_custom_call.1} parent=1 // pred_check_branch
      %4268 = sbr.rel (0) target = $region105
    $region104: #{tpu_custom_call.1} parent=1 // pred_region
      %4270 = dma.done [#allocation19], 1024
    $region105: #{tpu_custom_call.1} parent=1 // pred_fallthru
      _
    %4271 = vsyncpa [#allocation3], 1
    %4272 = vsyncpa [#allocation6], 1
    %4273 = vsyncpa [#allocation9], 1
    %4274 = vsyncpa [#allocation12], 1
    %4275 = vsyncpa [#allocation15], 1
    %4276 = vsyncpa [#allocation4], 1
    %4277 = vsyncpa [#allocation19], 1

</llo_original>
